<compile_context>
chip_gen: v7x
topology: tpu7x:2x2x1
jax: 0.10.0
libtpu: 0.0.40
codegen_flags: <defaults>
</compile_context>

<pallas_src>
import functools

import jax
import jax.numpy as jnp
from jax.experimental import pallas as pl
from jax.experimental.pallas import tpu as pltpu


# ------------------------------------------------------------------ kernel --

def _block53_fused_kernel(x_ref, w1_ref, b1_ref, w2_ref, b2_ref, o_ref, *, k):
    """Fused conv1x1+BN1 -> convKxK+BN2 -> +residual for one image.

    x_ref : (1, Hp, Wp, Cin)    f32, spatially zero-padded by k//2
    w1_ref: (Cin, Cmid_p)       bf16, BN1 scale folded, Cmid zero-padded
    b1_ref: (1, Cmid_p)         f32
    w2_ref: (k*k, Cmid_p, Cout) bf16, BN2 scale folded (tap-major)
    b2_ref: (1, Cout)           f32
    o_ref : (1, H, W, Cout)     f32
    """
    _, Hp, Wp, Cin = x_ref.shape
    _, H, W, Cout = o_ref.shape
    Cmid_p = w1_ref.shape[1]
    p = k // 2

    x = x_ref[0]                                        # (Hp, Wp, Cin) f32

    # ---- conv1 (1x1) + folded BN1 over the padded slab (halo rows reused) ---
    x2d = x.reshape(Hp * Wp, Cin)
    y1 = jnp.dot(x2d.astype(jnp.bfloat16), w1_ref[...],
                 preferred_element_type=jnp.float32)    # (Hp*Wp, Cmid_p) f32
    y1 = (y1 + b1_ref[...]).reshape(Hp, Wp, Cmid_p)

    # conv2 zero-pads *y1* (not x): at halo positions the matmul term is 0 but
    # the folded BN1 bias is not, so force the halo back to exactly zero.
    rows = jax.lax.broadcasted_iota(jnp.int32, (Hp, Wp, 1), 0)
    cols = jax.lax.broadcasted_iota(jnp.int32, (Hp, Wp, 1), 1)
    interior = (rows >= p) & (rows < p + H) & (cols >= p) & (cols < p + W)
    y1 = jnp.where(interior, y1, 0.0).astype(jnp.bfloat16)

    # ---- conv2 (k x k) as k*k accumulated MXU matmuls over shifted windows --
    acc = jnp.zeros((H * W, Cout), jnp.float32)
    for di in range(k):                                 # static unroll
        for dj in range(k):
            tap = y1[di:di + H, dj:dj + W, :].reshape(H * W, Cmid_p)
            acc = acc + jnp.dot(tap, w2_ref[di * k + dj],
                                preferred_element_type=jnp.float32)

    # ---- folded BN2 bias + residual (exact f32 x) ---------------------------
    res = x[p:p + H, p:p + W, :].reshape(H * W, Cout)   # Cout == Cin (asserted)
    o_ref[0] = (acc + b2_ref[...] + res).reshape(H, W, Cout)
    # TODO(synk): activation is identity because Block53 passes activation=None.


# ------------------------------------------------------------------ wrapper --

def block53_forward(x_nchw, params, *, kernel_size, stride, eps=1e-5):
    """Block53 forward. x_nchw: (N, Cin, H, W) float32 -> (N, Cout, H, W)."""
    N, Cin, H, W = x_nchw.shape
    k = kernel_size
    p = k // 2
    w1 = params["w1"]                                    # (Cmid, Cin, 1, 1)
    w2 = params["w2"]                                    # (Cout, Cmid, k, k)
    Cmid = w1.shape[0]
    Cout = w2.shape[0]

    # Residual contract of the PyTorch module (explicit, per review).
    assert stride == 1, "Block53 residual requires stride == 1"
    assert Cout == Cin, "Block53 residual requires out_channels == in_channels"
    assert k % 2 == 1, "'same' padding requires an odd kernel size"

    # Lane-dense internal channel dim (zero weight columns cost nothing).
    Cmid_p = ((Cmid + 127) // 128) * 128

    # ---- fold BN into weights / biases (scale into weight columns) ----------
    s1 = params["g1"] / jnp.sqrt(params["v1"] + eps)
    b1 = params["b1"] - params["m1"] * s1
    s2 = params["g2"] / jnp.sqrt(params["v2"] + eps)
    b2 = params["b2"] - params["m2"] * s2

    w1_mat = jnp.transpose(w1[:, :, 0, 0], (1, 0)) * s1[None, :]       # (Cin, Cmid)
    w1_mat = jnp.pad(w1_mat, ((0, 0), (0, Cmid_p - Cmid))).astype(jnp.bfloat16)
    b1_row = jnp.pad(b1, (0, Cmid_p - Cmid))[None, :].astype(jnp.float32)

    w2_t = jnp.transpose(w2, (2, 3, 1, 0)) * s2[None, None, None, :]   # (k,k,Cmid,Cout)
    w2_t = jnp.pad(w2_t, ((0, 0), (0, 0), (0, Cmid_p - Cmid), (0, 0)))
    w2_mat = w2_t.reshape(k * k, Cmid_p, Cout).astype(jnp.bfloat16)
    b2_row = b2[None, :].astype(jnp.float32)

    # ---- NCHW -> NHWC, spatial zero pad (halo for the kxk window) -----------
    x_nhwc = jnp.transpose(x_nchw, (0, 2, 3, 1)).astype(jnp.float32)
    x_pad = jnp.pad(x_nhwc, ((0, 0), (p, p), (p, p), (0, 0)))
    Hp, Wp = H + 2 * p, W + 2 * p

    kernel = functools.partial(_block53_fused_kernel, k=k)
    out_nhwc = pl.pallas_call(
        kernel,
        out_shape=jax.ShapeDtypeStruct((N, H, W, Cout), jnp.float32),
        grid_spec=pltpu.PrefetchScalarGridSpec(
            num_scalar_prefetch=0,
            grid=(N,),
            in_specs=[
                pl.BlockSpec((1, Hp, Wp, Cin), lambda n: (n, 0, 0, 0)),
                pl.BlockSpec((Cin, Cmid_p), lambda n: (0, 0)),
                pl.BlockSpec((1, Cmid_p), lambda n: (0, 0)),
                pl.BlockSpec((k * k, Cmid_p, Cout), lambda n: (0, 0, 0)),
                pl.BlockSpec((1, Cout), lambda n: (0, 0)),
            ],
            out_specs=pl.BlockSpec((1, H, W, Cout), lambda n: (n, 0, 0, 0)),
        ),
        compiler_params=pltpu.CompilerParams(
            dimension_semantics=("parallel",)),
    )(x_pad, w1_mat, b1_row, w2_mat, b2_row)

    return jnp.transpose(out_nhwc, (0, 3, 1, 2))         # back to NCHW


# ------------------------------------------------------------------ reference --

def block53_reference(x_nchw, params, *, kernel_size, stride):
    """Pure-JAX f32 reference (lax.conv) for validation."""
    def conv_bn(x, w, g, b, m, v, k, s):
        y = jax.lax.conv_general_dilated(
            x, w, window_strides=(s, s), padding=[(k // 2, k // 2)] * 2,
            dimension_numbers=("NCHW", "OIHW", "NCHW"))
        scale = (g / jnp.sqrt(v + 1e-5))[None, :, None, None]
        bias = (b - m * g / jnp.sqrt(v + 1e-5))[None, :, None, None]
        return y * scale + bias

    y = conv_bn(x_nchw, params["w1"], params["g1"], params["b1"],
                params["m1"], params["v1"], 1, 1)
    y = conv_bn(y, params["w2"], params["g2"], params["b2"],
                params["m2"], params["v2"], kernel_size, stride)
    return y + x_nchw


# ------------------------------------------------------------------ main --

if __name__ == "__main__":
    # Small shapes consistent with the module: residual requires Cout == Cin.
    N, C, H, W = 2, 32, 16, 16
    kernel_size, stride = 3, 1
    Cmid = C // 2

    key = jax.random.PRNGKey(0)
    ks = jax.random.split(key, 10)
    params = {
        "w1": jax.random.normal(ks[0], (Cmid, C, 1, 1), jnp.float32) * 0.1,
        "g1": 1.0 + 0.1 * jax.random.normal(ks[1], (Cmid,), jnp.float32),
        "b1": 0.1 * jax.random.normal(ks[2], (Cmid,), jnp.float32),
        "m1": 0.1 * jax.random.normal(ks[3], (Cmid,), jnp.float32),
        "v1": jnp.abs(jax.random.normal(ks[4], (Cmid,), jnp.float32)) + 0.5,
        "w2": jax.random.normal(ks[5], (C, Cmid, kernel_size, kernel_size),
                                jnp.float32) * 0.1,
        "g2": 1.0 + 0.1 * jax.random.normal(ks[6], (C,), jnp.float32),
        "b2": 0.1 * jax.random.normal(ks[7], (C,), jnp.float32),
        "m2": 0.1 * jax.random.normal(ks[8], (C,), jnp.float32),
        "v2": jnp.abs(jax.random.normal(ks[9], (C,), jnp.float32)) + 0.5,
    }

    x = jax.random.normal(jax.random.PRNGKey(1), (N, C, H, W), jnp.float32)

    fwd = jax.jit(functools.partial(block53_forward,
                                    kernel_size=kernel_size, stride=stride))
    out = jax.block_until_ready(fwd(x, params))

    ref = block53_reference(x, params, kernel_size=kernel_size, stride=stride)
    assert out.shape == (N, C, H, W)
    # bf16 matmul inputs (f32 accumulation, f32 residual) -> loosened tolerance.
    assert jnp.allclose(out, ref, rtol=5e-2, atol=5e-2), "mismatch vs reference"

    print("KERNEL_OK")
</pallas_src>

<mosaic_0001>
module attributes {stable_mosaic.version = 11 : i64} {
  func.func @_block53_fused_kernel(%arg0: i32, %arg1: memref<1x18x18x32xf32, #tpu.memory_space<vmem>>, %arg2: memref<32x128xbf16, #tpu.memory_space<vmem>>, %arg3: memref<1x128xf32, #tpu.memory_space<vmem>>, %arg4: memref<9x128x32xbf16, #tpu.memory_space<vmem>>, %arg5: memref<1x32xf32, #tpu.memory_space<vmem>>, %arg6: memref<1x16x16x32xf32, #tpu.memory_space<vmem>>) attributes {dimension_semantics = [#tpu.dimension_semantics<parallel>], iteration_bounds = array<i64: 2>, scalar_prefetch = 0 : i64, scratch_operands = 0 : i64, tpu.core_type = #tpu.core_type<tc>, window_params = [{transform_indices = @transform_0, window_bounds = array<i64: 1, 18, 18, 32>}, {pipeline_mode = #tpu.pipeline_mode<synchronous>, transform_indices = @transform_1, window_bounds = array<i64: 32, 128>}, {pipeline_mode = #tpu.pipeline_mode<synchronous>, transform_indices = @transform_2, window_bounds = array<i64: 1, 128>}, {pipeline_mode = #tpu.pipeline_mode<synchronous>, transform_indices = @transform_3, window_bounds = array<i64: 9, 128, 32>}, {pipeline_mode = #tpu.pipeline_mode<synchronous>, transform_indices = @transform_4, window_bounds = array<i64: 1, 32>}, {transform_indices = @transform_5, window_bounds = array<i64: 1, 16, 16, 32>}]} {
    %c0 = arith.constant 0 : index
    %c0_0 = arith.constant 0 : index
    %c0_1 = arith.constant 0 : index
    %c0_2 = arith.constant 0 : index
    %0 = vector.load %arg1[%c0, %c0_0, %c0_1, %c0_2] : memref<1x18x18x32xf32, #tpu.memory_space<vmem>>, vector<1x18x18x32xf32>
    %1 = vector.shape_cast %0 : vector<1x18x18x32xf32> to vector<18x18x32xf32>
    %2 = vector.shape_cast %1 : vector<18x18x32xf32> to vector<324x32xf32>
    %3 = arith.truncf %2 : vector<324x32xf32> to vector<324x32xbf16>
    %c0_3 = arith.constant 0 : index
    %c0_4 = arith.constant 0 : index
    %4 = vector.load %arg2[%c0_3, %c0_4] : memref<32x128xbf16, #tpu.memory_space<vmem>>, vector<32x128xbf16>
    %cst = arith.constant dense<0.000000e+00> : vector<324x128xf32>
    %5 = tpu.matmul %3, %4, %cst {dimension_numbers = #tpu.dot_dimension_numbers<[1], [0], [0], [1], [0, 0, 1, 1], [], []>} : vector<324x32xbf16>, vector<32x128xbf16>, vector<324x128xf32> -> vector<324x128xf32>
    %c0_5 = arith.constant 0 : index
    %c0_6 = arith.constant 0 : index
    %6 = vector.load %arg3[%c0_5, %c0_6] : memref<1x128xf32, #tpu.memory_space<vmem>>, vector<1x128xf32>
    %7 = vector.broadcast %6 : vector<1x128xf32> to vector<324x128xf32>
    %8 = arith.addf %5, %7 : vector<324x128xf32>
    %9 = vector.shape_cast %8 : vector<324x128xf32> to vector<18x18x128xf32>
    %10 = tpu.iota {dimensions = array<i32: 0>} : vector<18x18x1xi32>
    %11 = tpu.iota {dimensions = array<i32: 1>} : vector<18x18x1xi32>
    %c1_i32 = arith.constant 1 : i32
    %12 = vector.broadcast %c1_i32 : i32 to vector<18x18x1xi32>
    %13 = arith.cmpi sge, %10, %12 : vector<18x18x1xi32>
    %c17_i32 = arith.constant 17 : i32
    %14 = vector.broadcast %c17_i32 : i32 to vector<18x18x1xi32>
    %15 = arith.cmpi slt, %10, %14 : vector<18x18x1xi32>
    %16 = arith.andi %13, %15 : vector<18x18x1xi1>
    %c1_i32_7 = arith.constant 1 : i32
    %17 = vector.broadcast %c1_i32_7 : i32 to vector<18x18x1xi32>
    %18 = arith.cmpi sge, %11, %17 : vector<18x18x1xi32>
    %19 = arith.andi %16, %18 : vector<18x18x1xi1>
    %c17_i32_8 = arith.constant 17 : i32
    %20 = vector.broadcast %c17_i32_8 : i32 to vector<18x18x1xi32>
    %21 = arith.cmpi slt, %11, %20 : vector<18x18x1xi32>
    %22 = arith.andi %19, %21 : vector<18x18x1xi1>
    %cst_9 = arith.constant 0.000000e+00 : f32
    %23 = vector.shape_cast %22 : vector<18x18x1xi1> to vector<18x18x1xi1>
    %24 = vector.broadcast %23 : vector<18x18x1xi1> to vector<18x18x128xi1>
    %25 = vector.broadcast %cst_9 : f32 to vector<18x18x128xf32>
    %26 = arith.select %24, %9, %25 : vector<18x18x128xi1>, vector<18x18x128xf32>
    %27 = arith.truncf %26 : vector<18x18x128xf32> to vector<18x18x128xbf16>
    %cst_10 = arith.constant 0.000000e+00 : f32
    %28 = vector.broadcast %cst_10 : f32 to vector<256x32xf32>
    %29 = vector.extract_strided_slice %27 {offsets = [0, 0, 0], sizes = [16, 16, 128], strides = [1, 1, 1]} : vector<18x18x128xbf16> to vector<16x16x128xbf16>
    %30 = vector.shape_cast %29 : vector<16x16x128xbf16> to vector<256x128xbf16>
    %c0_11 = arith.constant 0 : index
    %c0_12 = arith.constant 0 : index
    %c0_13 = arith.constant 0 : index
    %31 = vector.load %arg4[%c0_11, %c0_12, %c0_13] : memref<9x128x32xbf16, #tpu.memory_space<vmem>>, vector<1x128x32xbf16>
    %32 = vector.shape_cast %31 : vector<1x128x32xbf16> to vector<128x32xbf16>
    %cst_14 = arith.constant dense<0.000000e+00> : vector<256x32xf32>
    %33 = tpu.matmul %30, %32, %cst_14 {dimension_numbers = #tpu.dot_dimension_numbers<[1], [0], [0], [1], [0, 0, 1, 1], [], []>} : vector<256x128xbf16>, vector<128x32xbf16>, vector<256x32xf32> -> vector<256x32xf32>
    %34 = arith.addf %28, %33 : vector<256x32xf32>
    %35 = vector.extract_strided_slice %27 {offsets = [0, 1, 0], sizes = [16, 16, 128], strides = [1, 1, 1]} : vector<18x18x128xbf16> to vector<16x16x128xbf16>
    %36 = vector.shape_cast %35 : vector<16x16x128xbf16> to vector<256x128xbf16>
    %c1 = arith.constant 1 : index
    %c0_15 = arith.constant 0 : index
    %c0_16 = arith.constant 0 : index
    %37 = vector.load %arg4[%c1, %c0_15, %c0_16] : memref<9x128x32xbf16, #tpu.memory_space<vmem>>, vector<1x128x32xbf16>
    %38 = vector.shape_cast %37 : vector<1x128x32xbf16> to vector<128x32xbf16>
    %cst_17 = arith.constant dense<0.000000e+00> : vector<256x32xf32>
    %39 = tpu.matmul %36, %38, %cst_17 {dimension_numbers = #tpu.dot_dimension_numbers<[1], [0], [0], [1], [0, 0, 1, 1], [], []>} : vector<256x128xbf16>, vector<128x32xbf16>, vector<256x32xf32> -> vector<256x32xf32>
    %40 = arith.addf %34, %39 : vector<256x32xf32>
    %41 = vector.extract_strided_slice %27 {offsets = [0, 2, 0], sizes = [16, 16, 128], strides = [1, 1, 1]} : vector<18x18x128xbf16> to vector<16x16x128xbf16>
    %42 = vector.shape_cast %41 : vector<16x16x128xbf16> to vector<256x128xbf16>
    %c2 = arith.constant 2 : index
    %c0_18 = arith.constant 0 : index
    %c0_19 = arith.constant 0 : index
    %43 = vector.load %arg4[%c2, %c0_18, %c0_19] : memref<9x128x32xbf16, #tpu.memory_space<vmem>>, vector<1x128x32xbf16>
    %44 = vector.shape_cast %43 : vector<1x128x32xbf16> to vector<128x32xbf16>
    %cst_20 = arith.constant dense<0.000000e+00> : vector<256x32xf32>
    %45 = tpu.matmul %42, %44, %cst_20 {dimension_numbers = #tpu.dot_dimension_numbers<[1], [0], [0], [1], [0, 0, 1, 1], [], []>} : vector<256x128xbf16>, vector<128x32xbf16>, vector<256x32xf32> -> vector<256x32xf32>
    %46 = arith.addf %40, %45 : vector<256x32xf32>
    %47 = vector.extract_strided_slice %27 {offsets = [1, 0, 0], sizes = [16, 16, 128], strides = [1, 1, 1]} : vector<18x18x128xbf16> to vector<16x16x128xbf16>
    %48 = vector.shape_cast %47 : vector<16x16x128xbf16> to vector<256x128xbf16>
    %c3 = arith.constant 3 : index
    %c0_21 = arith.constant 0 : index
    %c0_22 = arith.constant 0 : index
    %49 = vector.load %arg4[%c3, %c0_21, %c0_22] : memref<9x128x32xbf16, #tpu.memory_space<vmem>>, vector<1x128x32xbf16>
    %50 = vector.shape_cast %49 : vector<1x128x32xbf16> to vector<128x32xbf16>
    %cst_23 = arith.constant dense<0.000000e+00> : vector<256x32xf32>
    %51 = tpu.matmul %48, %50, %cst_23 {dimension_numbers = #tpu.dot_dimension_numbers<[1], [0], [0], [1], [0, 0, 1, 1], [], []>} : vector<256x128xbf16>, vector<128x32xbf16>, vector<256x32xf32> -> vector<256x32xf32>
    %52 = arith.addf %46, %51 : vector<256x32xf32>
    %53 = vector.extract_strided_slice %27 {offsets = [1, 1, 0], sizes = [16, 16, 128], strides = [1, 1, 1]} : vector<18x18x128xbf16> to vector<16x16x128xbf16>
    %54 = vector.shape_cast %53 : vector<16x16x128xbf16> to vector<256x128xbf16>
    %c4 = arith.constant 4 : index
    %c0_24 = arith.constant 0 : index
    %c0_25 = arith.constant 0 : index
    %55 = vector.load %arg4[%c4, %c0_24, %c0_25] : memref<9x128x32xbf16, #tpu.memory_space<vmem>>, vector<1x128x32xbf16>
    %56 = vector.shape_cast %55 : vector<1x128x32xbf16> to vector<128x32xbf16>
    %cst_26 = arith.constant dense<0.000000e+00> : vector<256x32xf32>
    %57 = tpu.matmul %54, %56, %cst_26 {dimension_numbers = #tpu.dot_dimension_numbers<[1], [0], [0], [1], [0, 0, 1, 1], [], []>} : vector<256x128xbf16>, vector<128x32xbf16>, vector<256x32xf32> -> vector<256x32xf32>
    %58 = arith.addf %52, %57 : vector<256x32xf32>
    %59 = vector.extract_strided_slice %27 {offsets = [1, 2, 0], sizes = [16, 16, 128], strides = [1, 1, 1]} : vector<18x18x128xbf16> to vector<16x16x128xbf16>
    %60 = vector.shape_cast %59 : vector<16x16x128xbf16> to vector<256x128xbf16>
    %c5 = arith.constant 5 : index
    %c0_27 = arith.constant 0 : index
    %c0_28 = arith.constant 0 : index
    %61 = vector.load %arg4[%c5, %c0_27, %c0_28] : memref<9x128x32xbf16, #tpu.memory_space<vmem>>, vector<1x128x32xbf16>
    %62 = vector.shape_cast %61 : vector<1x128x32xbf16> to vector<128x32xbf16>
    %cst_29 = arith.constant dense<0.000000e+00> : vector<256x32xf32>
    %63 = tpu.matmul %60, %62, %cst_29 {dimension_numbers = #tpu.dot_dimension_numbers<[1], [0], [0], [1], [0, 0, 1, 1], [], []>} : vector<256x128xbf16>, vector<128x32xbf16>, vector<256x32xf32> -> vector<256x32xf32>
    %64 = arith.addf %58, %63 : vector<256x32xf32>
    %65 = vector.extract_strided_slice %27 {offsets = [2, 0, 0], sizes = [16, 16, 128], strides = [1, 1, 1]} : vector<18x18x128xbf16> to vector<16x16x128xbf16>
    %66 = vector.shape_cast %65 : vector<16x16x128xbf16> to vector<256x128xbf16>
    %c6 = arith.constant 6 : index
    %c0_30 = arith.constant 0 : index
    %c0_31 = arith.constant 0 : index
    %67 = vector.load %arg4[%c6, %c0_30, %c0_31] : memref<9x128x32xbf16, #tpu.memory_space<vmem>>, vector<1x128x32xbf16>
    %68 = vector.shape_cast %67 : vector<1x128x32xbf16> to vector<128x32xbf16>
    %cst_32 = arith.constant dense<0.000000e+00> : vector<256x32xf32>
    %69 = tpu.matmul %66, %68, %cst_32 {dimension_numbers = #tpu.dot_dimension_numbers<[1], [0], [0], [1], [0, 0, 1, 1], [], []>} : vector<256x128xbf16>, vector<128x32xbf16>, vector<256x32xf32> -> vector<256x32xf32>
    %70 = arith.addf %64, %69 : vector<256x32xf32>
    %71 = vector.extract_strided_slice %27 {offsets = [2, 1, 0], sizes = [16, 16, 128], strides = [1, 1, 1]} : vector<18x18x128xbf16> to vector<16x16x128xbf16>
    %72 = vector.shape_cast %71 : vector<16x16x128xbf16> to vector<256x128xbf16>
    %c7 = arith.constant 7 : index
    %c0_33 = arith.constant 0 : index
    %c0_34 = arith.constant 0 : index
    %73 = vector.load %arg4[%c7, %c0_33, %c0_34] : memref<9x128x32xbf16, #tpu.memory_space<vmem>>, vector<1x128x32xbf16>
    %74 = vector.shape_cast %73 : vector<1x128x32xbf16> to vector<128x32xbf16>
    %cst_35 = arith.constant dense<0.000000e+00> : vector<256x32xf32>
    %75 = tpu.matmul %72, %74, %cst_35 {dimension_numbers = #tpu.dot_dimension_numbers<[1], [0], [0], [1], [0, 0, 1, 1], [], []>} : vector<256x128xbf16>, vector<128x32xbf16>, vector<256x32xf32> -> vector<256x32xf32>
    %76 = arith.addf %70, %75 : vector<256x32xf32>
    %77 = vector.extract_strided_slice %27 {offsets = [2, 2, 0], sizes = [16, 16, 128], strides = [1, 1, 1]} : vector<18x18x128xbf16> to vector<16x16x128xbf16>
    %78 = vector.shape_cast %77 : vector<16x16x128xbf16> to vector<256x128xbf16>
    %c8 = arith.constant 8 : index
    %c0_36 = arith.constant 0 : index
    %c0_37 = arith.constant 0 : index
    %79 = vector.load %arg4[%c8, %c0_36, %c0_37] : memref<9x128x32xbf16, #tpu.memory_space<vmem>>, vector<1x128x32xbf16>
    %80 = vector.shape_cast %79 : vector<1x128x32xbf16> to vector<128x32xbf16>
    %cst_38 = arith.constant dense<0.000000e+00> : vector<256x32xf32>
    %81 = tpu.matmul %78, %80, %cst_38 {dimension_numbers = #tpu.dot_dimension_numbers<[1], [0], [0], [1], [0, 0, 1, 1], [], []>} : vector<256x128xbf16>, vector<128x32xbf16>, vector<256x32xf32> -> vector<256x32xf32>
    %82 = arith.addf %76, %81 : vector<256x32xf32>
    %83 = vector.extract_strided_slice %1 {offsets = [1, 1, 0], sizes = [16, 16, 32], strides = [1, 1, 1]} : vector<18x18x32xf32> to vector<16x16x32xf32>
    %84 = vector.shape_cast %83 : vector<16x16x32xf32> to vector<256x32xf32>
    %c0_39 = arith.constant 0 : index
    %c0_40 = arith.constant 0 : index
    %85 = vector.load %arg5[%c0_39, %c0_40] : memref<1x32xf32, #tpu.memory_space<vmem>>, vector<1x32xf32>
    %86 = vector.broadcast %85 : vector<1x32xf32> to vector<256x32xf32>
    %87 = arith.addf %82, %86 : vector<256x32xf32>
    %88 = arith.addf %87, %84 : vector<256x32xf32>
    %89 = vector.shape_cast %88 : vector<256x32xf32> to vector<16x16x32xf32>
    %c0_41 = arith.constant 0 : index
    %c0_42 = arith.constant 0 : index
    %c0_43 = arith.constant 0 : index
    %c0_44 = arith.constant 0 : index
    %90 = vector.load %arg6[%c0_41, %c0_42, %c0_43, %c0_44] : memref<1x16x16x32xf32, #tpu.memory_space<vmem>>, vector<1x16x16x32xf32>
    %91 = vector.shape_cast %90 : vector<1x16x16x32xf32> to vector<16x16x32xf32>
    %92 = vector.shape_cast %89 : vector<16x16x32xf32> to vector<1x16x16x32xf32>
    tpu.vector_store %arg6[%c0_41, %c0_42, %c0_43, %c0_44], %92 {strides = array<i32>} : memref<1x16x16x32xf32, #tpu.memory_space<vmem>>, vector<1x16x16x32xf32>,
    return
  }
  func.func @transform_0(%arg0: i32) -> (i32, i32, i32, i32) {
    %c0_i32 = arith.constant 0 : i32
    %c0_i32_0 = arith.constant 0 : i32
    %c0_i32_1 = arith.constant 0 : i32
    %c0_i32_2 = arith.constant 0 : i32
    return %arg0, %c0_i32, %c0_i32_0, %c0_i32_1 : i32, i32, i32, i32
  }
  func.func @transform_1(%arg0: i32) -> (i32, i32) {
    %c0_i32 = arith.constant 0 : i32
    %c0_i32_0 = arith.constant 0 : i32
    %c0_i32_1 = arith.constant 0 : i32
    return %c0_i32, %c0_i32_0 : i32, i32
  }
  func.func @transform_2(%arg0: i32) -> (i32, i32) {
    %c0_i32 = arith.constant 0 : i32
    %c0_i32_0 = arith.constant 0 : i32
    %c0_i32_1 = arith.constant 0 : i32
    return %c0_i32, %c0_i32_0 : i32, i32
  }
  func.func @transform_3(%arg0: i32) -> (i32, i32, i32) {
    %c0_i32 = arith.constant 0 : i32
    %c0_i32_0 = arith.constant 0 : i32
    %c0_i32_1 = arith.constant 0 : i32
    %c0_i32_2 = arith.constant 0 : i32
    return %c0_i32, %c0_i32_0, %c0_i32_1 : i32, i32, i32
  }
  func.func @transform_4(%arg0: i32) -> (i32, i32) {
    %c0_i32 = arith.constant 0 : i32
    %c0_i32_0 = arith.constant 0 : i32
    %c0_i32_1 = arith.constant 0 : i32
    return %c0_i32, %c0_i32_0 : i32, i32
  }
  func.func @transform_5(%arg0: i32) -> (i32, i32, i32, i32) {
    %c0_i32 = arith.constant 0 : i32
    %c0_i32_0 = arith.constant 0 : i32
    %c0_i32_1 = arith.constant 0 : i32
    %c0_i32_2 = arith.constant 0 : i32
    return %arg0, %c0_i32, %c0_i32_0, %c0_i32_1 : i32, i32, i32, i32
  }
}

</mosaic_0001>

<llo_original>
// kernel: block53_forward.1
$region0: #{block53_forward.1}
  #allocation0 [shape = 'u32[]', space=smem, size = 0x4, offset = 0x4, fixed_abs, tag = 'smem constant byte address 0x4 - core index']
  #allocation1 [shape = 'u32[144,128]{1,0:T(1,128)}', space=vmem, size = 0x12000, scoped, tag = 'internal scratch']
  %s0 = inlined_call_operand.vmem [shape: f32[2,18,18,32], index: 0, kind: input, shape index: {}]
  %s1 = inlined_call_operand.vmem [shape: bf16[32,128], index: 1, kind: input, shape index: {}]
  %s2 = inlined_call_operand.vmem [shape: f32[1,128], index: 2, kind: input, shape index: {}]
  %s3 = inlined_call_operand.vmem [shape: bf16[9,128,32], index: 3, kind: input, shape index: {}]
  %s4 = inlined_call_operand.vmem [shape: f32[1,32], index: 4, kind: input, shape index: {}]
  %s5 = inlined_call_operand.hbm [shape: f32[2,16,16,32], index: 5, kind: output, shape index: {}]
  %s6 = sld [smem:[#allocation0]]
  $region53: #{block53_forward.1} parent=0
    _
  %s8 = ssub.s32 1, %s6
  %s9 = scalar_select 0, %s8, %s6
  $region1: #{block53_forward.1} parent=0
    #allocation2 [shape = 'u8[262144]{0}', space=vmem, size = 0x40000, scoped, tag = 'output window, operand 0']
    #allocation3 [shape = 's32[2]{0}', space=sflag, size = 0x8, scoped, tag = 'scoped memory for block53_forward.1']
    %10 = vsyncpa [#allocation3], 0
    %s11 = scalar_lea.sflag [#allocation3], 1
    %12 = vsyncpa %s11, 0
    loop: start=0, step=1, limit=4
    $region2: #{block53_forward.1} parent=1 // loop_pre_header
      _
    $region3: #{block53_forward.1} parent=1 // loop_header
      %s14 = sphi 0, %s18
      %p15 = scmp.ge.s32.totalorder %s14, 4
      %s24 = sphi 0, %s26
      %s27 = sphi 0, %s24
      %s28 = sphi 0, %s27
      %s44 = sphi 0, %s28
      %s48 = sphi 0, %s48
      %s50 = sphi 0, %s48
      %s51 = sphi 0, %s50
      %s65 = sphi 0, %s51
      %s69 = sphi 0, %s69
      %s71 = sphi 0, %s69
      %s72 = sphi 0, %s71
      %s86 = sphi 0, %s72
      %s90 = sphi 0, %s90
      %s92 = sphi 0, %s90
      %s93 = sphi 0, %s92
      %s107 = sphi 0, %s93
      %s111 = sphi 0, %s111
      %s113 = sphi 0, %s111
      %s114 = sphi 0, %s113
      %s128 = sphi 0, %s114
      %s134 = sphi 0, %s136
      %s137 = sphi 0, %s134
      %s138 = sphi 0, %s137
      %s154 = sphi 0, %s138
    $region4: #{block53_forward.1} parent=1 // loop_header_branch
      %17 = sbr.rel (%p15) target = $region8
    $region5: #{block53_forward.1} parent=1 // loop_body
      %s19 = ssub.s32 %s14, 1
      %s20 = ssub.s32 %s14, 2
      %s21 = sadd.s32 %s14, 1
      %s22 = ssub.s32 %s14, %s21
      %p23 = scmp.eq.s32.totalorder %s22, 0
      %s25 = sadd.s32 %s24, 1
      %s26 = scalar_select %p23, %s24, %s25
      %p29 = pneg %p23
      %p30 = scmp.eq.s32.totalorder %s14, 1
      %p31 = por %p29, %p30
      %p32 = scmp.ne.s32.totalorder %s24, %s27
      %p33 = scmp.eq.s32.totalorder %s14, 0
      %p34 = por %p32, %p33
      %p35 = scmp.ne.s32.totalorder %s24, %s27
      %p36 = scmp.eq.s32.totalorder %s19, 1
      %p37 = por %p35, %p36
      %p38 = scmp.ne.s32.totalorder %s27, %s28
      %p39 = scmp.eq.s32.totalorder %s19, 0
      %p40 = por %p38, %p39
      %p41 = scmp.ne.s32.totalorder %s27, %s28
      %p42 = scmp.eq.s32.totalorder %s20, 1
      %p43 = por %p41, %p42
      %p45 = scmp.ne.s32.totalorder %s28, %s44
      %p46 = scmp.eq.s32.totalorder %s20, 0
      %p47 = por %p45, %p46
      %s49 = sadd.s32 %s48, 1
      %p52 = scmp.eq.s32.totalorder %s14, 1
      %p53 = scmp.ne.s32.totalorder %s48, %s50
      %p54 = scmp.eq.s32.totalorder %s14, 0
      %p55 = por %p53, %p54
      %p56 = scmp.ne.s32.totalorder %s48, %s50
      %p57 = scmp.eq.s32.totalorder %s19, 1
      %p58 = por %p56, %p57
      %p59 = scmp.ne.s32.totalorder %s50, %s51
      %p60 = scmp.eq.s32.totalorder %s19, 0
      %p61 = por %p59, %p60
      %p62 = scmp.ne.s32.totalorder %s50, %s51
      %p63 = scmp.eq.s32.totalorder %s20, 1
      %p64 = por %p62, %p63
      %p66 = scmp.ne.s32.totalorder %s51, %s65
      %p67 = scmp.eq.s32.totalorder %s20, 0
      %p68 = por %p66, %p67
      %s70 = sadd.s32 %s69, 1
      %p73 = scmp.eq.s32.totalorder %s14, 1
      %p74 = scmp.ne.s32.totalorder %s69, %s71
      %p75 = scmp.eq.s32.totalorder %s14, 0
      %p76 = por %p74, %p75
      %p77 = scmp.ne.s32.totalorder %s69, %s71
      %p78 = scmp.eq.s32.totalorder %s19, 1
      %p79 = por %p77, %p78
      %p80 = scmp.ne.s32.totalorder %s71, %s72
      %p81 = scmp.eq.s32.totalorder %s19, 0
      %p82 = por %p80, %p81
      %p83 = scmp.ne.s32.totalorder %s71, %s72
      %p84 = scmp.eq.s32.totalorder %s20, 1
      %p85 = por %p83, %p84
      %p87 = scmp.ne.s32.totalorder %s72, %s86
      %p88 = scmp.eq.s32.totalorder %s20, 0
      %p89 = por %p87, %p88
      %s91 = sadd.s32 %s90, 1
      %p94 = scmp.eq.s32.totalorder %s14, 1
      %p95 = scmp.ne.s32.totalorder %s90, %s92
      %p96 = scmp.eq.s32.totalorder %s14, 0
      %p97 = por %p95, %p96
      %p98 = scmp.ne.s32.totalorder %s90, %s92
      %p99 = scmp.eq.s32.totalorder %s19, 1
      %p100 = por %p98, %p99
      %p101 = scmp.ne.s32.totalorder %s92, %s93
      %p102 = scmp.eq.s32.totalorder %s19, 0
      %p103 = por %p101, %p102
      %p104 = scmp.ne.s32.totalorder %s92, %s93
      %p105 = scmp.eq.s32.totalorder %s20, 1
      %p106 = por %p104, %p105
      %p108 = scmp.ne.s32.totalorder %s93, %s107
      %p109 = scmp.eq.s32.totalorder %s20, 0
      %p110 = por %p108, %p109
      %s112 = sadd.s32 %s111, 1
      %p115 = scmp.eq.s32.totalorder %s14, 1
      %p116 = scmp.ne.s32.totalorder %s111, %s113
      %p117 = scmp.eq.s32.totalorder %s14, 0
      %p118 = por %p116, %p117
      %p119 = scmp.ne.s32.totalorder %s111, %s113
      %p120 = scmp.eq.s32.totalorder %s19, 1
      %p121 = por %p119, %p120
      %p122 = scmp.ne.s32.totalorder %s113, %s114
      %p123 = scmp.eq.s32.totalorder %s19, 0
      %p124 = por %p122, %p123
      %p125 = scmp.ne.s32.totalorder %s113, %s114
      %p126 = scmp.eq.s32.totalorder %s20, 1
      %p127 = por %p125, %p126
      %p129 = scmp.ne.s32.totalorder %s114, %s128
      %p130 = scmp.eq.s32.totalorder %s20, 0
      %p131 = por %p129, %p130
      %s132 = ssub.s32 %s14, %s21
      %p133 = scmp.eq.s32.totalorder %s132, 0
      %s135 = sadd.s32 %s134, 1
      %s136 = scalar_select %p133, %s134, %s135
      %p139 = pneg %p133
      %p140 = scmp.eq.s32.totalorder %s14, 1
      %p141 = por %p139, %p140
      %p142 = scmp.ne.s32.totalorder %s134, %s137
      %p143 = scmp.eq.s32.totalorder %s14, 0
      %p144 = por %p142, %p143
      %p145 = scmp.ne.s32.totalorder %s134, %s137
      %p146 = scmp.eq.s32.totalorder %s19, 1
      %p147 = por %p145, %p146
      %p148 = scmp.ne.s32.totalorder %s137, %s138
      %p149 = scmp.eq.s32.totalorder %s19, 0
      %p150 = por %p148, %p149
      %p151 = scmp.ne.s32.totalorder %s137, %s138
      %p152 = scmp.eq.s32.totalorder %s20, 1
      %p153 = por %p151, %p152
      %p155 = scmp.ne.s32.totalorder %s138, %s154
      %p156 = scmp.eq.s32.totalorder %s20, 0
      %p157 = por %p155, %p156
      %p158 = scmp.le.s32.totalorder 1, %s14
      %p159 = scmp.lt.s32.totalorder %s14, 3
      %p160 = pnand %p158, %p159
      %p161 = pneg %p160
      // Predicated region
      $region9: #{block53_forward.1} parent=5 // pred_check
        _
      $region10: #{block53_forward.1} parent=5 // pred_check_branch
        %163 = sbr.rel (%p160) target = $region12
      $region11: #{block53_forward.1} parent=5 // pred_region
        %s164 = ssub.s32 %s14, 1
        // Predicated region
        $region13: #{block53_forward.1} parent=11 // pred_check
          %p165 = pneg %p61
        $region14: #{block53_forward.1} parent=11 // pred_check_branch
          %167 = sbr.rel (%p165) target = $region16
        $region15: #{block53_forward.1} parent=11 // pred_region
          _
        $region16: #{block53_forward.1} parent=11 // pred_fallthru
          _
        // Predicated region
        $region17: #{block53_forward.1} parent=11 // pred_check
          %p168 = pneg %p82
        $region18: #{block53_forward.1} parent=11 // pred_check_branch
          %170 = sbr.rel (%p168) target = $region20
        $region19: #{block53_forward.1} parent=11 // pred_region
          _
        $region20: #{block53_forward.1} parent=11 // pred_fallthru
          _
        // Predicated region
        $region21: #{block53_forward.1} parent=11 // pred_check
          %p171 = pneg %p103
        $region22: #{block53_forward.1} parent=11 // pred_check_branch
          %173 = sbr.rel (%p171) target = $region24
        $region23: #{block53_forward.1} parent=11 // pred_region
          _
        $region24: #{block53_forward.1} parent=11 // pred_fallthru
          _
        // Predicated region
        $region25: #{block53_forward.1} parent=11 // pred_check
          %p174 = pneg %p124
        $region26: #{block53_forward.1} parent=11 // pred_check_branch
          %176 = sbr.rel (%p174) target = $region28
        $region27: #{block53_forward.1} parent=11 // pred_region
          _
        $region28: #{block53_forward.1} parent=11 // pred_fallthru
          _
      $region12: #{block53_forward.1} parent=5 // pred_fallthru
        _
      %p177 = scmp.lt.s32.totalorder %s14, 2
      // Predicated region
      $region29: #{block53_forward.1} parent=5 // pred_check
        %p178 = pneg %p177
      $region30: #{block53_forward.1} parent=5 // pred_check_branch
        %180 = sbr.rel (%p178) target = $region32
      $region31: #{block53_forward.1} parent=5 // pred_region
        // Predicated region
        $region33: #{block53_forward.1} parent=31 // pred_check
          %p181 = pneg %p34
        $region34: #{block53_forward.1} parent=31 // pred_check_branch
          %183 = sbr.rel (%p181) target = $region36
        $region35: #{block53_forward.1} parent=31 // pred_region
          %p184 = scmp.lt.s32.totalorder %s14, 1
          %s185 = scalar_select %p184, %s14, 1
          %s186 = smul.addr %s185, 54
          %s187 = smul.addr %s186, 8
          %s188 = scalar_lea.vmem %s0, %s187
        $region36: #{block53_forward.1} parent=31 // pred_fallthru
          _
      $region32: #{block53_forward.1} parent=5 // pred_fallthru
        _
      %p189 = scmp.le.s32.totalorder 1, %s14
      %p190 = scmp.lt.s32.totalorder %s14, 3
      %p191 = pnand %p189, %p190
      %p192 = pneg %p191
      // Predicated region
      $region37: #{block53_forward.1} parent=5 // pred_check
        _
      $region38: #{block53_forward.1} parent=5 // pred_check_branch
        %194 = sbr.rel (%p191) target = $region40
      $region39: #{block53_forward.1} parent=5 // pred_region
        %s195 = ssub.s32 %s14, 1
        %p196 = scmp.lt.s32.totalorder %s19, 1
        %s197 = scalar_select %p196, %s19, 1
        %s198 = smul.addr %s197, 54
        %s199 = smul.addr %s198, 8
        %s200 = scalar_lea.vmem %s0, %s199
        %p201 = pneg %p40
        %p202 = pneg %p37
        %p203 = pneg %p61
        %p204 = pneg %p58
        %p205 = pneg %p82
        %p206 = pneg %p79
        %p207 = pneg %p103
        %p208 = pneg %p100
        %p209 = pneg %p124
        %p210 = pneg %p121
        %p211 = pneg %p150
        %p212 = pneg %p147
        %s213 = sand.u32 %s137, 1
        %s214 = scalar_lea.sflag [#allocation3], %s213
        %s215 = sand.u32 %s137, 1
        %s216 = smul.addr %s215, 256
        %s217 = scalar_lea.vmem [#allocation2], %s216
        %p218 = scmp.lt.s32.totalorder %s19, 1
        %s219 = scalar_select %p218, %s19, 1
        %s220 = smul.addr %s219, 54
        %s221 = smul.addr %s220, 8
        %s222 = scalar_lea.vmem %s0, %s221
        %v224 = vld [vmem:[%s222] sm:$0xff]
        %v225 = vld [vmem:[%s222 + $0x8] sm:$0xff]
        %v226 = vld [vmem:[%s222 + $0x10] sm:$0x3]
        %v227 = vld [vmem:[%s222 + $0x18] sm:$0xff]
        %v228 = vld [vmem:[%s222 + $0x20] sm:$0xff]
        %v229 = vld [vmem:[%s222 + $0x28] sm:$0x3]
        %v230 = vld [vmem:[%s222 + $0x30] sm:$0xff]
        %v231 = vld [vmem:[%s222 + $0x38] sm:$0xff]
        %v232 = vld [vmem:[%s222 + $0x40] sm:$0x3]
        %v233 = vld [vmem:[%s222 + $0x48] sm:$0xff]
        %v234 = vld [vmem:[%s222 + $0x50] sm:$0xff]
        %v235 = vld [vmem:[%s222 + $0x58] sm:$0x3]
        %v236 = vld [vmem:[%s222 + $0x60] sm:$0xff]
        %v237 = vld [vmem:[%s222 + $0x68] sm:$0xff]
        %v238 = vld [vmem:[%s222 + $0x70] sm:$0x3]
        %v239 = vld [vmem:[%s222 + $0x78] sm:$0xff]
        %v240 = vld [vmem:[%s222 + $0x80] sm:$0xff]
        %v241 = vld [vmem:[%s222 + $0x88] sm:$0x3]
        %v242 = vld [vmem:[%s222 + $0x90] sm:$0xff]
        %v243 = vld [vmem:[%s222 + $0x98] sm:$0xff]
        %v244 = vld [vmem:[%s222 + $0xa0] sm:$0x3]
        %v245 = vld [vmem:[%s222 + $0xa8] sm:$0xff]
        %v246 = vld [vmem:[%s222 + $0xb0] sm:$0xff]
        %v247 = vld [vmem:[%s222 + $0xb8] sm:$0x3]
        %v248 = vld [vmem:[%s222 + $0xc0] sm:$0xff]
        %v249 = vld [vmem:[%s222 + $0xc8] sm:$0xff]
        %v250 = vld [vmem:[%s222 + $0xd0] sm:$0x3]
        %v251 = vld [vmem:[%s222 + $0xd8] sm:$0xff]
        %v252 = vld [vmem:[%s222 + $0xe0] sm:$0xff]
        %v253 = vld [vmem:[%s222 + $0xe8] sm:$0x3]
        %v254 = vld [vmem:[%s222 + $0xf0] sm:$0xff]
        %v255 = vld [vmem:[%s222 + $0xf8] sm:$0xff]
        %v256 = vld [vmem:[%s222 + $0x100] sm:$0x3]
        %v257 = vld [vmem:[%s222 + $0x108] sm:$0xff]
        %v258 = vld [vmem:[%s222 + $0x110] sm:$0xff]
        %v259 = vld [vmem:[%s222 + $0x118] sm:$0x3]
        %v260 = vld [vmem:[%s222 + $0x120] sm:$0xff]
        %v261 = vld [vmem:[%s222 + $0x128] sm:$0xff]
        %v262 = vld [vmem:[%s222 + $0x130] sm:$0x3]
        %v263 = vld [vmem:[%s222 + $0x138] sm:$0xff]
        %v264 = vld [vmem:[%s222 + $0x140] sm:$0xff]
        %v265 = vld [vmem:[%s222 + $0x148] sm:$0x3]
        %v266 = vld [vmem:[%s222 + $0x150] sm:$0xff]
        %v267 = vld [vmem:[%s222 + $0x158] sm:$0xff]
        %v268 = vld [vmem:[%s222 + $0x160] sm:$0x3]
        %v269 = vld [vmem:[%s222 + $0x168] sm:$0xff]
        %v270 = vld [vmem:[%s222 + $0x170] sm:$0xff]
        %v271 = vld [vmem:[%s222 + $0x178] sm:$0x3]
        %v272 = vld [vmem:[%s222 + $0x180] sm:$0xff]
        %v273 = vld [vmem:[%s222 + $0x188] sm:$0xff]
        %v274 = vld [vmem:[%s222 + $0x190] sm:$0x3]
        %v275 = vld [vmem:[%s222 + $0x198] sm:$0xff]
        %v276 = vld [vmem:[%s222 + $0x1a0] sm:$0xff]
        %v277 = vld [vmem:[%s222 + $0x1a8] sm:$0x3]
        %v332 = vcombine.high %v224, %v224
        %v334 = vunpack.c.l.s4 1983009808
        %v335 = vunpack.c.0.s8 %v334
        %v336 = vlaneseq
        %v337 = vshrl.u32 %v336, 7
        %v338 = vsub.s32 %v335, %v337
        %v339 = vrot.slane %v224, %v338
        %v341 = vunpack.c.l.s4 1983009808
        %v342 = vunpack.c.0.s8 %v341
        %v343 = vlaneseq
        %v344 = vshrl.u32 %v343, 7
        %v345 = vsub.s32 %v342, %v344
        %v346 = vrot.slane %v332, %v345
        %v347 = vcombine.high %v339, %v339
        %v348 = vcombine.high %v346, %v346
        %v349 = vcombine.high %v225, %v225
        %v351 = vunpack.c.l.s4 1983009808
        %v352 = vunpack.c.0.s8 %v351
        %v353 = vlaneseq
        %v354 = vshrl.u32 %v353, 7
        %v355 = vsub.s32 %v352, %v354
        %v356 = vrot.slane %v225, %v355
        %v358 = vunpack.c.l.s4 1983009808
        %v359 = vunpack.c.0.s8 %v358
        %v360 = vlaneseq
        %v361 = vshrl.u32 %v360, 7
        %v362 = vsub.s32 %v359, %v361
        %v363 = vrot.slane %v349, %v362
        %v364 = vcombine.high %v356, %v356
        %v365 = vcombine.high %v363, %v363
        %v367 = vunpack.c.l.s4 1983009808
        %v368 = vunpack.c.0.s8 %v367
        %v369 = vlaneseq
        %v370 = vshrl.u32 %v369, 7
        %v371 = vsub.s32 %v368, %v370
        %v372 = vrot.slane %v226, %v371
        %v373 = vcombine.high %v227, %v227
        %v375 = vunpack.c.l.s4 1983009808
        %v376 = vunpack.c.0.s8 %v375
        %v377 = vlaneseq
        %v378 = vshrl.u32 %v377, 7
        %v379 = vsub.s32 %v376, %v378
        %v380 = vrot.slane %v227, %v379
        %v382 = vunpack.c.l.s4 1983009808
        %v383 = vunpack.c.0.s8 %v382
        %v384 = vlaneseq
        %v385 = vshrl.u32 %v384, 7
        %v386 = vsub.s32 %v383, %v385
        %v387 = vrot.slane %v373, %v386
        %v388 = vcombine.high %v380, %v380
        %v389 = vcombine.high %v387, %v387
        %v390 = vcombine.high %v228, %v228
        %v392 = vunpack.c.l.s4 1983009808
        %v393 = vunpack.c.0.s8 %v392
        %v394 = vlaneseq
        %v395 = vshrl.u32 %v394, 7
        %v396 = vsub.s32 %v393, %v395
        %v397 = vrot.slane %v228, %v396
        %v399 = vunpack.c.l.s4 1983009808
        %v400 = vunpack.c.0.s8 %v399
        %v401 = vlaneseq
        %v402 = vshrl.u32 %v401, 7
        %v403 = vsub.s32 %v400, %v402
        %v404 = vrot.slane %v390, %v403
        %v405 = vcombine.high %v397, %v397
        %v406 = vcombine.high %v404, %v404
        %v408 = vunpack.c.l.s4 1983009808
        %v409 = vunpack.c.0.s8 %v408
        %v410 = vlaneseq
        %v411 = vshrl.u32 %v410, 7
        %v412 = vsub.s32 %v409, %v411
        %v413 = vrot.slane %v229, %v412
        %v414 = vcombine.high %v230, %v230
        %v416 = vunpack.c.l.s4 1983009808
        %v417 = vunpack.c.0.s8 %v416
        %v418 = vlaneseq
        %v419 = vshrl.u32 %v418, 7
        %v420 = vsub.s32 %v417, %v419
        %v421 = vrot.slane %v230, %v420
        %v423 = vunpack.c.l.s4 1983009808
        %v424 = vunpack.c.0.s8 %v423
        %v425 = vlaneseq
        %v426 = vshrl.u32 %v425, 7
        %v427 = vsub.s32 %v424, %v426
        %v428 = vrot.slane %v414, %v427
        %v429 = vcombine.high %v421, %v421
        %v430 = vcombine.high %v428, %v428
        %v431 = vcombine.high %v231, %v231
        %v433 = vunpack.c.l.s4 1983009808
        %v434 = vunpack.c.0.s8 %v433
        %v435 = vlaneseq
        %v436 = vshrl.u32 %v435, 7
        %v437 = vsub.s32 %v434, %v436
        %v438 = vrot.slane %v231, %v437
        %v440 = vunpack.c.l.s4 1983009808
        %v441 = vunpack.c.0.s8 %v440
        %v442 = vlaneseq
        %v443 = vshrl.u32 %v442, 7
        %v444 = vsub.s32 %v441, %v443
        %v445 = vrot.slane %v431, %v444
        %v446 = vcombine.high %v438, %v438
        %v447 = vcombine.high %v445, %v445
        %v449 = vunpack.c.l.s4 1983009808
        %v450 = vunpack.c.0.s8 %v449
        %v451 = vlaneseq
        %v452 = vshrl.u32 %v451, 7
        %v453 = vsub.s32 %v450, %v452
        %v454 = vrot.slane %v232, %v453
        %v455 = vcombine.high %v233, %v233
        %v457 = vunpack.c.l.s4 1983009808
        %v458 = vunpack.c.0.s8 %v457
        %v459 = vlaneseq
        %v460 = vshrl.u32 %v459, 7
        %v461 = vsub.s32 %v458, %v460
        %v462 = vrot.slane %v233, %v461
        %v464 = vunpack.c.l.s4 1983009808
        %v465 = vunpack.c.0.s8 %v464
        %v466 = vlaneseq
        %v467 = vshrl.u32 %v466, 7
        %v468 = vsub.s32 %v465, %v467
        %v469 = vrot.slane %v455, %v468
        %v470 = vcombine.high %v462, %v462
        %v471 = vcombine.high %v469, %v469
        %v472 = vcombine.high %v234, %v234
        %v474 = vunpack.c.l.s4 1983009808
        %v475 = vunpack.c.0.s8 %v474
        %v476 = vlaneseq
        %v477 = vshrl.u32 %v476, 7
        %v478 = vsub.s32 %v475, %v477
        %v479 = vrot.slane %v234, %v478
        %v481 = vunpack.c.l.s4 1983009808
        %v482 = vunpack.c.0.s8 %v481
        %v483 = vlaneseq
        %v484 = vshrl.u32 %v483, 7
        %v485 = vsub.s32 %v482, %v484
        %v486 = vrot.slane %v472, %v485
        %v487 = vcombine.high %v479, %v479
        %v488 = vcombine.high %v486, %v486
        %v490 = vunpack.c.l.s4 1983009808
        %v491 = vunpack.c.0.s8 %v490
        %v492 = vlaneseq
        %v493 = vshrl.u32 %v492, 7
        %v494 = vsub.s32 %v491, %v493
        %v495 = vrot.slane %v235, %v494
        %v496 = vcombine.high %v236, %v236
        %v498 = vunpack.c.l.s4 1983009808
        %v499 = vunpack.c.0.s8 %v498
        %v500 = vlaneseq
        %v501 = vshrl.u32 %v500, 7
        %v502 = vsub.s32 %v499, %v501
        %v503 = vrot.slane %v236, %v502
        %v505 = vunpack.c.l.s4 1983009808
        %v506 = vunpack.c.0.s8 %v505
        %v507 = vlaneseq
        %v508 = vshrl.u32 %v507, 7
        %v509 = vsub.s32 %v506, %v508
        %v510 = vrot.slane %v496, %v509
        %v511 = vcombine.high %v503, %v503
        %v512 = vcombine.high %v510, %v510
        %v513 = vcombine.high %v237, %v237
        %v515 = vunpack.c.l.s4 1983009808
        %v516 = vunpack.c.0.s8 %v515
        %v517 = vlaneseq
        %v518 = vshrl.u32 %v517, 7
        %v519 = vsub.s32 %v516, %v518
        %v520 = vrot.slane %v237, %v519
        %v522 = vunpack.c.l.s4 1983009808
        %v523 = vunpack.c.0.s8 %v522
        %v524 = vlaneseq
        %v525 = vshrl.u32 %v524, 7
        %v526 = vsub.s32 %v523, %v525
        %v527 = vrot.slane %v513, %v526
        %v528 = vcombine.high %v520, %v520
        %v529 = vcombine.high %v527, %v527
        %v531 = vunpack.c.l.s4 1983009808
        %v532 = vunpack.c.0.s8 %v531
        %v533 = vlaneseq
        %v534 = vshrl.u32 %v533, 7
        %v535 = vsub.s32 %v532, %v534
        %v536 = vrot.slane %v238, %v535
        %v537 = vcombine.high %v239, %v239
        %v539 = vunpack.c.l.s4 1983009808
        %v540 = vunpack.c.0.s8 %v539
        %v541 = vlaneseq
        %v542 = vshrl.u32 %v541, 7
        %v543 = vsub.s32 %v540, %v542
        %v544 = vrot.slane %v239, %v543
        %v546 = vunpack.c.l.s4 1983009808
        %v547 = vunpack.c.0.s8 %v546
        %v548 = vlaneseq
        %v549 = vshrl.u32 %v548, 7
        %v550 = vsub.s32 %v547, %v549
        %v551 = vrot.slane %v537, %v550
        %v552 = vcombine.high %v544, %v544
        %v553 = vcombine.high %v551, %v551
        %v554 = vcombine.high %v240, %v240
        %v556 = vunpack.c.l.s4 1983009808
        %v557 = vunpack.c.0.s8 %v556
        %v558 = vlaneseq
        %v559 = vshrl.u32 %v558, 7
        %v560 = vsub.s32 %v557, %v559
        %v561 = vrot.slane %v240, %v560
        %v563 = vunpack.c.l.s4 1983009808
        %v564 = vunpack.c.0.s8 %v563
        %v565 = vlaneseq
        %v566 = vshrl.u32 %v565, 7
        %v567 = vsub.s32 %v564, %v566
        %v568 = vrot.slane %v554, %v567
        %v569 = vcombine.high %v561, %v561
        %v570 = vcombine.high %v568, %v568
        %v572 = vunpack.c.l.s4 1983009808
        %v573 = vunpack.c.0.s8 %v572
        %v574 = vlaneseq
        %v575 = vshrl.u32 %v574, 7
        %v576 = vsub.s32 %v573, %v575
        %v577 = vrot.slane %v241, %v576
        %v578 = vcombine.high %v242, %v242
        %v580 = vunpack.c.l.s4 1983009808
        %v581 = vunpack.c.0.s8 %v580
        %v582 = vlaneseq
        %v583 = vshrl.u32 %v582, 7
        %v584 = vsub.s32 %v581, %v583
        %v585 = vrot.slane %v242, %v584
        %v587 = vunpack.c.l.s4 1983009808
        %v588 = vunpack.c.0.s8 %v587
        %v589 = vlaneseq
        %v590 = vshrl.u32 %v589, 7
        %v591 = vsub.s32 %v588, %v590
        %v592 = vrot.slane %v578, %v591
        %v593 = vcombine.high %v585, %v585
        %v594 = vcombine.high %v592, %v592
        %v595 = vcombine.high %v243, %v243
        %v597 = vunpack.c.l.s4 1983009808
        %v598 = vunpack.c.0.s8 %v597
        %v599 = vlaneseq
        %v600 = vshrl.u32 %v599, 7
        %v601 = vsub.s32 %v598, %v600
        %v602 = vrot.slane %v243, %v601
        %v604 = vunpack.c.l.s4 1983009808
        %v605 = vunpack.c.0.s8 %v604
        %v606 = vlaneseq
        %v607 = vshrl.u32 %v606, 7
        %v608 = vsub.s32 %v605, %v607
        %v609 = vrot.slane %v595, %v608
        %v610 = vcombine.high %v602, %v602
        %v611 = vcombine.high %v609, %v609
        %v613 = vunpack.c.l.s4 1983009808
        %v614 = vunpack.c.0.s8 %v613
        %v615 = vlaneseq
        %v616 = vshrl.u32 %v615, 7
        %v617 = vsub.s32 %v614, %v616
        %v618 = vrot.slane %v244, %v617
        %v619 = vcombine.high %v245, %v245
        %v621 = vunpack.c.l.s4 1983009808
        %v622 = vunpack.c.0.s8 %v621
        %v623 = vlaneseq
        %v624 = vshrl.u32 %v623, 7
        %v625 = vsub.s32 %v622, %v624
        %v626 = vrot.slane %v245, %v625
        %v628 = vunpack.c.l.s4 1983009808
        %v629 = vunpack.c.0.s8 %v628
        %v630 = vlaneseq
        %v631 = vshrl.u32 %v630, 7
        %v632 = vsub.s32 %v629, %v631
        %v633 = vrot.slane %v619, %v632
        %v634 = vcombine.high %v626, %v626
        %v635 = vcombine.high %v633, %v633
        %v636 = vcombine.high %v246, %v246
        %v638 = vunpack.c.l.s4 1983009808
        %v639 = vunpack.c.0.s8 %v638
        %v640 = vlaneseq
        %v641 = vshrl.u32 %v640, 7
        %v642 = vsub.s32 %v639, %v641
        %v643 = vrot.slane %v246, %v642
        %v645 = vunpack.c.l.s4 1983009808
        %v646 = vunpack.c.0.s8 %v645
        %v647 = vlaneseq
        %v648 = vshrl.u32 %v647, 7
        %v649 = vsub.s32 %v646, %v648
        %v650 = vrot.slane %v636, %v649
        %v651 = vcombine.high %v643, %v643
        %v652 = vcombine.high %v650, %v650
        %v654 = vunpack.c.l.s4 1983009808
        %v655 = vunpack.c.0.s8 %v654
        %v656 = vlaneseq
        %v657 = vshrl.u32 %v656, 7
        %v658 = vsub.s32 %v655, %v657
        %v659 = vrot.slane %v247, %v658
        %v660 = vcombine.high %v248, %v248
        %v662 = vunpack.c.l.s4 1983009808
        %v663 = vunpack.c.0.s8 %v662
        %v664 = vlaneseq
        %v665 = vshrl.u32 %v664, 7
        %v666 = vsub.s32 %v663, %v665
        %v667 = vrot.slane %v248, %v666
        %v669 = vunpack.c.l.s4 1983009808
        %v670 = vunpack.c.0.s8 %v669
        %v671 = vlaneseq
        %v672 = vshrl.u32 %v671, 7
        %v673 = vsub.s32 %v670, %v672
        %v674 = vrot.slane %v660, %v673
        %v675 = vcombine.high %v667, %v667
        %v676 = vcombine.high %v674, %v674
        %v677 = vcombine.high %v249, %v249
        %v679 = vunpack.c.l.s4 1983009808
        %v680 = vunpack.c.0.s8 %v679
        %v681 = vlaneseq
        %v682 = vshrl.u32 %v681, 7
        %v683 = vsub.s32 %v680, %v682
        %v684 = vrot.slane %v249, %v683
        %v686 = vunpack.c.l.s4 1983009808
        %v687 = vunpack.c.0.s8 %v686
        %v688 = vlaneseq
        %v689 = vshrl.u32 %v688, 7
        %v690 = vsub.s32 %v687, %v689
        %v691 = vrot.slane %v677, %v690
        %v692 = vcombine.high %v684, %v684
        %v693 = vcombine.high %v691, %v691
        %v695 = vunpack.c.l.s4 1983009808
        %v696 = vunpack.c.0.s8 %v695
        %v697 = vlaneseq
        %v698 = vshrl.u32 %v697, 7
        %v699 = vsub.s32 %v696, %v698
        %v700 = vrot.slane %v250, %v699
        %v701 = vcombine.high %v251, %v251
        %v703 = vunpack.c.l.s4 1983009808
        %v704 = vunpack.c.0.s8 %v703
        %v705 = vlaneseq
        %v706 = vshrl.u32 %v705, 7
        %v707 = vsub.s32 %v704, %v706
        %v708 = vrot.slane %v251, %v707
        %v710 = vunpack.c.l.s4 1983009808
        %v711 = vunpack.c.0.s8 %v710
        %v712 = vlaneseq
        %v713 = vshrl.u32 %v712, 7
        %v714 = vsub.s32 %v711, %v713
        %v715 = vrot.slane %v701, %v714
        %v716 = vcombine.high %v708, %v708
        %v717 = vcombine.high %v715, %v715
        %v718 = vcombine.high %v252, %v252
        %v720 = vunpack.c.l.s4 1983009808
        %v721 = vunpack.c.0.s8 %v720
        %v722 = vlaneseq
        %v723 = vshrl.u32 %v722, 7
        %v724 = vsub.s32 %v721, %v723
        %v725 = vrot.slane %v252, %v724
        %v727 = vunpack.c.l.s4 1983009808
        %v728 = vunpack.c.0.s8 %v727
        %v729 = vlaneseq
        %v730 = vshrl.u32 %v729, 7
        %v731 = vsub.s32 %v728, %v730
        %v732 = vrot.slane %v718, %v731
        %v733 = vcombine.high %v725, %v725
        %v734 = vcombine.high %v732, %v732
        %v736 = vunpack.c.l.s4 1983009808
        %v737 = vunpack.c.0.s8 %v736
        %v738 = vlaneseq
        %v739 = vshrl.u32 %v738, 7
        %v740 = vsub.s32 %v737, %v739
        %v741 = vrot.slane %v253, %v740
        %v742 = vcombine.high %v254, %v254
        %v744 = vunpack.c.l.s4 1983009808
        %v745 = vunpack.c.0.s8 %v744
        %v746 = vlaneseq
        %v747 = vshrl.u32 %v746, 7
        %v748 = vsub.s32 %v745, %v747
        %v749 = vrot.slane %v254, %v748
        %v751 = vunpack.c.l.s4 1983009808
        %v752 = vunpack.c.0.s8 %v751
        %v753 = vlaneseq
        %v754 = vshrl.u32 %v753, 7
        %v755 = vsub.s32 %v752, %v754
        %v756 = vrot.slane %v742, %v755
        %v757 = vcombine.high %v749, %v749
        %v758 = vcombine.high %v756, %v756
        %v759 = vcombine.high %v255, %v255
        %v761 = vunpack.c.l.s4 1983009808
        %v762 = vunpack.c.0.s8 %v761
        %v763 = vlaneseq
        %v764 = vshrl.u32 %v763, 7
        %v765 = vsub.s32 %v762, %v764
        %v766 = vrot.slane %v255, %v765
        %v768 = vunpack.c.l.s4 1983009808
        %v769 = vunpack.c.0.s8 %v768
        %v770 = vlaneseq
        %v771 = vshrl.u32 %v770, 7
        %v772 = vsub.s32 %v769, %v771
        %v773 = vrot.slane %v759, %v772
        %v774 = vcombine.high %v766, %v766
        %v775 = vcombine.high %v773, %v773
        %v777 = vunpack.c.l.s4 1983009808
        %v778 = vunpack.c.0.s8 %v777
        %v779 = vlaneseq
        %v780 = vshrl.u32 %v779, 7
        %v781 = vsub.s32 %v778, %v780
        %v782 = vrot.slane %v256, %v781
        %v783 = vcombine.high %v257, %v257
        %v785 = vunpack.c.l.s4 1983009808
        %v786 = vunpack.c.0.s8 %v785
        %v787 = vlaneseq
        %v788 = vshrl.u32 %v787, 7
        %v789 = vsub.s32 %v786, %v788
        %v790 = vrot.slane %v257, %v789
        %v792 = vunpack.c.l.s4 1983009808
        %v793 = vunpack.c.0.s8 %v792
        %v794 = vlaneseq
        %v795 = vshrl.u32 %v794, 7
        %v796 = vsub.s32 %v793, %v795
        %v797 = vrot.slane %v783, %v796
        %v798 = vcombine.high %v790, %v790
        %v799 = vcombine.high %v797, %v797
        %v800 = vcombine.high %v258, %v258
        %v802 = vunpack.c.l.s4 1983009808
        %v803 = vunpack.c.0.s8 %v802
        %v804 = vlaneseq
        %v805 = vshrl.u32 %v804, 7
        %v806 = vsub.s32 %v803, %v805
        %v807 = vrot.slane %v258, %v806
        %v809 = vunpack.c.l.s4 1983009808
        %v810 = vunpack.c.0.s8 %v809
        %v811 = vlaneseq
        %v812 = vshrl.u32 %v811, 7
        %v813 = vsub.s32 %v810, %v812
        %v814 = vrot.slane %v800, %v813
        %v815 = vcombine.high %v807, %v807
        %v816 = vcombine.high %v814, %v814
        %v818 = vunpack.c.l.s4 1983009808
        %v819 = vunpack.c.0.s8 %v818
        %v820 = vlaneseq
        %v821 = vshrl.u32 %v820, 7
        %v822 = vsub.s32 %v819, %v821
        %v823 = vrot.slane %v259, %v822
        %v824 = vcombine.high %v260, %v260
        %v826 = vunpack.c.l.s4 1983009808
        %v827 = vunpack.c.0.s8 %v826
        %v828 = vlaneseq
        %v829 = vshrl.u32 %v828, 7
        %v830 = vsub.s32 %v827, %v829
        %v831 = vrot.slane %v260, %v830
        %v833 = vunpack.c.l.s4 1983009808
        %v834 = vunpack.c.0.s8 %v833
        %v835 = vlaneseq
        %v836 = vshrl.u32 %v835, 7
        %v837 = vsub.s32 %v834, %v836
        %v838 = vrot.slane %v824, %v837
        %v839 = vcombine.high %v831, %v831
        %v840 = vcombine.high %v838, %v838
        %v841 = vcombine.high %v261, %v261
        %v843 = vunpack.c.l.s4 1983009808
        %v844 = vunpack.c.0.s8 %v843
        %v845 = vlaneseq
        %v846 = vshrl.u32 %v845, 7
        %v847 = vsub.s32 %v844, %v846
        %v848 = vrot.slane %v261, %v847
        %v850 = vunpack.c.l.s4 1983009808
        %v851 = vunpack.c.0.s8 %v850
        %v852 = vlaneseq
        %v853 = vshrl.u32 %v852, 7
        %v854 = vsub.s32 %v851, %v853
        %v855 = vrot.slane %v841, %v854
        %v856 = vcombine.high %v848, %v848
        %v857 = vcombine.high %v855, %v855
        %v859 = vunpack.c.l.s4 1983009808
        %v860 = vunpack.c.0.s8 %v859
        %v861 = vlaneseq
        %v862 = vshrl.u32 %v861, 7
        %v863 = vsub.s32 %v860, %v862
        %v864 = vrot.slane %v262, %v863
        %v865 = vcombine.high %v263, %v263
        %v867 = vunpack.c.l.s4 1983009808
        %v868 = vunpack.c.0.s8 %v867
        %v869 = vlaneseq
        %v870 = vshrl.u32 %v869, 7
        %v871 = vsub.s32 %v868, %v870
        %v872 = vrot.slane %v263, %v871
        %v874 = vunpack.c.l.s4 1983009808
        %v875 = vunpack.c.0.s8 %v874
        %v876 = vlaneseq
        %v877 = vshrl.u32 %v876, 7
        %v878 = vsub.s32 %v875, %v877
        %v879 = vrot.slane %v865, %v878
        %v880 = vcombine.high %v872, %v872
        %v881 = vcombine.high %v879, %v879
        %v882 = vcombine.high %v264, %v264
        %v884 = vunpack.c.l.s4 1983009808
        %v885 = vunpack.c.0.s8 %v884
        %v886 = vlaneseq
        %v887 = vshrl.u32 %v886, 7
        %v888 = vsub.s32 %v885, %v887
        %v889 = vrot.slane %v264, %v888
        %v891 = vunpack.c.l.s4 1983009808
        %v892 = vunpack.c.0.s8 %v891
        %v893 = vlaneseq
        %v894 = vshrl.u32 %v893, 7
        %v895 = vsub.s32 %v892, %v894
        %v896 = vrot.slane %v882, %v895
        %v897 = vcombine.high %v889, %v889
        %v898 = vcombine.high %v896, %v896
        %v900 = vunpack.c.l.s4 1983009808
        %v901 = vunpack.c.0.s8 %v900
        %v902 = vlaneseq
        %v903 = vshrl.u32 %v902, 7
        %v904 = vsub.s32 %v901, %v903
        %v905 = vrot.slane %v265, %v904
        %v906 = vcombine.high %v266, %v266
        %v908 = vunpack.c.l.s4 1983009808
        %v909 = vunpack.c.0.s8 %v908
        %v910 = vlaneseq
        %v911 = vshrl.u32 %v910, 7
        %v912 = vsub.s32 %v909, %v911
        %v913 = vrot.slane %v266, %v912
        %v915 = vunpack.c.l.s4 1983009808
        %v916 = vunpack.c.0.s8 %v915
        %v917 = vlaneseq
        %v918 = vshrl.u32 %v917, 7
        %v919 = vsub.s32 %v916, %v918
        %v920 = vrot.slane %v906, %v919
        %v921 = vcombine.high %v913, %v913
        %v922 = vcombine.high %v920, %v920
        %v923 = vcombine.high %v267, %v267
        %v925 = vunpack.c.l.s4 1983009808
        %v926 = vunpack.c.0.s8 %v925
        %v927 = vlaneseq
        %v928 = vshrl.u32 %v927, 7
        %v929 = vsub.s32 %v926, %v928
        %v930 = vrot.slane %v267, %v929
        %v932 = vunpack.c.l.s4 1983009808
        %v933 = vunpack.c.0.s8 %v932
        %v934 = vlaneseq
        %v935 = vshrl.u32 %v934, 7
        %v936 = vsub.s32 %v933, %v935
        %v937 = vrot.slane %v923, %v936
        %v938 = vcombine.high %v930, %v930
        %v939 = vcombine.high %v937, %v937
        %v941 = vunpack.c.l.s4 1983009808
        %v942 = vunpack.c.0.s8 %v941
        %v943 = vlaneseq
        %v944 = vshrl.u32 %v943, 7
        %v945 = vsub.s32 %v942, %v944
        %v946 = vrot.slane %v268, %v945
        %v947 = vcombine.high %v269, %v269
        %v949 = vunpack.c.l.s4 1983009808
        %v950 = vunpack.c.0.s8 %v949
        %v951 = vlaneseq
        %v952 = vshrl.u32 %v951, 7
        %v953 = vsub.s32 %v950, %v952
        %v954 = vrot.slane %v269, %v953
        %v956 = vunpack.c.l.s4 1983009808
        %v957 = vunpack.c.0.s8 %v956
        %v958 = vlaneseq
        %v959 = vshrl.u32 %v958, 7
        %v960 = vsub.s32 %v957, %v959
        %v961 = vrot.slane %v947, %v960
        %v962 = vcombine.high %v954, %v954
        %v963 = vcombine.high %v961, %v961
        %v964 = vcombine.high %v270, %v270
        %v966 = vunpack.c.l.s4 1983009808
        %v967 = vunpack.c.0.s8 %v966
        %v968 = vlaneseq
        %v969 = vshrl.u32 %v968, 7
        %v970 = vsub.s32 %v967, %v969
        %v971 = vrot.slane %v270, %v970
        %v973 = vunpack.c.l.s4 1983009808
        %v974 = vunpack.c.0.s8 %v973
        %v975 = vlaneseq
        %v976 = vshrl.u32 %v975, 7
        %v977 = vsub.s32 %v974, %v976
        %v978 = vrot.slane %v964, %v977
        %v979 = vcombine.high %v971, %v971
        %v980 = vcombine.high %v978, %v978
        %v982 = vunpack.c.l.s4 1983009808
        %v983 = vunpack.c.0.s8 %v982
        %v984 = vlaneseq
        %v985 = vshrl.u32 %v984, 7
        %v986 = vsub.s32 %v983, %v985
        %v987 = vrot.slane %v271, %v986
        %v988 = vcombine.high %v272, %v272
        %v990 = vunpack.c.l.s4 1983009808
        %v991 = vunpack.c.0.s8 %v990
        %v992 = vlaneseq
        %v993 = vshrl.u32 %v992, 7
        %v994 = vsub.s32 %v991, %v993
        %v995 = vrot.slane %v272, %v994
        %v997 = vunpack.c.l.s4 1983009808
        %v998 = vunpack.c.0.s8 %v997
        %v999 = vlaneseq
        %v1000 = vshrl.u32 %v999, 7
        %v1001 = vsub.s32 %v998, %v1000
        %v1002 = vrot.slane %v988, %v1001
        %v1003 = vcombine.high %v995, %v995
        %v1004 = vcombine.high %v1002, %v1002
        %v1005 = vcombine.high %v273, %v273
        %v1007 = vunpack.c.l.s4 1983009808
        %v1008 = vunpack.c.0.s8 %v1007
        %v1009 = vlaneseq
        %v1010 = vshrl.u32 %v1009, 7
        %v1011 = vsub.s32 %v1008, %v1010
        %v1012 = vrot.slane %v273, %v1011
        %v1014 = vunpack.c.l.s4 1983009808
        %v1015 = vunpack.c.0.s8 %v1014
        %v1016 = vlaneseq
        %v1017 = vshrl.u32 %v1016, 7
        %v1018 = vsub.s32 %v1015, %v1017
        %v1019 = vrot.slane %v1005, %v1018
        %v1020 = vcombine.high %v1012, %v1012
        %v1021 = vcombine.high %v1019, %v1019
        %v1023 = vunpack.c.l.s4 1983009808
        %v1024 = vunpack.c.0.s8 %v1023
        %v1025 = vlaneseq
        %v1026 = vshrl.u32 %v1025, 7
        %v1027 = vsub.s32 %v1024, %v1026
        %v1028 = vrot.slane %v274, %v1027
        %v1029 = vcombine.high %v275, %v275
        %v1031 = vunpack.c.l.s4 1983009808
        %v1032 = vunpack.c.0.s8 %v1031
        %v1033 = vlaneseq
        %v1034 = vshrl.u32 %v1033, 7
        %v1035 = vsub.s32 %v1032, %v1034
        %v1036 = vrot.slane %v275, %v1035
        %v1038 = vunpack.c.l.s4 1983009808
        %v1039 = vunpack.c.0.s8 %v1038
        %v1040 = vlaneseq
        %v1041 = vshrl.u32 %v1040, 7
        %v1042 = vsub.s32 %v1039, %v1041
        %v1043 = vrot.slane %v1029, %v1042
        %v1044 = vcombine.high %v1036, %v1036
        %v1045 = vcombine.high %v1043, %v1043
        %v1046 = vcombine.high %v276, %v276
        %v1048 = vunpack.c.l.s4 1983009808
        %v1049 = vunpack.c.0.s8 %v1048
        %v1050 = vlaneseq
        %v1051 = vshrl.u32 %v1050, 7
        %v1052 = vsub.s32 %v1049, %v1051
        %v1053 = vrot.slane %v276, %v1052
        %v1055 = vunpack.c.l.s4 1983009808
        %v1056 = vunpack.c.0.s8 %v1055
        %v1057 = vlaneseq
        %v1058 = vshrl.u32 %v1057, 7
        %v1059 = vsub.s32 %v1056, %v1058
        %v1060 = vrot.slane %v1046, %v1059
        %v1061 = vcombine.high %v1053, %v1053
        %v1062 = vcombine.high %v1060, %v1060
        %v1064 = vunpack.c.l.s4 1983009808
        %v1065 = vunpack.c.0.s8 %v1064
        %v1066 = vlaneseq
        %v1067 = vshrl.u32 %v1066, 7
        %v1068 = vsub.s32 %v1065, %v1067
        %v1069 = vrot.slane %v277, %v1068
        %v1070 = vcombine.low %v339, %v347
        %v1071 = vcombine.low %v346, %v348
        %v1073 = vunpack.c.l.s4 1983009808
        %v1074 = vunpack.c.0.s8 %v1073
        %v1075 = vlaneseq
        %v1076 = vshrl.u32 %v1075, 7
        %v1077 = vsub.s32 %v1074, %v1076
        %v1078 = vrot.slane %v1070, %v1077
        %v1080 = vunpack.c.l.s4 1983009808
        %v1081 = vunpack.c.0.s8 %v1080
        %v1082 = vlaneseq
        %v1083 = vshrl.u32 %v1082, 7
        %v1084 = vsub.s32 %v1081, %v1083
        %v1085 = vrot.slane %v1071, %v1084
        %v1086 = vcombine.low %v1078, %v1085
        %v1087 = vcombine.low %v356, %v364
        %v1088 = vcombine.low %v363, %v365
        %v1090 = vunpack.c.l.s4 1983009808
        %v1091 = vunpack.c.0.s8 %v1090
        %v1092 = vlaneseq
        %v1093 = vshrl.u32 %v1092, 7
        %v1094 = vsub.s32 %v1091, %v1093
        %v1095 = vrot.slane %v1087, %v1094
        %v1097 = vunpack.c.l.s4 1983009808
        %v1098 = vunpack.c.0.s8 %v1097
        %v1099 = vlaneseq
        %v1100 = vshrl.u32 %v1099, 7
        %v1101 = vsub.s32 %v1098, %v1100
        %v1102 = vrot.slane %v1088, %v1101
        %v1103 = vcombine.low %v1095, %v1102
        %v1104 = vcombine.low %v372, %v380
        %v1105 = vcombine.low %v388, %v387
        %v1107 = vunpack.c.l.s4 1983009808
        %v1108 = vunpack.c.0.s8 %v1107
        %v1109 = vlaneseq
        %v1110 = vshrl.u32 %v1109, 7
        %v1111 = vsub.s32 %v1108, %v1110
        %v1112 = vrot.slane %v1104, %v1111
        %v1114 = vunpack.c.l.s4 1983009808
        %v1115 = vunpack.c.0.s8 %v1114
        %v1116 = vlaneseq
        %v1117 = vshrl.u32 %v1116, 7
        %v1118 = vsub.s32 %v1115, %v1117
        %v1119 = vrot.slane %v1105, %v1118
        %v1120 = vcombine.low %v1112, %v1119
        %v1121 = vcombine.low %v389, %v397
        %v1122 = vcombine.low %v405, %v404
        %v1124 = vunpack.c.l.s4 1983009808
        %v1125 = vunpack.c.0.s8 %v1124
        %v1126 = vlaneseq
        %v1127 = vshrl.u32 %v1126, 7
        %v1128 = vsub.s32 %v1125, %v1127
        %v1129 = vrot.slane %v1121, %v1128
        %v1131 = vunpack.c.l.s4 1983009808
        %v1132 = vunpack.c.0.s8 %v1131
        %v1133 = vlaneseq
        %v1134 = vshrl.u32 %v1133, 7
        %v1135 = vsub.s32 %v1132, %v1134
        %v1136 = vrot.slane %v1122, %v1135
        %v1137 = vcombine.low %v1129, %v1136
        %v1138 = vcombine.low %v406, %v413
        %v1139 = vcombine.low %v421, %v429
        %v1141 = vunpack.c.l.s4 1983009808
        %v1142 = vunpack.c.0.s8 %v1141
        %v1143 = vlaneseq
        %v1144 = vshrl.u32 %v1143, 7
        %v1145 = vsub.s32 %v1142, %v1144
        %v1146 = vrot.slane %v1138, %v1145
        %v1148 = vunpack.c.l.s4 1983009808
        %v1149 = vunpack.c.0.s8 %v1148
        %v1150 = vlaneseq
        %v1151 = vshrl.u32 %v1150, 7
        %v1152 = vsub.s32 %v1149, %v1151
        %v1153 = vrot.slane %v1139, %v1152
        %v1154 = vcombine.low %v1146, %v1153
        %v1155 = vcombine.low %v428, %v430
        %v1156 = vcombine.low %v438, %v446
        %v1158 = vunpack.c.l.s4 1983009808
        %v1159 = vunpack.c.0.s8 %v1158
        %v1160 = vlaneseq
        %v1161 = vshrl.u32 %v1160, 7
        %v1162 = vsub.s32 %v1159, %v1161
        %v1163 = vrot.slane %v1155, %v1162
        %v1165 = vunpack.c.l.s4 1983009808
        %v1166 = vunpack.c.0.s8 %v1165
        %v1167 = vlaneseq
        %v1168 = vshrl.u32 %v1167, 7
        %v1169 = vsub.s32 %v1166, %v1168
        %v1170 = vrot.slane %v1156, %v1169
        %v1171 = vcombine.low %v1163, %v1170
        %v1172 = vcombine.low %v445, %v447
        %v1173 = vcombine.low %v454, %v462
        %v1175 = vunpack.c.l.s4 1983009808
        %v1176 = vunpack.c.0.s8 %v1175
        %v1177 = vlaneseq
        %v1178 = vshrl.u32 %v1177, 7
        %v1179 = vsub.s32 %v1176, %v1178
        %v1180 = vrot.slane %v1172, %v1179
        %v1182 = vunpack.c.l.s4 1983009808
        %v1183 = vunpack.c.0.s8 %v1182
        %v1184 = vlaneseq
        %v1185 = vshrl.u32 %v1184, 7
        %v1186 = vsub.s32 %v1183, %v1185
        %v1187 = vrot.slane %v1173, %v1186
        %v1188 = vcombine.low %v1180, %v1187
        %v1189 = vcombine.low %v470, %v469
        %v1190 = vcombine.low %v471, %v479
        %v1192 = vunpack.c.l.s4 1983009808
        %v1193 = vunpack.c.0.s8 %v1192
        %v1194 = vlaneseq
        %v1195 = vshrl.u32 %v1194, 7
        %v1196 = vsub.s32 %v1193, %v1195
        %v1197 = vrot.slane %v1189, %v1196
        %v1199 = vunpack.c.l.s4 1983009808
        %v1200 = vunpack.c.0.s8 %v1199
        %v1201 = vlaneseq
        %v1202 = vshrl.u32 %v1201, 7
        %v1203 = vsub.s32 %v1200, %v1202
        %v1204 = vrot.slane %v1190, %v1203
        %v1205 = vcombine.low %v1197, %v1204
        %v1206 = vcombine.low %v487, %v486
        %v1207 = vcombine.low %v488, %v495
        %v1209 = vunpack.c.l.s4 1983009808
        %v1210 = vunpack.c.0.s8 %v1209
        %v1211 = vlaneseq
        %v1212 = vshrl.u32 %v1211, 7
        %v1213 = vsub.s32 %v1210, %v1212
        %v1214 = vrot.slane %v1206, %v1213
        %v1216 = vunpack.c.l.s4 1983009808
        %v1217 = vunpack.c.0.s8 %v1216
        %v1218 = vlaneseq
        %v1219 = vshrl.u32 %v1218, 7
        %v1220 = vsub.s32 %v1217, %v1219
        %v1221 = vrot.slane %v1207, %v1220
        %v1222 = vcombine.low %v1214, %v1221
        %v1223 = vcombine.low %v503, %v511
        %v1224 = vcombine.low %v510, %v512
        %v1226 = vunpack.c.l.s4 1983009808
        %v1227 = vunpack.c.0.s8 %v1226
        %v1228 = vlaneseq
        %v1229 = vshrl.u32 %v1228, 7
        %v1230 = vsub.s32 %v1227, %v1229
        %v1231 = vrot.slane %v1223, %v1230
        %v1233 = vunpack.c.l.s4 1983009808
        %v1234 = vunpack.c.0.s8 %v1233
        %v1235 = vlaneseq
        %v1236 = vshrl.u32 %v1235, 7
        %v1237 = vsub.s32 %v1234, %v1236
        %v1238 = vrot.slane %v1224, %v1237
        %v1239 = vcombine.low %v1231, %v1238
        %v1240 = vcombine.low %v520, %v528
        %v1241 = vcombine.low %v527, %v529
        %v1243 = vunpack.c.l.s4 1983009808
        %v1244 = vunpack.c.0.s8 %v1243
        %v1245 = vlaneseq
        %v1246 = vshrl.u32 %v1245, 7
        %v1247 = vsub.s32 %v1244, %v1246
        %v1248 = vrot.slane %v1240, %v1247
        %v1250 = vunpack.c.l.s4 1983009808
        %v1251 = vunpack.c.0.s8 %v1250
        %v1252 = vlaneseq
        %v1253 = vshrl.u32 %v1252, 7
        %v1254 = vsub.s32 %v1251, %v1253
        %v1255 = vrot.slane %v1241, %v1254
        %v1256 = vcombine.low %v1248, %v1255
        %v1257 = vcombine.low %v536, %v544
        %v1258 = vcombine.low %v552, %v551
        %v1260 = vunpack.c.l.s4 1983009808
        %v1261 = vunpack.c.0.s8 %v1260
        %v1262 = vlaneseq
        %v1263 = vshrl.u32 %v1262, 7
        %v1264 = vsub.s32 %v1261, %v1263
        %v1265 = vrot.slane %v1257, %v1264
        %v1267 = vunpack.c.l.s4 1983009808
        %v1268 = vunpack.c.0.s8 %v1267
        %v1269 = vlaneseq
        %v1270 = vshrl.u32 %v1269, 7
        %v1271 = vsub.s32 %v1268, %v1270
        %v1272 = vrot.slane %v1258, %v1271
        %v1273 = vcombine.low %v1265, %v1272
        %v1274 = vcombine.low %v553, %v561
        %v1275 = vcombine.low %v569, %v568
        %v1277 = vunpack.c.l.s4 1983009808
        %v1278 = vunpack.c.0.s8 %v1277
        %v1279 = vlaneseq
        %v1280 = vshrl.u32 %v1279, 7
        %v1281 = vsub.s32 %v1278, %v1280
        %v1282 = vrot.slane %v1274, %v1281
        %v1284 = vunpack.c.l.s4 1983009808
        %v1285 = vunpack.c.0.s8 %v1284
        %v1286 = vlaneseq
        %v1287 = vshrl.u32 %v1286, 7
        %v1288 = vsub.s32 %v1285, %v1287
        %v1289 = vrot.slane %v1275, %v1288
        %v1290 = vcombine.low %v1282, %v1289
        %v1291 = vcombine.low %v570, %v577
        %v1292 = vcombine.low %v585, %v593
        %v1294 = vunpack.c.l.s4 1983009808
        %v1295 = vunpack.c.0.s8 %v1294
        %v1296 = vlaneseq
        %v1297 = vshrl.u32 %v1296, 7
        %v1298 = vsub.s32 %v1295, %v1297
        %v1299 = vrot.slane %v1291, %v1298
        %v1301 = vunpack.c.l.s4 1983009808
        %v1302 = vunpack.c.0.s8 %v1301
        %v1303 = vlaneseq
        %v1304 = vshrl.u32 %v1303, 7
        %v1305 = vsub.s32 %v1302, %v1304
        %v1306 = vrot.slane %v1292, %v1305
        %v1307 = vcombine.low %v1299, %v1306
        %v1308 = vcombine.low %v592, %v594
        %v1309 = vcombine.low %v602, %v610
        %v1311 = vunpack.c.l.s4 1983009808
        %v1312 = vunpack.c.0.s8 %v1311
        %v1313 = vlaneseq
        %v1314 = vshrl.u32 %v1313, 7
        %v1315 = vsub.s32 %v1312, %v1314
        %v1316 = vrot.slane %v1308, %v1315
        %v1318 = vunpack.c.l.s4 1983009808
        %v1319 = vunpack.c.0.s8 %v1318
        %v1320 = vlaneseq
        %v1321 = vshrl.u32 %v1320, 7
        %v1322 = vsub.s32 %v1319, %v1321
        %v1323 = vrot.slane %v1309, %v1322
        %v1324 = vcombine.low %v1316, %v1323
        %v1325 = vcombine.low %v609, %v611
        %v1326 = vcombine.low %v618, %v626
        %v1328 = vunpack.c.l.s4 1983009808
        %v1329 = vunpack.c.0.s8 %v1328
        %v1330 = vlaneseq
        %v1331 = vshrl.u32 %v1330, 7
        %v1332 = vsub.s32 %v1329, %v1331
        %v1333 = vrot.slane %v1325, %v1332
        %v1335 = vunpack.c.l.s4 1983009808
        %v1336 = vunpack.c.0.s8 %v1335
        %v1337 = vlaneseq
        %v1338 = vshrl.u32 %v1337, 7
        %v1339 = vsub.s32 %v1336, %v1338
        %v1340 = vrot.slane %v1326, %v1339
        %v1341 = vcombine.low %v1333, %v1340
        %v1342 = vcombine.low %v634, %v633
        %v1343 = vcombine.low %v635, %v643
        %v1345 = vunpack.c.l.s4 1983009808
        %v1346 = vunpack.c.0.s8 %v1345
        %v1347 = vlaneseq
        %v1348 = vshrl.u32 %v1347, 7
        %v1349 = vsub.s32 %v1346, %v1348
        %v1350 = vrot.slane %v1342, %v1349
        %v1352 = vunpack.c.l.s4 1983009808
        %v1353 = vunpack.c.0.s8 %v1352
        %v1354 = vlaneseq
        %v1355 = vshrl.u32 %v1354, 7
        %v1356 = vsub.s32 %v1353, %v1355
        %v1357 = vrot.slane %v1343, %v1356
        %v1358 = vcombine.low %v1350, %v1357
        %v1359 = vcombine.low %v651, %v650
        %v1360 = vcombine.low %v652, %v659
        %v1362 = vunpack.c.l.s4 1983009808
        %v1363 = vunpack.c.0.s8 %v1362
        %v1364 = vlaneseq
        %v1365 = vshrl.u32 %v1364, 7
        %v1366 = vsub.s32 %v1363, %v1365
        %v1367 = vrot.slane %v1359, %v1366
        %v1369 = vunpack.c.l.s4 1983009808
        %v1370 = vunpack.c.0.s8 %v1369
        %v1371 = vlaneseq
        %v1372 = vshrl.u32 %v1371, 7
        %v1373 = vsub.s32 %v1370, %v1372
        %v1374 = vrot.slane %v1360, %v1373
        %v1375 = vcombine.low %v1367, %v1374
        %v1376 = vcombine.low %v667, %v675
        %v1377 = vcombine.low %v674, %v676
        %v1379 = vunpack.c.l.s4 1983009808
        %v1380 = vunpack.c.0.s8 %v1379
        %v1381 = vlaneseq
        %v1382 = vshrl.u32 %v1381, 7
        %v1383 = vsub.s32 %v1380, %v1382
        %v1384 = vrot.slane %v1376, %v1383
        %v1386 = vunpack.c.l.s4 1983009808
        %v1387 = vunpack.c.0.s8 %v1386
        %v1388 = vlaneseq
        %v1389 = vshrl.u32 %v1388, 7
        %v1390 = vsub.s32 %v1387, %v1389
        %v1391 = vrot.slane %v1377, %v1390
        %v1392 = vcombine.low %v1384, %v1391
        %v1393 = vcombine.low %v684, %v692
        %v1394 = vcombine.low %v691, %v693
        %v1396 = vunpack.c.l.s4 1983009808
        %v1397 = vunpack.c.0.s8 %v1396
        %v1398 = vlaneseq
        %v1399 = vshrl.u32 %v1398, 7
        %v1400 = vsub.s32 %v1397, %v1399
        %v1401 = vrot.slane %v1393, %v1400
        %v1403 = vunpack.c.l.s4 1983009808
        %v1404 = vunpack.c.0.s8 %v1403
        %v1405 = vlaneseq
        %v1406 = vshrl.u32 %v1405, 7
        %v1407 = vsub.s32 %v1404, %v1406
        %v1408 = vrot.slane %v1394, %v1407
        %v1409 = vcombine.low %v1401, %v1408
        %v1410 = vcombine.low %v700, %v708
        %v1411 = vcombine.low %v716, %v715
        %v1413 = vunpack.c.l.s4 1983009808
        %v1414 = vunpack.c.0.s8 %v1413
        %v1415 = vlaneseq
        %v1416 = vshrl.u32 %v1415, 7
        %v1417 = vsub.s32 %v1414, %v1416
        %v1418 = vrot.slane %v1410, %v1417
        %v1420 = vunpack.c.l.s4 1983009808
        %v1421 = vunpack.c.0.s8 %v1420
        %v1422 = vlaneseq
        %v1423 = vshrl.u32 %v1422, 7
        %v1424 = vsub.s32 %v1421, %v1423
        %v1425 = vrot.slane %v1411, %v1424
        %v1426 = vcombine.low %v1418, %v1425
        %v1427 = vcombine.low %v717, %v725
        %v1428 = vcombine.low %v733, %v732
        %v1430 = vunpack.c.l.s4 1983009808
        %v1431 = vunpack.c.0.s8 %v1430
        %v1432 = vlaneseq
        %v1433 = vshrl.u32 %v1432, 7
        %v1434 = vsub.s32 %v1431, %v1433
        %v1435 = vrot.slane %v1427, %v1434
        %v1437 = vunpack.c.l.s4 1983009808
        %v1438 = vunpack.c.0.s8 %v1437
        %v1439 = vlaneseq
        %v1440 = vshrl.u32 %v1439, 7
        %v1441 = vsub.s32 %v1438, %v1440
        %v1442 = vrot.slane %v1428, %v1441
        %v1443 = vcombine.low %v1435, %v1442
        %v1444 = vcombine.low %v734, %v741
        %v1445 = vcombine.low %v749, %v757
        %v1447 = vunpack.c.l.s4 1983009808
        %v1448 = vunpack.c.0.s8 %v1447
        %v1449 = vlaneseq
        %v1450 = vshrl.u32 %v1449, 7
        %v1451 = vsub.s32 %v1448, %v1450
        %v1452 = vrot.slane %v1444, %v1451
        %v1454 = vunpack.c.l.s4 1983009808
        %v1455 = vunpack.c.0.s8 %v1454
        %v1456 = vlaneseq
        %v1457 = vshrl.u32 %v1456, 7
        %v1458 = vsub.s32 %v1455, %v1457
        %v1459 = vrot.slane %v1445, %v1458
        %v1460 = vcombine.low %v1452, %v1459
        %v1461 = vcombine.low %v756, %v758
        %v1462 = vcombine.low %v766, %v774
        %v1464 = vunpack.c.l.s4 1983009808
        %v1465 = vunpack.c.0.s8 %v1464
        %v1466 = vlaneseq
        %v1467 = vshrl.u32 %v1466, 7
        %v1468 = vsub.s32 %v1465, %v1467
        %v1469 = vrot.slane %v1461, %v1468
        %v1471 = vunpack.c.l.s4 1983009808
        %v1472 = vunpack.c.0.s8 %v1471
        %v1473 = vlaneseq
        %v1474 = vshrl.u32 %v1473, 7
        %v1475 = vsub.s32 %v1472, %v1474
        %v1476 = vrot.slane %v1462, %v1475
        %v1477 = vcombine.low %v1469, %v1476
        %v1478 = vcombine.low %v773, %v775
        %v1479 = vcombine.low %v782, %v790
        %v1481 = vunpack.c.l.s4 1983009808
        %v1482 = vunpack.c.0.s8 %v1481
        %v1483 = vlaneseq
        %v1484 = vshrl.u32 %v1483, 7
        %v1485 = vsub.s32 %v1482, %v1484
        %v1486 = vrot.slane %v1478, %v1485
        %v1488 = vunpack.c.l.s4 1983009808
        %v1489 = vunpack.c.0.s8 %v1488
        %v1490 = vlaneseq
        %v1491 = vshrl.u32 %v1490, 7
        %v1492 = vsub.s32 %v1489, %v1491
        %v1493 = vrot.slane %v1479, %v1492
        %v1494 = vcombine.low %v1486, %v1493
        %v1495 = vcombine.low %v798, %v797
        %v1496 = vcombine.low %v799, %v807
        %v1498 = vunpack.c.l.s4 1983009808
        %v1499 = vunpack.c.0.s8 %v1498
        %v1500 = vlaneseq
        %v1501 = vshrl.u32 %v1500, 7
        %v1502 = vsub.s32 %v1499, %v1501
        %v1503 = vrot.slane %v1495, %v1502
        %v1505 = vunpack.c.l.s4 1983009808
        %v1506 = vunpack.c.0.s8 %v1505
        %v1507 = vlaneseq
        %v1508 = vshrl.u32 %v1507, 7
        %v1509 = vsub.s32 %v1506, %v1508
        %v1510 = vrot.slane %v1496, %v1509
        %v1511 = vcombine.low %v1503, %v1510
        %v1512 = vcombine.low %v815, %v814
        %v1513 = vcombine.low %v816, %v823
        %v1515 = vunpack.c.l.s4 1983009808
        %v1516 = vunpack.c.0.s8 %v1515
        %v1517 = vlaneseq
        %v1518 = vshrl.u32 %v1517, 7
        %v1519 = vsub.s32 %v1516, %v1518
        %v1520 = vrot.slane %v1512, %v1519
        %v1522 = vunpack.c.l.s4 1983009808
        %v1523 = vunpack.c.0.s8 %v1522
        %v1524 = vlaneseq
        %v1525 = vshrl.u32 %v1524, 7
        %v1526 = vsub.s32 %v1523, %v1525
        %v1527 = vrot.slane %v1513, %v1526
        %v1528 = vcombine.low %v1520, %v1527
        %v1529 = vcombine.low %v831, %v839
        %v1530 = vcombine.low %v838, %v840
        %v1532 = vunpack.c.l.s4 1983009808
        %v1533 = vunpack.c.0.s8 %v1532
        %v1534 = vlaneseq
        %v1535 = vshrl.u32 %v1534, 7
        %v1536 = vsub.s32 %v1533, %v1535
        %v1537 = vrot.slane %v1529, %v1536
        %v1539 = vunpack.c.l.s4 1983009808
        %v1540 = vunpack.c.0.s8 %v1539
        %v1541 = vlaneseq
        %v1542 = vshrl.u32 %v1541, 7
        %v1543 = vsub.s32 %v1540, %v1542
        %v1544 = vrot.slane %v1530, %v1543
        %v1545 = vcombine.low %v1537, %v1544
        %v1546 = vcombine.low %v848, %v856
        %v1547 = vcombine.low %v855, %v857
        %v1549 = vunpack.c.l.s4 1983009808
        %v1550 = vunpack.c.0.s8 %v1549
        %v1551 = vlaneseq
        %v1552 = vshrl.u32 %v1551, 7
        %v1553 = vsub.s32 %v1550, %v1552
        %v1554 = vrot.slane %v1546, %v1553
        %v1556 = vunpack.c.l.s4 1983009808
        %v1557 = vunpack.c.0.s8 %v1556
        %v1558 = vlaneseq
        %v1559 = vshrl.u32 %v1558, 7
        %v1560 = vsub.s32 %v1557, %v1559
        %v1561 = vrot.slane %v1547, %v1560
        %v1562 = vcombine.low %v1554, %v1561
        %v1563 = vcombine.low %v864, %v872
        %v1564 = vcombine.low %v880, %v879
        %v1566 = vunpack.c.l.s4 1983009808
        %v1567 = vunpack.c.0.s8 %v1566
        %v1568 = vlaneseq
        %v1569 = vshrl.u32 %v1568, 7
        %v1570 = vsub.s32 %v1567, %v1569
        %v1571 = vrot.slane %v1563, %v1570
        %v1573 = vunpack.c.l.s4 1983009808
        %v1574 = vunpack.c.0.s8 %v1573
        %v1575 = vlaneseq
        %v1576 = vshrl.u32 %v1575, 7
        %v1577 = vsub.s32 %v1574, %v1576
        %v1578 = vrot.slane %v1564, %v1577
        %v1579 = vcombine.low %v1571, %v1578
        %v1580 = vcombine.low %v881, %v889
        %v1581 = vcombine.low %v897, %v896
        %v1583 = vunpack.c.l.s4 1983009808
        %v1584 = vunpack.c.0.s8 %v1583
        %v1585 = vlaneseq
        %v1586 = vshrl.u32 %v1585, 7
        %v1587 = vsub.s32 %v1584, %v1586
        %v1588 = vrot.slane %v1580, %v1587
        %v1590 = vunpack.c.l.s4 1983009808
        %v1591 = vunpack.c.0.s8 %v1590
        %v1592 = vlaneseq
        %v1593 = vshrl.u32 %v1592, 7
        %v1594 = vsub.s32 %v1591, %v1593
        %v1595 = vrot.slane %v1581, %v1594
        %v1596 = vcombine.low %v1588, %v1595
        %v1597 = vcombine.low %v898, %v905
        %v1598 = vcombine.low %v913, %v921
        %v1600 = vunpack.c.l.s4 1983009808
        %v1601 = vunpack.c.0.s8 %v1600
        %v1602 = vlaneseq
        %v1603 = vshrl.u32 %v1602, 7
        %v1604 = vsub.s32 %v1601, %v1603
        %v1605 = vrot.slane %v1597, %v1604
        %v1607 = vunpack.c.l.s4 1983009808
        %v1608 = vunpack.c.0.s8 %v1607
        %v1609 = vlaneseq
        %v1610 = vshrl.u32 %v1609, 7
        %v1611 = vsub.s32 %v1608, %v1610
        %v1612 = vrot.slane %v1598, %v1611
        %v1613 = vcombine.low %v1605, %v1612
        %v1614 = vcombine.low %v920, %v922
        %v1615 = vcombine.low %v930, %v938
        %v1617 = vunpack.c.l.s4 1983009808
        %v1618 = vunpack.c.0.s8 %v1617
        %v1619 = vlaneseq
        %v1620 = vshrl.u32 %v1619, 7
        %v1621 = vsub.s32 %v1618, %v1620
        %v1622 = vrot.slane %v1614, %v1621
        %v1624 = vunpack.c.l.s4 1983009808
        %v1625 = vunpack.c.0.s8 %v1624
        %v1626 = vlaneseq
        %v1627 = vshrl.u32 %v1626, 7
        %v1628 = vsub.s32 %v1625, %v1627
        %v1629 = vrot.slane %v1615, %v1628
        %v1630 = vcombine.low %v1622, %v1629
        %v1631 = vcombine.low %v937, %v939
        %v1632 = vcombine.low %v946, %v954
        %v1634 = vunpack.c.l.s4 1983009808
        %v1635 = vunpack.c.0.s8 %v1634
        %v1636 = vlaneseq
        %v1637 = vshrl.u32 %v1636, 7
        %v1638 = vsub.s32 %v1635, %v1637
        %v1639 = vrot.slane %v1631, %v1638
        %v1641 = vunpack.c.l.s4 1983009808
        %v1642 = vunpack.c.0.s8 %v1641
        %v1643 = vlaneseq
        %v1644 = vshrl.u32 %v1643, 7
        %v1645 = vsub.s32 %v1642, %v1644
        %v1646 = vrot.slane %v1632, %v1645
        %v1647 = vcombine.low %v1639, %v1646
        %v1648 = vcombine.low %v962, %v961
        %v1649 = vcombine.low %v963, %v971
        %v1651 = vunpack.c.l.s4 1983009808
        %v1652 = vunpack.c.0.s8 %v1651
        %v1653 = vlaneseq
        %v1654 = vshrl.u32 %v1653, 7
        %v1655 = vsub.s32 %v1652, %v1654
        %v1656 = vrot.slane %v1648, %v1655
        %v1658 = vunpack.c.l.s4 1983009808
        %v1659 = vunpack.c.0.s8 %v1658
        %v1660 = vlaneseq
        %v1661 = vshrl.u32 %v1660, 7
        %v1662 = vsub.s32 %v1659, %v1661
        %v1663 = vrot.slane %v1649, %v1662
        %v1664 = vcombine.low %v1656, %v1663
        %v1665 = vcombine.low %v979, %v978
        %v1666 = vcombine.low %v980, %v987
        %v1668 = vunpack.c.l.s4 1983009808
        %v1669 = vunpack.c.0.s8 %v1668
        %v1670 = vlaneseq
        %v1671 = vshrl.u32 %v1670, 7
        %v1672 = vsub.s32 %v1669, %v1671
        %v1673 = vrot.slane %v1665, %v1672
        %v1675 = vunpack.c.l.s4 1983009808
        %v1676 = vunpack.c.0.s8 %v1675
        %v1677 = vlaneseq
        %v1678 = vshrl.u32 %v1677, 7
        %v1679 = vsub.s32 %v1676, %v1678
        %v1680 = vrot.slane %v1666, %v1679
        %v1681 = vcombine.low %v1673, %v1680
        %v1682 = vcombine.low %v995, %v1003
        %v1683 = vcombine.low %v1002, %v1004
        %v1685 = vunpack.c.l.s4 1983009808
        %v1686 = vunpack.c.0.s8 %v1685
        %v1687 = vlaneseq
        %v1688 = vshrl.u32 %v1687, 7
        %v1689 = vsub.s32 %v1686, %v1688
        %v1690 = vrot.slane %v1682, %v1689
        %v1692 = vunpack.c.l.s4 1983009808
        %v1693 = vunpack.c.0.s8 %v1692
        %v1694 = vlaneseq
        %v1695 = vshrl.u32 %v1694, 7
        %v1696 = vsub.s32 %v1693, %v1695
        %v1697 = vrot.slane %v1683, %v1696
        %v1698 = vcombine.low %v1690, %v1697
        %v1699 = vcombine.low %v1012, %v1020
        %v1700 = vcombine.low %v1019, %v1021
        %v1702 = vunpack.c.l.s4 1983009808
        %v1703 = vunpack.c.0.s8 %v1702
        %v1704 = vlaneseq
        %v1705 = vshrl.u32 %v1704, 7
        %v1706 = vsub.s32 %v1703, %v1705
        %v1707 = vrot.slane %v1699, %v1706
        %v1709 = vunpack.c.l.s4 1983009808
        %v1710 = vunpack.c.0.s8 %v1709
        %v1711 = vlaneseq
        %v1712 = vshrl.u32 %v1711, 7
        %v1713 = vsub.s32 %v1710, %v1712
        %v1714 = vrot.slane %v1700, %v1713
        %v1715 = vcombine.low %v1707, %v1714
        %v1716 = vcombine.low %v1028, %v1036
        %v1717 = vcombine.low %v1044, %v1043
        %v1719 = vunpack.c.l.s4 1983009808
        %v1720 = vunpack.c.0.s8 %v1719
        %v1721 = vlaneseq
        %v1722 = vshrl.u32 %v1721, 7
        %v1723 = vsub.s32 %v1720, %v1722
        %v1724 = vrot.slane %v1716, %v1723
        %v1726 = vunpack.c.l.s4 1983009808
        %v1727 = vunpack.c.0.s8 %v1726
        %v1728 = vlaneseq
        %v1729 = vshrl.u32 %v1728, 7
        %v1730 = vsub.s32 %v1727, %v1729
        %v1731 = vrot.slane %v1717, %v1730
        %v1732 = vcombine.low %v1724, %v1731
        %v1733 = vcombine.low %v1045, %v1053
        %v1734 = vcombine.low %v1061, %v1060
        %v1736 = vunpack.c.l.s4 1983009808
        %v1737 = vunpack.c.0.s8 %v1736
        %v1738 = vlaneseq
        %v1739 = vshrl.u32 %v1738, 7
        %v1740 = vsub.s32 %v1737, %v1739
        %v1741 = vrot.slane %v1733, %v1740
        %v1743 = vunpack.c.l.s4 1983009808
        %v1744 = vunpack.c.0.s8 %v1743
        %v1745 = vlaneseq
        %v1746 = vshrl.u32 %v1745, 7
        %v1747 = vsub.s32 %v1744, %v1746
        %v1748 = vrot.slane %v1734, %v1747
        %v1749 = vcombine.low %v1741, %v1748
        %v1750 = vcombine.low %v1062, %v1069
        %v1752 = vunpack.c.l.s4 1983009808
        %v1753 = vunpack.c.0.s8 %v1752
        %v1754 = vlaneseq
        %v1755 = vshrl.u32 %v1754, 7
        %v1756 = vsub.s32 %v1753, %v1755
        %v1757 = vrot.slane %v1750, %v1756
        %v1799 = vpack.c.bf16 %v1103, %v1086
        %v1800 = vpack.c.bf16 %v1137, %v1120
        %v1801 = vpack.c.bf16 %v1171, %v1154
        %v1802 = vpack.c.bf16 %v1205, %v1188
        %v1803 = vpack.c.bf16 %v1239, %v1222
        %v1804 = vpack.c.bf16 %v1273, %v1256
        %v1805 = vpack.c.bf16 %v1307, %v1290
        %v1806 = vpack.c.bf16 %v1341, %v1324
        %v1807 = vpack.c.bf16 %v1375, %v1358
        %v1808 = vpack.c.bf16 %v1409, %v1392
        %v1809 = vpack.c.bf16 %v1443, %v1426
        %v1810 = vpack.c.bf16 %v1477, %v1460
        %v1811 = vpack.c.bf16 %v1511, %v1494
        %v1812 = vpack.c.bf16 %v1545, %v1528
        %v1813 = vpack.c.bf16 %v1579, %v1562
        %v1814 = vpack.c.bf16 %v1613, %v1596
        %v1815 = vpack.c.bf16 %v1647, %v1630
        %v1816 = vpack.c.bf16 %v1681, %v1664
        %v1817 = vpack.c.bf16 %v1715, %v1698
        %v1818 = vpack.c.bf16 %v1749, %v1732
        %v1819 = vpack.c.bf16 %v1757, %v1757
        %v1820 = vld [vmem:[%s1] sm:$0xf]
        %v1821 = vld [vmem:[%s1 + $0x4] sm:$0xf]
        %v1822 = vld [vmem:[%s1 + $0x8] sm:$0xf]
        %v1823 = vld [vmem:[%s1 + $0xc] sm:$0xf]
        %v1824 = vld [vmem:[%s2] sm:$0x1]
        %v1826 = vlaneseq
        %v1827 = vshrl.u32 %v1826, 7
        %v1828 = vsub.s32 0, %v1827
        %v1829 = vrot.slane %v1824, %v1828
        %v1835 = vunpack.c.l.b16 %v1820
        %v1836 = vunpack.c.l.b16 %v1821
        %v1837 = vunpack.c.l.b16 %v1822
        %v1838 = vunpack.c.l.b16 %v1823
        %v1839 = vpack.c.b16 %v1836, %v1835
        %v1840 = vpack.c.b16 %v1838, %v1837
        %vm1843 = vcmask 261120
        %v1845 = vsel %vm1843, %v1799, 0
        %v1848 = vsel %vm1843, %v1800, 0
        %v1851 = vsel %vm1843, %v1801, 0
        %v1854 = vsel %vm1843, %v1802, 0
        %v1857 = vsel %vm1843, %v1803, 0
        %v1860 = vsel %vm1843, %v1804, 0
        %v1863 = vsel %vm1843, %v1805, 0
        %v1866 = vsel %vm1843, %v1806, 0
        %v1869 = vsel %vm1843, %v1807, 0
        %v1872 = vsel %vm1843, %v1808, 0
        %v1875 = vsel %vm1843, %v1809, 0
        %v1878 = vsel %vm1843, %v1810, 0
        %v1881 = vsel %vm1843, %v1811, 0
        %v1884 = vsel %vm1843, %v1812, 0
        %v1887 = vsel %vm1843, %v1813, 0
        %v1890 = vsel %vm1843, %v1814, 0
        %v1893 = vsel %vm1843, %v1815, 0
        %v1896 = vsel %vm1843, %v1816, 0
        %v1899 = vsel %vm1843, %v1817, 0
        %v1902 = vsel %vm1843, %v1818, 0
        %v1905 = vsel %vm1843, %v1819, 0
        %1907 = vmatprep.subr.bf16.mxu0 0
        %1908 = vmatpush1.bf16.msra.mxu0 %v1839
        %1909 = vmatprep.subr.bf16.mxu0 0
        %1910 = vmatpush1.bf16.msra.mxu0 %v1840
        %1911 = vmatprep.subr.bf16.mxu0 0
        %1912 = vmatpush1.bf16.msra.mxu0 0
        %1913 = vmatprep.subr.bf16.mxu0 0
        %1914 = vmatpush1.bf16.msra.mxu0 0
        %1915 = vmatprep.subr.bf16.mxu0 0
        %1916 = vmatpush1.bf16.msra.mxu0 0
        %1917 = vmatprep.subr.bf16.mxu0 0
        %1918 = vmatpush1.bf16.msra.mxu0 0
        %1919 = vmatprep.subr.bf16.mxu0 0
        %1920 = vmatpush1.bf16.msra.mxu0 0
        %1921 = vmatprep.subr.bf16.mxu0 0
        %1922 = vmatpush1.bf16.msra.mxu0 0
        %1923 = vmatprep.subr.bf16.mxu0 0
        %1924 = vmatpush1.bf16.msra.mxu0 0
        %1925 = vmatprep.subr.bf16.mxu0 0
        %1926 = vmatpush1.bf16.msra.mxu0 0
        %1927 = vmatprep.subr.bf16.mxu0 0
        %1928 = vmatpush1.bf16.msra.mxu0 0
        %1929 = vmatprep.subr.bf16.mxu0 0
        %1930 = vmatpush1.bf16.msra.mxu0 0
        %1931 = vmatprep.subr.bf16.mxu0 0
        %1932 = vmatpush1.bf16.msra.mxu0 0
        %1933 = vmatprep.subr.bf16.mxu0 0
        %1934 = vmatpush1.bf16.msra.mxu0 0
        %1935 = vmatprep.subr.bf16.mxu0 0
        %1936 = vmatpush1.bf16.msra.mxu0 0
        %1937 = vmatprep.subr.bf16.mxu0 0
        %1938 = vmatpush1.bf16.msra.mxu0 0
        %1939 = vmatprep.mubr.bf16.mxu0 0
        %1940 = vmatmul.mubr.bf16.gmra.mrb[0].mxu0 %v1845
        %v1941 = vpop.f32.mrb[0].mxu0
        %v1942 = vadd.f32 %v1829, %v1941
        %v1943 = vpop.f32.mrb[0].mxu0
        %v1944 = vpop.f32.mrb[0].mxu0
        %v1945 = vadd.f32 %v1829, %v1944
        %v1946 = vpop.f32.mrb[0].mxu0
        %1947 = vmatprep.mubr.bf16.mxu0 0
        %1948 = vmatmul.mubr.bf16.gmra.mrb[0].mxu0 %v1848
        %v1949 = vpop.f32.mrb[0].mxu0
        %v1950 = vadd.f32 %v1829, %v1949
        %v1951 = vpop.f32.mrb[0].mxu0
        %v1952 = vpop.f32.mrb[0].mxu0
        %v1953 = vadd.f32 %v1829, %v1952
        %v1954 = vpop.f32.mrb[0].mxu0
        %1955 = vmatprep.mubr.bf16.mxu0 0
        %1956 = vmatmul.mubr.bf16.gmra.mrb[0].mxu0 %v1851
        %v1957 = vpop.f32.mrb[0].mxu0
        %v1958 = vadd.f32 %v1829, %v1957
        %v1959 = vpop.f32.mrb[0].mxu0
        %v1960 = vpop.f32.mrb[0].mxu0
        %v1961 = vadd.f32 %v1829, %v1960
        %v1962 = vpop.f32.mrb[0].mxu0
        %1963 = vmatprep.mubr.bf16.mxu0 0
        %1964 = vmatmul.mubr.bf16.gmra.mrb[0].mxu0 %v1854
        %v1965 = vpop.f32.mrb[0].mxu0
        %v1966 = vadd.f32 %v1829, %v1965
        %v1967 = vpop.f32.mrb[0].mxu0
        %v1968 = vpop.f32.mrb[0].mxu0
        %v1969 = vadd.f32 %v1829, %v1968
        %v1970 = vpop.f32.mrb[0].mxu0
        %1971 = vmatprep.mubr.bf16.mxu0 0
        %1972 = vmatmul.mubr.bf16.gmra.mrb[0].mxu0 %v1857
        %v1973 = vpop.f32.mrb[0].mxu0
        %v1974 = vadd.f32 %v1829, %v1973
        %v1975 = vpop.f32.mrb[0].mxu0
        %v1976 = vpop.f32.mrb[0].mxu0
        %v1977 = vadd.f32 %v1829, %v1976
        %v1978 = vpop.f32.mrb[0].mxu0
        %1979 = vmatprep.mubr.bf16.mxu0 0
        %1980 = vmatmul.mubr.bf16.gmra.mrb[0].mxu0 %v1860
        %v1981 = vpop.f32.mrb[0].mxu0
        %v1982 = vadd.f32 %v1829, %v1981
        %v1983 = vpop.f32.mrb[0].mxu0
        %v1984 = vpop.f32.mrb[0].mxu0
        %v1985 = vadd.f32 %v1829, %v1984
        %v1986 = vpop.f32.mrb[0].mxu0
        %1987 = vmatprep.mubr.bf16.mxu0 0
        %1988 = vmatmul.mubr.bf16.gmra.mrb[0].mxu0 %v1863
        %v1989 = vpop.f32.mrb[0].mxu0
        %v1990 = vadd.f32 %v1829, %v1989
        %v1991 = vpop.f32.mrb[0].mxu0
        %v1992 = vpop.f32.mrb[0].mxu0
        %v1993 = vadd.f32 %v1829, %v1992
        %v1994 = vpop.f32.mrb[0].mxu0
        %1995 = vmatprep.mubr.bf16.mxu0 0
        %1996 = vmatmul.mubr.bf16.gmra.mrb[0].mxu0 %v1866
        %v1997 = vpop.f32.mrb[0].mxu0
        %v1998 = vadd.f32 %v1829, %v1997
        %v1999 = vpop.f32.mrb[0].mxu0
        %v2000 = vpop.f32.mrb[0].mxu0
        %v2001 = vadd.f32 %v1829, %v2000
        %v2002 = vpop.f32.mrb[0].mxu0
        %2003 = vmatprep.mubr.bf16.mxu0 0
        %2004 = vmatmul.mubr.bf16.gmra.mrb[0].mxu0 %v1869
        %v2005 = vpop.f32.mrb[0].mxu0
        %v2006 = vadd.f32 %v1829, %v2005
        %v2007 = vpop.f32.mrb[0].mxu0
        %v2008 = vpop.f32.mrb[0].mxu0
        %v2009 = vadd.f32 %v1829, %v2008
        %v2010 = vpop.f32.mrb[0].mxu0
        %2011 = vmatprep.mubr.bf16.mxu0 0
        %2012 = vmatmul.mubr.bf16.gmra.mrb[0].mxu0 %v1872
        %v2013 = vpop.f32.mrb[0].mxu0
        %v2014 = vadd.f32 %v1829, %v2013
        %v2015 = vpop.f32.mrb[0].mxu0
        %v2016 = vpop.f32.mrb[0].mxu0
        %v2017 = vadd.f32 %v1829, %v2016
        %v2018 = vpop.f32.mrb[0].mxu0
        %2019 = vmatprep.mubr.bf16.mxu0 0
        %2020 = vmatmul.mubr.bf16.gmra.mrb[0].mxu0 %v1875
        %v2021 = vpop.f32.mrb[0].mxu0
        %v2022 = vadd.f32 %v1829, %v2021
        %v2023 = vpop.f32.mrb[0].mxu0
        %v2024 = vpop.f32.mrb[0].mxu0
        %v2025 = vadd.f32 %v1829, %v2024
        %v2026 = vpop.f32.mrb[0].mxu0
        %2027 = vmatprep.mubr.bf16.mxu0 0
        %2028 = vmatmul.mubr.bf16.gmra.mrb[0].mxu0 %v1878
        %v2029 = vpop.f32.mrb[0].mxu0
        %v2030 = vadd.f32 %v1829, %v2029
        %v2031 = vpop.f32.mrb[0].mxu0
        %v2032 = vpop.f32.mrb[0].mxu0
        %v2033 = vadd.f32 %v1829, %v2032
        %v2034 = vpop.f32.mrb[0].mxu0
        %2035 = vmatprep.mubr.bf16.mxu0 0
        %2036 = vmatmul.mubr.bf16.gmra.mrb[0].mxu0 %v1881
        %v2037 = vpop.f32.mrb[0].mxu0
        %v2038 = vadd.f32 %v1829, %v2037
        %v2039 = vpop.f32.mrb[0].mxu0
        %v2040 = vpop.f32.mrb[0].mxu0
        %v2041 = vadd.f32 %v1829, %v2040
        %v2042 = vpop.f32.mrb[0].mxu0
        %2043 = vmatprep.mubr.bf16.mxu0 0
        %2044 = vmatmul.mubr.bf16.gmra.mrb[0].mxu0 %v1884
        %v2045 = vpop.f32.mrb[0].mxu0
        %v2046 = vadd.f32 %v1829, %v2045
        %v2047 = vpop.f32.mrb[0].mxu0
        %v2048 = vpop.f32.mrb[0].mxu0
        %v2049 = vadd.f32 %v1829, %v2048
        %v2050 = vpop.f32.mrb[0].mxu0
        %2051 = vmatprep.mubr.bf16.mxu0 0
        %2052 = vmatmul.mubr.bf16.gmra.mrb[0].mxu0 %v1887
        %v2053 = vpop.f32.mrb[0].mxu0
        %v2054 = vadd.f32 %v1829, %v2053
        %v2055 = vpop.f32.mrb[0].mxu0
        %v2056 = vpop.f32.mrb[0].mxu0
        %v2057 = vadd.f32 %v1829, %v2056
        %v2058 = vpop.f32.mrb[0].mxu0
        %2059 = vmatprep.mubr.bf16.mxu0 0
        %2060 = vmatmul.mubr.bf16.gmra.mrb[0].mxu0 %v1890
        %v2061 = vpop.f32.mrb[0].mxu0
        %v2062 = vadd.f32 %v1829, %v2061
        %v2063 = vpop.f32.mrb[0].mxu0
        %v2064 = vpop.f32.mrb[0].mxu0
        %v2065 = vadd.f32 %v1829, %v2064
        %v2066 = vpop.f32.mrb[0].mxu0
        %2067 = vmatprep.mubr.bf16.mxu0 0
        %2068 = vmatmul.mubr.bf16.gmra.mrb[0].mxu0 %v1893
        %v2069 = vpop.f32.mrb[0].mxu0
        %v2070 = vadd.f32 %v1829, %v2069
        %v2071 = vpop.f32.mrb[0].mxu0
        %v2072 = vpop.f32.mrb[0].mxu0
        %v2073 = vadd.f32 %v1829, %v2072
        %v2074 = vpop.f32.mrb[0].mxu0
        %2075 = vmatprep.mubr.bf16.mxu0 0
        %2076 = vmatmul.mubr.bf16.gmra.mrb[0].mxu0 %v1896
        %v2077 = vpop.f32.mrb[0].mxu0
        %v2078 = vadd.f32 %v1829, %v2077
        %v2079 = vpop.f32.mrb[0].mxu0
        %v2080 = vpop.f32.mrb[0].mxu0
        %v2081 = vadd.f32 %v1829, %v2080
        %v2082 = vpop.f32.mrb[0].mxu0
        %2083 = vmatprep.mubr.bf16.mxu0 0
        %2084 = vmatmul.mubr.bf16.gmra.mrb[0].mxu0 %v1899
        %v2085 = vpop.f32.mrb[0].mxu0
        %v2086 = vadd.f32 %v1829, %v2085
        %v2087 = vpop.f32.mrb[0].mxu0
        %v2088 = vpop.f32.mrb[0].mxu0
        %v2089 = vadd.f32 %v1829, %v2088
        %v2090 = vpop.f32.mrb[0].mxu0
        %2091 = vmatprep.mubr.bf16.mxu0 0
        %2092 = vmatmul.mubr.bf16.gmra.mrb[0].mxu0 %v1902
        %v2093 = vpop.f32.mrb[0].mxu0
        %v2094 = vadd.f32 %v1829, %v2093
        %v2095 = vpop.f32.mrb[0].mxu0
        %v2096 = vpop.f32.mrb[0].mxu0
        %v2097 = vadd.f32 %v1829, %v2096
        %v2098 = vpop.f32.mrb[0].mxu0
        %2099 = vmatprep.mubr.bf16.mxu0 0
        %2100 = vmatmul.mubr.bf16.gmra.mrb[0].mxu0 %v1905
        %v2101 = vpop.f32.mrb[0].mxu0
        %v2102 = vadd.f32 %v1829, %v2101
        %v2103 = vpop.f32.mrb[0].mxu0
        %v2104 = vpop.f32.mrb[0].mxu0
        %v2105 = vpop.f32.mrb[0].mxu0
        %2106 = vdwg.mxu0
        %v2148 = vcombine.high %v1942, %v1942
        %v2150 = vunpack.c.l.s4 1983009808
        %v2151 = vunpack.c.0.s8 %v2150
        %v2152 = vlaneseq
        %v2153 = vshrl.u32 %v2152, 7
        %v2154 = vsub.s32 %v2151, %v2153
        %v2155 = vrot.slane %v1942, %v2154
        %v2157 = vunpack.c.l.s4 1983009808
        %v2158 = vunpack.c.0.s8 %v2157
        %v2159 = vlaneseq
        %v2160 = vshrl.u32 %v2159, 7
        %v2161 = vsub.s32 %v2158, %v2160
        %v2162 = vrot.slane %v2148, %v2161
        %v2163 = vcombine.high %v2155, %v2155
        %v2164 = vcombine.high %v2162, %v2162
        %v2165 = vcombine.high %v1945, %v1945
        %v2167 = vunpack.c.l.s4 1983009808
        %v2168 = vunpack.c.0.s8 %v2167
        %v2169 = vlaneseq
        %v2170 = vshrl.u32 %v2169, 7
        %v2171 = vsub.s32 %v2168, %v2170
        %v2172 = vrot.slane %v1945, %v2171
        %v2174 = vunpack.c.l.s4 1983009808
        %v2175 = vunpack.c.0.s8 %v2174
        %v2176 = vlaneseq
        %v2177 = vshrl.u32 %v2176, 7
        %v2178 = vsub.s32 %v2175, %v2177
        %v2179 = vrot.slane %v2165, %v2178
        %v2180 = vcombine.high %v2172, %v2172
        %v2181 = vcombine.high %v2179, %v2179
        %v2182 = vcombine.high %v1950, %v1950
        %v2184 = vunpack.c.l.s4 1983009808
        %v2185 = vunpack.c.0.s8 %v2184
        %v2186 = vlaneseq
        %v2187 = vshrl.u32 %v2186, 7
        %v2188 = vsub.s32 %v2185, %v2187
        %v2189 = vrot.slane %v1950, %v2188
        %v2191 = vunpack.c.l.s4 1983009808
        %v2192 = vunpack.c.0.s8 %v2191
        %v2193 = vlaneseq
        %v2194 = vshrl.u32 %v2193, 7
        %v2195 = vsub.s32 %v2192, %v2194
        %v2196 = vrot.slane %v2182, %v2195
        %v2197 = vcombine.high %v2189, %v2189
        %v2198 = vcombine.high %v2196, %v2196
        %v2199 = vcombine.high %v1953, %v1953
        %v2201 = vunpack.c.l.s4 1983009808
        %v2202 = vunpack.c.0.s8 %v2201
        %v2203 = vlaneseq
        %v2204 = vshrl.u32 %v2203, 7
        %v2205 = vsub.s32 %v2202, %v2204
        %v2206 = vrot.slane %v1953, %v2205
        %v2208 = vunpack.c.l.s4 1983009808
        %v2209 = vunpack.c.0.s8 %v2208
        %v2210 = vlaneseq
        %v2211 = vshrl.u32 %v2210, 7
        %v2212 = vsub.s32 %v2209, %v2211
        %v2213 = vrot.slane %v2199, %v2212
        %v2214 = vcombine.high %v2206, %v2206
        %v2215 = vcombine.high %v2213, %v2213
        %v2216 = vcombine.high %v1958, %v1958
        %v2218 = vunpack.c.l.s4 1983009808
        %v2219 = vunpack.c.0.s8 %v2218
        %v2220 = vlaneseq
        %v2221 = vshrl.u32 %v2220, 7
        %v2222 = vsub.s32 %v2219, %v2221
        %v2223 = vrot.slane %v1958, %v2222
        %v2225 = vunpack.c.l.s4 1983009808
        %v2226 = vunpack.c.0.s8 %v2225
        %v2227 = vlaneseq
        %v2228 = vshrl.u32 %v2227, 7
        %v2229 = vsub.s32 %v2226, %v2228
        %v2230 = vrot.slane %v2216, %v2229
        %v2231 = vcombine.high %v2223, %v2223
        %v2232 = vcombine.high %v2230, %v2230
        %v2233 = vcombine.high %v1961, %v1961
        %v2235 = vunpack.c.l.s4 1983009808
        %v2236 = vunpack.c.0.s8 %v2235
        %v2237 = vlaneseq
        %v2238 = vshrl.u32 %v2237, 7
        %v2239 = vsub.s32 %v2236, %v2238
        %v2240 = vrot.slane %v1961, %v2239
        %v2242 = vunpack.c.l.s4 1983009808
        %v2243 = vunpack.c.0.s8 %v2242
        %v2244 = vlaneseq
        %v2245 = vshrl.u32 %v2244, 7
        %v2246 = vsub.s32 %v2243, %v2245
        %v2247 = vrot.slane %v2233, %v2246
        %v2248 = vcombine.high %v2240, %v2240
        %v2249 = vcombine.high %v2247, %v2247
        %v2250 = vcombine.high %v1966, %v1966
        %v2252 = vunpack.c.l.s4 1983009808
        %v2253 = vunpack.c.0.s8 %v2252
        %v2254 = vlaneseq
        %v2255 = vshrl.u32 %v2254, 7
        %v2256 = vsub.s32 %v2253, %v2255
        %v2257 = vrot.slane %v1966, %v2256
        %v2259 = vunpack.c.l.s4 1983009808
        %v2260 = vunpack.c.0.s8 %v2259
        %v2261 = vlaneseq
        %v2262 = vshrl.u32 %v2261, 7
        %v2263 = vsub.s32 %v2260, %v2262
        %v2264 = vrot.slane %v2250, %v2263
        %v2265 = vcombine.high %v2257, %v2257
        %v2266 = vcombine.high %v2264, %v2264
        %v2267 = vcombine.high %v1969, %v1969
        %v2269 = vunpack.c.l.s4 1983009808
        %v2270 = vunpack.c.0.s8 %v2269
        %v2271 = vlaneseq
        %v2272 = vshrl.u32 %v2271, 7
        %v2273 = vsub.s32 %v2270, %v2272
        %v2274 = vrot.slane %v1969, %v2273
        %v2276 = vunpack.c.l.s4 1983009808
        %v2277 = vunpack.c.0.s8 %v2276
        %v2278 = vlaneseq
        %v2279 = vshrl.u32 %v2278, 7
        %v2280 = vsub.s32 %v2277, %v2279
        %v2281 = vrot.slane %v2267, %v2280
        %v2282 = vcombine.high %v2274, %v2274
        %v2283 = vcombine.high %v2281, %v2281
        %v2284 = vcombine.high %v1974, %v1974
        %v2286 = vunpack.c.l.s4 1983009808
        %v2287 = vunpack.c.0.s8 %v2286
        %v2288 = vlaneseq
        %v2289 = vshrl.u32 %v2288, 7
        %v2290 = vsub.s32 %v2287, %v2289
        %v2291 = vrot.slane %v1974, %v2290
        %v2293 = vunpack.c.l.s4 1983009808
        %v2294 = vunpack.c.0.s8 %v2293
        %v2295 = vlaneseq
        %v2296 = vshrl.u32 %v2295, 7
        %v2297 = vsub.s32 %v2294, %v2296
        %v2298 = vrot.slane %v2284, %v2297
        %v2299 = vcombine.high %v2291, %v2291
        %v2300 = vcombine.high %v2298, %v2298
        %v2301 = vcombine.high %v1977, %v1977
        %v2303 = vunpack.c.l.s4 1983009808
        %v2304 = vunpack.c.0.s8 %v2303
        %v2305 = vlaneseq
        %v2306 = vshrl.u32 %v2305, 7
        %v2307 = vsub.s32 %v2304, %v2306
        %v2308 = vrot.slane %v1977, %v2307
        %v2310 = vunpack.c.l.s4 1983009808
        %v2311 = vunpack.c.0.s8 %v2310
        %v2312 = vlaneseq
        %v2313 = vshrl.u32 %v2312, 7
        %v2314 = vsub.s32 %v2311, %v2313
        %v2315 = vrot.slane %v2301, %v2314
        %v2316 = vcombine.high %v2308, %v2308
        %v2317 = vcombine.high %v2315, %v2315
        %v2318 = vcombine.high %v1982, %v1982
        %v2320 = vunpack.c.l.s4 1983009808
        %v2321 = vunpack.c.0.s8 %v2320
        %v2322 = vlaneseq
        %v2323 = vshrl.u32 %v2322, 7
        %v2324 = vsub.s32 %v2321, %v2323
        %v2325 = vrot.slane %v1982, %v2324
        %v2327 = vunpack.c.l.s4 1983009808
        %v2328 = vunpack.c.0.s8 %v2327
        %v2329 = vlaneseq
        %v2330 = vshrl.u32 %v2329, 7
        %v2331 = vsub.s32 %v2328, %v2330
        %v2332 = vrot.slane %v2318, %v2331
        %v2333 = vcombine.high %v2325, %v2325
        %v2334 = vcombine.high %v2332, %v2332
        %v2335 = vcombine.high %v1985, %v1985
        %v2337 = vunpack.c.l.s4 1983009808
        %v2338 = vunpack.c.0.s8 %v2337
        %v2339 = vlaneseq
        %v2340 = vshrl.u32 %v2339, 7
        %v2341 = vsub.s32 %v2338, %v2340
        %v2342 = vrot.slane %v1985, %v2341
        %v2344 = vunpack.c.l.s4 1983009808
        %v2345 = vunpack.c.0.s8 %v2344
        %v2346 = vlaneseq
        %v2347 = vshrl.u32 %v2346, 7
        %v2348 = vsub.s32 %v2345, %v2347
        %v2349 = vrot.slane %v2335, %v2348
        %v2350 = vcombine.high %v2342, %v2342
        %v2351 = vcombine.high %v2349, %v2349
        %v2352 = vcombine.high %v1990, %v1990
        %v2354 = vunpack.c.l.s4 1983009808
        %v2355 = vunpack.c.0.s8 %v2354
        %v2356 = vlaneseq
        %v2357 = vshrl.u32 %v2356, 7
        %v2358 = vsub.s32 %v2355, %v2357
        %v2359 = vrot.slane %v1990, %v2358
        %v2361 = vunpack.c.l.s4 1983009808
        %v2362 = vunpack.c.0.s8 %v2361
        %v2363 = vlaneseq
        %v2364 = vshrl.u32 %v2363, 7
        %v2365 = vsub.s32 %v2362, %v2364
        %v2366 = vrot.slane %v2352, %v2365
        %v2367 = vcombine.high %v2359, %v2359
        %v2368 = vcombine.high %v2366, %v2366
        %v2369 = vcombine.high %v1993, %v1993
        %v2371 = vunpack.c.l.s4 1983009808
        %v2372 = vunpack.c.0.s8 %v2371
        %v2373 = vlaneseq
        %v2374 = vshrl.u32 %v2373, 7
        %v2375 = vsub.s32 %v2372, %v2374
        %v2376 = vrot.slane %v1993, %v2375
        %v2378 = vunpack.c.l.s4 1983009808
        %v2379 = vunpack.c.0.s8 %v2378
        %v2380 = vlaneseq
        %v2381 = vshrl.u32 %v2380, 7
        %v2382 = vsub.s32 %v2379, %v2381
        %v2383 = vrot.slane %v2369, %v2382
        %v2384 = vcombine.high %v2376, %v2376
        %v2385 = vcombine.high %v2383, %v2383
        %v2386 = vcombine.high %v1998, %v1998
        %v2388 = vunpack.c.l.s4 1983009808
        %v2389 = vunpack.c.0.s8 %v2388
        %v2390 = vlaneseq
        %v2391 = vshrl.u32 %v2390, 7
        %v2392 = vsub.s32 %v2389, %v2391
        %v2393 = vrot.slane %v1998, %v2392
        %v2395 = vunpack.c.l.s4 1983009808
        %v2396 = vunpack.c.0.s8 %v2395
        %v2397 = vlaneseq
        %v2398 = vshrl.u32 %v2397, 7
        %v2399 = vsub.s32 %v2396, %v2398
        %v2400 = vrot.slane %v2386, %v2399
        %v2401 = vcombine.high %v2393, %v2393
        %v2402 = vcombine.high %v2400, %v2400
        %v2403 = vcombine.high %v2001, %v2001
        %v2405 = vunpack.c.l.s4 1983009808
        %v2406 = vunpack.c.0.s8 %v2405
        %v2407 = vlaneseq
        %v2408 = vshrl.u32 %v2407, 7
        %v2409 = vsub.s32 %v2406, %v2408
        %v2410 = vrot.slane %v2001, %v2409
        %v2412 = vunpack.c.l.s4 1983009808
        %v2413 = vunpack.c.0.s8 %v2412
        %v2414 = vlaneseq
        %v2415 = vshrl.u32 %v2414, 7
        %v2416 = vsub.s32 %v2413, %v2415
        %v2417 = vrot.slane %v2403, %v2416
        %v2418 = vcombine.high %v2410, %v2410
        %v2419 = vcombine.high %v2417, %v2417
        %v2420 = vcombine.high %v2006, %v2006
        %v2422 = vunpack.c.l.s4 1983009808
        %v2423 = vunpack.c.0.s8 %v2422
        %v2424 = vlaneseq
        %v2425 = vshrl.u32 %v2424, 7
        %v2426 = vsub.s32 %v2423, %v2425
        %v2427 = vrot.slane %v2006, %v2426
        %v2429 = vunpack.c.l.s4 1983009808
        %v2430 = vunpack.c.0.s8 %v2429
        %v2431 = vlaneseq
        %v2432 = vshrl.u32 %v2431, 7
        %v2433 = vsub.s32 %v2430, %v2432
        %v2434 = vrot.slane %v2420, %v2433
        %v2435 = vcombine.high %v2427, %v2427
        %v2436 = vcombine.high %v2434, %v2434
        %v2437 = vcombine.high %v2009, %v2009
        %v2439 = vunpack.c.l.s4 1983009808
        %v2440 = vunpack.c.0.s8 %v2439
        %v2441 = vlaneseq
        %v2442 = vshrl.u32 %v2441, 7
        %v2443 = vsub.s32 %v2440, %v2442
        %v2444 = vrot.slane %v2009, %v2443
        %v2446 = vunpack.c.l.s4 1983009808
        %v2447 = vunpack.c.0.s8 %v2446
        %v2448 = vlaneseq
        %v2449 = vshrl.u32 %v2448, 7
        %v2450 = vsub.s32 %v2447, %v2449
        %v2451 = vrot.slane %v2437, %v2450
        %v2452 = vcombine.high %v2444, %v2444
        %v2453 = vcombine.high %v2451, %v2451
        %v2454 = vcombine.high %v2014, %v2014
        %v2456 = vunpack.c.l.s4 1983009808
        %v2457 = vunpack.c.0.s8 %v2456
        %v2458 = vlaneseq
        %v2459 = vshrl.u32 %v2458, 7
        %v2460 = vsub.s32 %v2457, %v2459
        %v2461 = vrot.slane %v2014, %v2460
        %v2463 = vunpack.c.l.s4 1983009808
        %v2464 = vunpack.c.0.s8 %v2463
        %v2465 = vlaneseq
        %v2466 = vshrl.u32 %v2465, 7
        %v2467 = vsub.s32 %v2464, %v2466
        %v2468 = vrot.slane %v2454, %v2467
        %v2469 = vcombine.high %v2461, %v2461
        %v2470 = vcombine.high %v2468, %v2468
        %v2471 = vcombine.high %v2017, %v2017
        %v2473 = vunpack.c.l.s4 1983009808
        %v2474 = vunpack.c.0.s8 %v2473
        %v2475 = vlaneseq
        %v2476 = vshrl.u32 %v2475, 7
        %v2477 = vsub.s32 %v2474, %v2476
        %v2478 = vrot.slane %v2017, %v2477
        %v2480 = vunpack.c.l.s4 1983009808
        %v2481 = vunpack.c.0.s8 %v2480
        %v2482 = vlaneseq
        %v2483 = vshrl.u32 %v2482, 7
        %v2484 = vsub.s32 %v2481, %v2483
        %v2485 = vrot.slane %v2471, %v2484
        %v2486 = vcombine.high %v2478, %v2478
        %v2487 = vcombine.high %v2485, %v2485
        %v2488 = vcombine.high %v2022, %v2022
        %v2490 = vunpack.c.l.s4 1983009808
        %v2491 = vunpack.c.0.s8 %v2490
        %v2492 = vlaneseq
        %v2493 = vshrl.u32 %v2492, 7
        %v2494 = vsub.s32 %v2491, %v2493
        %v2495 = vrot.slane %v2022, %v2494
        %v2497 = vunpack.c.l.s4 1983009808
        %v2498 = vunpack.c.0.s8 %v2497
        %v2499 = vlaneseq
        %v2500 = vshrl.u32 %v2499, 7
        %v2501 = vsub.s32 %v2498, %v2500
        %v2502 = vrot.slane %v2488, %v2501
        %v2503 = vcombine.high %v2495, %v2495
        %v2504 = vcombine.high %v2502, %v2502
        %v2505 = vcombine.high %v2025, %v2025
        %v2507 = vunpack.c.l.s4 1983009808
        %v2508 = vunpack.c.0.s8 %v2507
        %v2509 = vlaneseq
        %v2510 = vshrl.u32 %v2509, 7
        %v2511 = vsub.s32 %v2508, %v2510
        %v2512 = vrot.slane %v2025, %v2511
        %v2514 = vunpack.c.l.s4 1983009808
        %v2515 = vunpack.c.0.s8 %v2514
        %v2516 = vlaneseq
        %v2517 = vshrl.u32 %v2516, 7
        %v2518 = vsub.s32 %v2515, %v2517
        %v2519 = vrot.slane %v2505, %v2518
        %v2520 = vcombine.high %v2512, %v2512
        %v2521 = vcombine.high %v2519, %v2519
        %v2522 = vcombine.high %v2030, %v2030
        %v2524 = vunpack.c.l.s4 1983009808
        %v2525 = vunpack.c.0.s8 %v2524
        %v2526 = vlaneseq
        %v2527 = vshrl.u32 %v2526, 7
        %v2528 = vsub.s32 %v2525, %v2527
        %v2529 = vrot.slane %v2030, %v2528
        %v2531 = vunpack.c.l.s4 1983009808
        %v2532 = vunpack.c.0.s8 %v2531
        %v2533 = vlaneseq
        %v2534 = vshrl.u32 %v2533, 7
        %v2535 = vsub.s32 %v2532, %v2534
        %v2536 = vrot.slane %v2522, %v2535
        %v2537 = vcombine.high %v2529, %v2529
        %v2538 = vcombine.high %v2536, %v2536
        %v2539 = vcombine.high %v2033, %v2033
        %v2541 = vunpack.c.l.s4 1983009808
        %v2542 = vunpack.c.0.s8 %v2541
        %v2543 = vlaneseq
        %v2544 = vshrl.u32 %v2543, 7
        %v2545 = vsub.s32 %v2542, %v2544
        %v2546 = vrot.slane %v2033, %v2545
        %v2548 = vunpack.c.l.s4 1983009808
        %v2549 = vunpack.c.0.s8 %v2548
        %v2550 = vlaneseq
        %v2551 = vshrl.u32 %v2550, 7
        %v2552 = vsub.s32 %v2549, %v2551
        %v2553 = vrot.slane %v2539, %v2552
        %v2554 = vcombine.high %v2546, %v2546
        %v2555 = vcombine.high %v2553, %v2553
        %v2556 = vcombine.high %v2038, %v2038
        %v2558 = vunpack.c.l.s4 1983009808
        %v2559 = vunpack.c.0.s8 %v2558
        %v2560 = vlaneseq
        %v2561 = vshrl.u32 %v2560, 7
        %v2562 = vsub.s32 %v2559, %v2561
        %v2563 = vrot.slane %v2038, %v2562
        %v2565 = vunpack.c.l.s4 1983009808
        %v2566 = vunpack.c.0.s8 %v2565
        %v2567 = vlaneseq
        %v2568 = vshrl.u32 %v2567, 7
        %v2569 = vsub.s32 %v2566, %v2568
        %v2570 = vrot.slane %v2556, %v2569
        %v2571 = vcombine.high %v2563, %v2563
        %v2572 = vcombine.high %v2570, %v2570
        %v2573 = vcombine.high %v2041, %v2041
        %v2575 = vunpack.c.l.s4 1983009808
        %v2576 = vunpack.c.0.s8 %v2575
        %v2577 = vlaneseq
        %v2578 = vshrl.u32 %v2577, 7
        %v2579 = vsub.s32 %v2576, %v2578
        %v2580 = vrot.slane %v2041, %v2579
        %v2582 = vunpack.c.l.s4 1983009808
        %v2583 = vunpack.c.0.s8 %v2582
        %v2584 = vlaneseq
        %v2585 = vshrl.u32 %v2584, 7
        %v2586 = vsub.s32 %v2583, %v2585
        %v2587 = vrot.slane %v2573, %v2586
        %v2588 = vcombine.high %v2580, %v2580
        %v2589 = vcombine.high %v2587, %v2587
        %v2590 = vcombine.high %v2046, %v2046
        %v2592 = vunpack.c.l.s4 1983009808
        %v2593 = vunpack.c.0.s8 %v2592
        %v2594 = vlaneseq
        %v2595 = vshrl.u32 %v2594, 7
        %v2596 = vsub.s32 %v2593, %v2595
        %v2597 = vrot.slane %v2046, %v2596
        %v2599 = vunpack.c.l.s4 1983009808
        %v2600 = vunpack.c.0.s8 %v2599
        %v2601 = vlaneseq
        %v2602 = vshrl.u32 %v2601, 7
        %v2603 = vsub.s32 %v2600, %v2602
        %v2604 = vrot.slane %v2590, %v2603
        %v2605 = vcombine.high %v2597, %v2597
        %v2606 = vcombine.high %v2604, %v2604
        %v2607 = vcombine.high %v2049, %v2049
        %v2609 = vunpack.c.l.s4 1983009808
        %v2610 = vunpack.c.0.s8 %v2609
        %v2611 = vlaneseq
        %v2612 = vshrl.u32 %v2611, 7
        %v2613 = vsub.s32 %v2610, %v2612
        %v2614 = vrot.slane %v2049, %v2613
        %v2616 = vunpack.c.l.s4 1983009808
        %v2617 = vunpack.c.0.s8 %v2616
        %v2618 = vlaneseq
        %v2619 = vshrl.u32 %v2618, 7
        %v2620 = vsub.s32 %v2617, %v2619
        %v2621 = vrot.slane %v2607, %v2620
        %v2622 = vcombine.high %v2614, %v2614
        %v2623 = vcombine.high %v2621, %v2621
        %v2624 = vcombine.high %v2054, %v2054
        %v2626 = vunpack.c.l.s4 1983009808
        %v2627 = vunpack.c.0.s8 %v2626
        %v2628 = vlaneseq
        %v2629 = vshrl.u32 %v2628, 7
        %v2630 = vsub.s32 %v2627, %v2629
        %v2631 = vrot.slane %v2054, %v2630
        %v2633 = vunpack.c.l.s4 1983009808
        %v2634 = vunpack.c.0.s8 %v2633
        %v2635 = vlaneseq
        %v2636 = vshrl.u32 %v2635, 7
        %v2637 = vsub.s32 %v2634, %v2636
        %v2638 = vrot.slane %v2624, %v2637
        %v2639 = vcombine.high %v2631, %v2631
        %v2640 = vcombine.high %v2638, %v2638
        %v2641 = vcombine.high %v2057, %v2057
        %v2643 = vunpack.c.l.s4 1983009808
        %v2644 = vunpack.c.0.s8 %v2643
        %v2645 = vlaneseq
        %v2646 = vshrl.u32 %v2645, 7
        %v2647 = vsub.s32 %v2644, %v2646
        %v2648 = vrot.slane %v2057, %v2647
        %v2650 = vunpack.c.l.s4 1983009808
        %v2651 = vunpack.c.0.s8 %v2650
        %v2652 = vlaneseq
        %v2653 = vshrl.u32 %v2652, 7
        %v2654 = vsub.s32 %v2651, %v2653
        %v2655 = vrot.slane %v2641, %v2654
        %v2656 = vcombine.high %v2648, %v2648
        %v2657 = vcombine.high %v2655, %v2655
        %v2658 = vcombine.high %v2062, %v2062
        %v2660 = vunpack.c.l.s4 1983009808
        %v2661 = vunpack.c.0.s8 %v2660
        %v2662 = vlaneseq
        %v2663 = vshrl.u32 %v2662, 7
        %v2664 = vsub.s32 %v2661, %v2663
        %v2665 = vrot.slane %v2062, %v2664
        %v2667 = vunpack.c.l.s4 1983009808
        %v2668 = vunpack.c.0.s8 %v2667
        %v2669 = vlaneseq
        %v2670 = vshrl.u32 %v2669, 7
        %v2671 = vsub.s32 %v2668, %v2670
        %v2672 = vrot.slane %v2658, %v2671
        %v2673 = vcombine.high %v2665, %v2665
        %v2674 = vcombine.high %v2672, %v2672
        %v2675 = vcombine.high %v2065, %v2065
        %v2677 = vunpack.c.l.s4 1983009808
        %v2678 = vunpack.c.0.s8 %v2677
        %v2679 = vlaneseq
        %v2680 = vshrl.u32 %v2679, 7
        %v2681 = vsub.s32 %v2678, %v2680
        %v2682 = vrot.slane %v2065, %v2681
        %v2684 = vunpack.c.l.s4 1983009808
        %v2685 = vunpack.c.0.s8 %v2684
        %v2686 = vlaneseq
        %v2687 = vshrl.u32 %v2686, 7
        %v2688 = vsub.s32 %v2685, %v2687
        %v2689 = vrot.slane %v2675, %v2688
        %v2690 = vcombine.high %v2682, %v2682
        %v2691 = vcombine.high %v2689, %v2689
        %v2692 = vcombine.high %v2070, %v2070
        %v2694 = vunpack.c.l.s4 1983009808
        %v2695 = vunpack.c.0.s8 %v2694
        %v2696 = vlaneseq
        %v2697 = vshrl.u32 %v2696, 7
        %v2698 = vsub.s32 %v2695, %v2697
        %v2699 = vrot.slane %v2070, %v2698
        %v2701 = vunpack.c.l.s4 1983009808
        %v2702 = vunpack.c.0.s8 %v2701
        %v2703 = vlaneseq
        %v2704 = vshrl.u32 %v2703, 7
        %v2705 = vsub.s32 %v2702, %v2704
        %v2706 = vrot.slane %v2692, %v2705
        %v2707 = vcombine.high %v2699, %v2699
        %v2708 = vcombine.high %v2706, %v2706
        %v2709 = vcombine.high %v2073, %v2073
        %v2711 = vunpack.c.l.s4 1983009808
        %v2712 = vunpack.c.0.s8 %v2711
        %v2713 = vlaneseq
        %v2714 = vshrl.u32 %v2713, 7
        %v2715 = vsub.s32 %v2712, %v2714
        %v2716 = vrot.slane %v2073, %v2715
        %v2718 = vunpack.c.l.s4 1983009808
        %v2719 = vunpack.c.0.s8 %v2718
        %v2720 = vlaneseq
        %v2721 = vshrl.u32 %v2720, 7
        %v2722 = vsub.s32 %v2719, %v2721
        %v2723 = vrot.slane %v2709, %v2722
        %v2724 = vcombine.high %v2716, %v2716
        %v2725 = vcombine.high %v2723, %v2723
        %v2726 = vcombine.high %v2078, %v2078
        %v2728 = vunpack.c.l.s4 1983009808
        %v2729 = vunpack.c.0.s8 %v2728
        %v2730 = vlaneseq
        %v2731 = vshrl.u32 %v2730, 7
        %v2732 = vsub.s32 %v2729, %v2731
        %v2733 = vrot.slane %v2078, %v2732
        %v2735 = vunpack.c.l.s4 1983009808
        %v2736 = vunpack.c.0.s8 %v2735
        %v2737 = vlaneseq
        %v2738 = vshrl.u32 %v2737, 7
        %v2739 = vsub.s32 %v2736, %v2738
        %v2740 = vrot.slane %v2726, %v2739
        %v2741 = vcombine.high %v2733, %v2733
        %v2742 = vcombine.high %v2740, %v2740
        %v2743 = vcombine.high %v2081, %v2081
        %v2745 = vunpack.c.l.s4 1983009808
        %v2746 = vunpack.c.0.s8 %v2745
        %v2747 = vlaneseq
        %v2748 = vshrl.u32 %v2747, 7
        %v2749 = vsub.s32 %v2746, %v2748
        %v2750 = vrot.slane %v2081, %v2749
        %v2752 = vunpack.c.l.s4 1983009808
        %v2753 = vunpack.c.0.s8 %v2752
        %v2754 = vlaneseq
        %v2755 = vshrl.u32 %v2754, 7
        %v2756 = vsub.s32 %v2753, %v2755
        %v2757 = vrot.slane %v2743, %v2756
        %v2758 = vcombine.high %v2750, %v2750
        %v2759 = vcombine.high %v2757, %v2757
        %v2760 = vcombine.high %v2086, %v2086
        %v2762 = vunpack.c.l.s4 1983009808
        %v2763 = vunpack.c.0.s8 %v2762
        %v2764 = vlaneseq
        %v2765 = vshrl.u32 %v2764, 7
        %v2766 = vsub.s32 %v2763, %v2765
        %v2767 = vrot.slane %v2086, %v2766
        %v2769 = vunpack.c.l.s4 1983009808
        %v2770 = vunpack.c.0.s8 %v2769
        %v2771 = vlaneseq
        %v2772 = vshrl.u32 %v2771, 7
        %v2773 = vsub.s32 %v2770, %v2772
        %v2774 = vrot.slane %v2760, %v2773
        %v2775 = vcombine.high %v2767, %v2767
        %v2776 = vcombine.high %v2774, %v2774
        %v2777 = vcombine.high %v2089, %v2089
        %v2779 = vunpack.c.l.s4 1983009808
        %v2780 = vunpack.c.0.s8 %v2779
        %v2781 = vlaneseq
        %v2782 = vshrl.u32 %v2781, 7
        %v2783 = vsub.s32 %v2780, %v2782
        %v2784 = vrot.slane %v2089, %v2783
        %v2786 = vunpack.c.l.s4 1983009808
        %v2787 = vunpack.c.0.s8 %v2786
        %v2788 = vlaneseq
        %v2789 = vshrl.u32 %v2788, 7
        %v2790 = vsub.s32 %v2787, %v2789
        %v2791 = vrot.slane %v2777, %v2790
        %v2792 = vcombine.high %v2784, %v2784
        %v2793 = vcombine.high %v2791, %v2791
        %v2794 = vcombine.high %v2094, %v2094
        %v2796 = vunpack.c.l.s4 1983009808
        %v2797 = vunpack.c.0.s8 %v2796
        %v2798 = vlaneseq
        %v2799 = vshrl.u32 %v2798, 7
        %v2800 = vsub.s32 %v2797, %v2799
        %v2801 = vrot.slane %v2094, %v2800
        %v2803 = vunpack.c.l.s4 1983009808
        %v2804 = vunpack.c.0.s8 %v2803
        %v2805 = vlaneseq
        %v2806 = vshrl.u32 %v2805, 7
        %v2807 = vsub.s32 %v2804, %v2806
        %v2808 = vrot.slane %v2794, %v2807
        %v2809 = vcombine.high %v2801, %v2801
        %v2810 = vcombine.high %v2808, %v2808
        %v2811 = vcombine.high %v2097, %v2097
        %v2813 = vunpack.c.l.s4 1983009808
        %v2814 = vunpack.c.0.s8 %v2813
        %v2815 = vlaneseq
        %v2816 = vshrl.u32 %v2815, 7
        %v2817 = vsub.s32 %v2814, %v2816
        %v2818 = vrot.slane %v2097, %v2817
        %v2820 = vunpack.c.l.s4 1983009808
        %v2821 = vunpack.c.0.s8 %v2820
        %v2822 = vlaneseq
        %v2823 = vshrl.u32 %v2822, 7
        %v2824 = vsub.s32 %v2821, %v2823
        %v2825 = vrot.slane %v2811, %v2824
        %v2826 = vcombine.high %v2818, %v2818
        %v2827 = vcombine.high %v2825, %v2825
        %v2829 = vunpack.c.l.s4 1983009808
        %v2830 = vunpack.c.0.s8 %v2829
        %v2831 = vlaneseq
        %v2832 = vshrl.u32 %v2831, 7
        %v2833 = vsub.s32 %v2830, %v2832
        %v2834 = vrot.slane %v2102, %v2833
        %v2835 = vcombine.high %v2834, %v2834
        %v2836 = vlaneseq
        %v2837 = vshrl.u32 %v2836, 7
        %v2838 = vadd.s32 %v2837, 8
        %v2839 = vadd.s32 %v2837, 16
        %vm2840 = vcmp.ge.s32.totalorder %v2837, 1
        %vm2841 = vcmp.ge.s32.totalorder %v2838, 1
        %vm2842 = vcmp.ge.s32.totalorder %v2839, 1
        %vm2843 = vmand 0, %vm2840
        %vm2844 = vmand 0, %vm2841
        %vm2845 = vmand 0, %vm2842
        %vm2846 = vmand 1, %vm2840
        %vm2847 = vmand 1, %vm2841
        %vm2848 = vmand 1, %vm2842
        %vm2849 = vcmp.lt.s32.totalorder %v2837, 17
        %vm2850 = vcmp.lt.s32.totalorder %v2838, 17
        %vm2851 = vcmp.lt.s32.totalorder %v2839, 17
        %vm2852 = vmand %vm2843, %vm2849
        %vm2853 = vmand %vm2844, %vm2850
        %vm2854 = vmand %vm2845, %vm2851
        %vm2855 = vmand %vm2846, %vm2849
        %vm2856 = vmand %vm2847, %vm2850
        %vm2857 = vmand %vm2848, %vm2851
        %v2858 = vsel %vm2852, 1, 0
        %v2859 = vsel %vm2853, 1, 0
        %v2860 = vsel %vm2854, 1, 0
        %v2861 = vsel %vm2855, 1, 0
        %v2862 = vsel %vm2856, 1, 0
        %v2863 = vsel %vm2857, 1, 0
        %vm2864 = vcmp.eq.s32.totalorder %v2858, 1
        %vm2865 = vcmp.eq.s32.totalorder %v2859, 1
        %vm2866 = vcmp.eq.s32.totalorder %v2860, 1
        %vm2867 = vcmp.eq.s32.totalorder %v2861, 1
        %vm2868 = vcmp.eq.s32.totalorder %v2862, 1
        %vm2869 = vcmp.eq.s32.totalorder %v2863, 1
        %v2870 = vcombine.low %v2155, %v2163
        %v2871 = vcombine.low %v2162, %v2164
        %v2873 = vunpack.c.l.s4 1983009808
        %v2874 = vunpack.c.0.s8 %v2873
        %v2875 = vlaneseq
        %v2876 = vshrl.u32 %v2875, 7
        %v2877 = vsub.s32 %v2874, %v2876
        %v2878 = vrot.slane %v2870, %v2877
        %v2880 = vunpack.c.l.s4 1983009808
        %v2881 = vunpack.c.0.s8 %v2880
        %v2882 = vlaneseq
        %v2883 = vshrl.u32 %v2882, 7
        %v2884 = vsub.s32 %v2881, %v2883
        %v2885 = vrot.slane %v2871, %v2884
        %v2886 = vcombine.low %v2878, %v2885
        %v2887 = vcombine.low %v2172, %v2180
        %v2888 = vcombine.low %v2179, %v2181
        %v2890 = vunpack.c.l.s4 1983009808
        %v2891 = vunpack.c.0.s8 %v2890
        %v2892 = vlaneseq
        %v2893 = vshrl.u32 %v2892, 7
        %v2894 = vsub.s32 %v2891, %v2893
        %v2895 = vrot.slane %v2887, %v2894
        %v2897 = vunpack.c.l.s4 1983009808
        %v2898 = vunpack.c.0.s8 %v2897
        %v2899 = vlaneseq
        %v2900 = vshrl.u32 %v2899, 7
        %v2901 = vsub.s32 %v2898, %v2900
        %v2902 = vrot.slane %v2888, %v2901
        %v2903 = vcombine.low %v2895, %v2902
        %v2905 = vunpack.c.l.s4 1983009808
        %v2906 = vunpack.c.0.s8 %v2905
        %v2907 = vlaneseq
        %v2908 = vshrl.u32 %v2907, 7
        %v2909 = vsub.s32 %v2906, %v2908
        %v2910 = vrot.slane %v2189, %v2909
        %v2911 = vcombine.low %v2197, %v2196
        %v2912 = vcombine.low %v2198, %v2206
        %v2914 = vunpack.c.l.s4 1983009808
        %v2915 = vunpack.c.0.s8 %v2914
        %v2916 = vlaneseq
        %v2917 = vshrl.u32 %v2916, 7
        %v2918 = vsub.s32 %v2915, %v2917
        %v2919 = vrot.slane %v2911, %v2918
        %v2921 = vunpack.c.l.s4 1983009808
        %v2922 = vunpack.c.0.s8 %v2921
        %v2923 = vlaneseq
        %v2924 = vshrl.u32 %v2923, 7
        %v2925 = vsub.s32 %v2922, %v2924
        %v2926 = vrot.slane %v2912, %v2925
        %v2927 = vcombine.low %v2919, %v2926
        %v2928 = vcombine.low %v2214, %v2213
        %v2929 = vcombine.low %v2215, %v2223
        %v2931 = vunpack.c.l.s4 1983009808
        %v2932 = vunpack.c.0.s8 %v2931
        %v2933 = vlaneseq
        %v2934 = vshrl.u32 %v2933, 7
        %v2935 = vsub.s32 %v2932, %v2934
        %v2936 = vrot.slane %v2928, %v2935
        %v2938 = vunpack.c.l.s4 1983009808
        %v2939 = vunpack.c.0.s8 %v2938
        %v2940 = vlaneseq
        %v2941 = vshrl.u32 %v2940, 7
        %v2942 = vsub.s32 %v2939, %v2941
        %v2943 = vrot.slane %v2929, %v2942
        %v2944 = vcombine.low %v2936, %v2943
        %v2946 = vunpack.c.l.s4 1983009808
        %v2947 = vunpack.c.0.s8 %v2946
        %v2948 = vlaneseq
        %v2949 = vshrl.u32 %v2948, 7
        %v2950 = vsub.s32 %v2947, %v2949
        %v2951 = vrot.slane %v2231, %v2950
        %v2952 = vcombine.low %v2230, %v2232
        %v2953 = vcombine.low %v2240, %v2248
        %v2955 = vunpack.c.l.s4 1983009808
        %v2956 = vunpack.c.0.s8 %v2955
        %v2957 = vlaneseq
        %v2958 = vshrl.u32 %v2957, 7
        %v2959 = vsub.s32 %v2956, %v2958
        %v2960 = vrot.slane %v2952, %v2959
        %v2962 = vunpack.c.l.s4 1983009808
        %v2963 = vunpack.c.0.s8 %v2962
        %v2964 = vlaneseq
        %v2965 = vshrl.u32 %v2964, 7
        %v2966 = vsub.s32 %v2963, %v2965
        %v2967 = vrot.slane %v2953, %v2966
        %v2968 = vcombine.low %v2960, %v2967
        %v2969 = vcombine.low %v2247, %v2249
        %v2970 = vcombine.low %v2257, %v2265
        %v2972 = vunpack.c.l.s4 1983009808
        %v2973 = vunpack.c.0.s8 %v2972
        %v2974 = vlaneseq
        %v2975 = vshrl.u32 %v2974, 7
        %v2976 = vsub.s32 %v2973, %v2975
        %v2977 = vrot.slane %v2969, %v2976
        %v2979 = vunpack.c.l.s4 1983009808
        %v2980 = vunpack.c.0.s8 %v2979
        %v2981 = vlaneseq
        %v2982 = vshrl.u32 %v2981, 7
        %v2983 = vsub.s32 %v2980, %v2982
        %v2984 = vrot.slane %v2970, %v2983
        %v2985 = vcombine.low %v2977, %v2984
        %v2987 = vunpack.c.l.s4 1983009808
        %v2988 = vunpack.c.0.s8 %v2987
        %v2989 = vlaneseq
        %v2990 = vshrl.u32 %v2989, 7
        %v2991 = vsub.s32 %v2988, %v2990
        %v2992 = vrot.slane %v2264, %v2991
        %v2993 = vcombine.low %v2266, %v2274
        %v2994 = vcombine.low %v2282, %v2281
        %v2996 = vunpack.c.l.s4 1983009808
        %v2997 = vunpack.c.0.s8 %v2996
        %v2998 = vlaneseq
        %v2999 = vshrl.u32 %v2998, 7
        %v3000 = vsub.s32 %v2997, %v2999
        %v3001 = vrot.slane %v2993, %v3000
        %v3003 = vunpack.c.l.s4 1983009808
        %v3004 = vunpack.c.0.s8 %v3003
        %v3005 = vlaneseq
        %v3006 = vshrl.u32 %v3005, 7
        %v3007 = vsub.s32 %v3004, %v3006
        %v3008 = vrot.slane %v2994, %v3007
        %v3009 = vcombine.low %v3001, %v3008
        %v3010 = vcombine.low %v2283, %v2291
        %v3011 = vcombine.low %v2299, %v2298
        %v3013 = vunpack.c.l.s4 1983009808
        %v3014 = vunpack.c.0.s8 %v3013
        %v3015 = vlaneseq
        %v3016 = vshrl.u32 %v3015, 7
        %v3017 = vsub.s32 %v3014, %v3016
        %v3018 = vrot.slane %v3010, %v3017
        %v3020 = vunpack.c.l.s4 1983009808
        %v3021 = vunpack.c.0.s8 %v3020
        %v3022 = vlaneseq
        %v3023 = vshrl.u32 %v3022, 7
        %v3024 = vsub.s32 %v3021, %v3023
        %v3025 = vrot.slane %v3011, %v3024
        %v3026 = vcombine.low %v3018, %v3025
        %v3028 = vunpack.c.l.s4 1983009808
        %v3029 = vunpack.c.0.s8 %v3028
        %v3030 = vlaneseq
        %v3031 = vshrl.u32 %v3030, 7
        %v3032 = vsub.s32 %v3029, %v3031
        %v3033 = vrot.slane %v2300, %v3032
        %v3034 = vcombine.low %v2308, %v2316
        %v3035 = vcombine.low %v2315, %v2317
        %v3037 = vunpack.c.l.s4 1983009808
        %v3038 = vunpack.c.0.s8 %v3037
        %v3039 = vlaneseq
        %v3040 = vshrl.u32 %v3039, 7
        %v3041 = vsub.s32 %v3038, %v3040
        %v3042 = vrot.slane %v3034, %v3041
        %v3044 = vunpack.c.l.s4 1983009808
        %v3045 = vunpack.c.0.s8 %v3044
        %v3046 = vlaneseq
        %v3047 = vshrl.u32 %v3046, 7
        %v3048 = vsub.s32 %v3045, %v3047
        %v3049 = vrot.slane %v3035, %v3048
        %v3050 = vcombine.low %v3042, %v3049
        %v3051 = vcombine.low %v2325, %v2333
        %v3052 = vcombine.low %v2332, %v2334
        %v3054 = vunpack.c.l.s4 1983009808
        %v3055 = vunpack.c.0.s8 %v3054
        %v3056 = vlaneseq
        %v3057 = vshrl.u32 %v3056, 7
        %v3058 = vsub.s32 %v3055, %v3057
        %v3059 = vrot.slane %v3051, %v3058
        %v3061 = vunpack.c.l.s4 1983009808
        %v3062 = vunpack.c.0.s8 %v3061
        %v3063 = vlaneseq
        %v3064 = vshrl.u32 %v3063, 7
        %v3065 = vsub.s32 %v3062, %v3064
        %v3066 = vrot.slane %v3052, %v3065
        %v3067 = vcombine.low %v3059, %v3066
        %v3069 = vunpack.c.l.s4 1983009808
        %v3070 = vunpack.c.0.s8 %v3069
        %v3071 = vlaneseq
        %v3072 = vshrl.u32 %v3071, 7
        %v3073 = vsub.s32 %v3070, %v3072
        %v3074 = vrot.slane %v2342, %v3073
        %v3075 = vcombine.low %v2350, %v2349
        %v3076 = vcombine.low %v2351, %v2359
        %v3078 = vunpack.c.l.s4 1983009808
        %v3079 = vunpack.c.0.s8 %v3078
        %v3080 = vlaneseq
        %v3081 = vshrl.u32 %v3080, 7
        %v3082 = vsub.s32 %v3079, %v3081
        %v3083 = vrot.slane %v3075, %v3082
        %v3085 = vunpack.c.l.s4 1983009808
        %v3086 = vunpack.c.0.s8 %v3085
        %v3087 = vlaneseq
        %v3088 = vshrl.u32 %v3087, 7
        %v3089 = vsub.s32 %v3086, %v3088
        %v3090 = vrot.slane %v3076, %v3089
        %v3091 = vcombine.low %v3083, %v3090
        %v3092 = vcombine.low %v2367, %v2366
        %v3093 = vcombine.low %v2368, %v2376
        %v3095 = vunpack.c.l.s4 1983009808
        %v3096 = vunpack.c.0.s8 %v3095
        %v3097 = vlaneseq
        %v3098 = vshrl.u32 %v3097, 7
        %v3099 = vsub.s32 %v3096, %v3098
        %v3100 = vrot.slane %v3092, %v3099
        %v3102 = vunpack.c.l.s4 1983009808
        %v3103 = vunpack.c.0.s8 %v3102
        %v3104 = vlaneseq
        %v3105 = vshrl.u32 %v3104, 7
        %v3106 = vsub.s32 %v3103, %v3105
        %v3107 = vrot.slane %v3093, %v3106
        %v3108 = vcombine.low %v3100, %v3107
        %v3110 = vunpack.c.l.s4 1983009808
        %v3111 = vunpack.c.0.s8 %v3110
        %v3112 = vlaneseq
        %v3113 = vshrl.u32 %v3112, 7
        %v3114 = vsub.s32 %v3111, %v3113
        %v3115 = vrot.slane %v2384, %v3114
        %v3116 = vcombine.low %v2383, %v2385
        %v3117 = vcombine.low %v2393, %v2401
        %v3119 = vunpack.c.l.s4 1983009808
        %v3120 = vunpack.c.0.s8 %v3119
        %v3121 = vlaneseq
        %v3122 = vshrl.u32 %v3121, 7
        %v3123 = vsub.s32 %v3120, %v3122
        %v3124 = vrot.slane %v3116, %v3123
        %v3126 = vunpack.c.l.s4 1983009808
        %v3127 = vunpack.c.0.s8 %v3126
        %v3128 = vlaneseq
        %v3129 = vshrl.u32 %v3128, 7
        %v3130 = vsub.s32 %v3127, %v3129
        %v3131 = vrot.slane %v3117, %v3130
        %v3132 = vcombine.low %v3124, %v3131
        %v3133 = vcombine.low %v2400, %v2402
        %v3134 = vcombine.low %v2410, %v2418
        %v3136 = vunpack.c.l.s4 1983009808
        %v3137 = vunpack.c.0.s8 %v3136
        %v3138 = vlaneseq
        %v3139 = vshrl.u32 %v3138, 7
        %v3140 = vsub.s32 %v3137, %v3139
        %v3141 = vrot.slane %v3133, %v3140
        %v3143 = vunpack.c.l.s4 1983009808
        %v3144 = vunpack.c.0.s8 %v3143
        %v3145 = vlaneseq
        %v3146 = vshrl.u32 %v3145, 7
        %v3147 = vsub.s32 %v3144, %v3146
        %v3148 = vrot.slane %v3134, %v3147
        %v3149 = vcombine.low %v3141, %v3148
        %v3151 = vunpack.c.l.s4 1983009808
        %v3152 = vunpack.c.0.s8 %v3151
        %v3153 = vlaneseq
        %v3154 = vshrl.u32 %v3153, 7
        %v3155 = vsub.s32 %v3152, %v3154
        %v3156 = vrot.slane %v2417, %v3155
        %v3157 = vcombine.low %v2419, %v2427
        %v3158 = vcombine.low %v2435, %v2434
        %v3160 = vunpack.c.l.s4 1983009808
        %v3161 = vunpack.c.0.s8 %v3160
        %v3162 = vlaneseq
        %v3163 = vshrl.u32 %v3162, 7
        %v3164 = vsub.s32 %v3161, %v3163
        %v3165 = vrot.slane %v3157, %v3164
        %v3167 = vunpack.c.l.s4 1983009808
        %v3168 = vunpack.c.0.s8 %v3167
        %v3169 = vlaneseq
        %v3170 = vshrl.u32 %v3169, 7
        %v3171 = vsub.s32 %v3168, %v3170
        %v3172 = vrot.slane %v3158, %v3171
        %v3173 = vcombine.low %v3165, %v3172
        %v3174 = vcombine.low %v2436, %v2444
        %v3175 = vcombine.low %v2452, %v2451
        %v3177 = vunpack.c.l.s4 1983009808
        %v3178 = vunpack.c.0.s8 %v3177
        %v3179 = vlaneseq
        %v3180 = vshrl.u32 %v3179, 7
        %v3181 = vsub.s32 %v3178, %v3180
        %v3182 = vrot.slane %v3174, %v3181
        %v3184 = vunpack.c.l.s4 1983009808
        %v3185 = vunpack.c.0.s8 %v3184
        %v3186 = vlaneseq
        %v3187 = vshrl.u32 %v3186, 7
        %v3188 = vsub.s32 %v3185, %v3187
        %v3189 = vrot.slane %v3175, %v3188
        %v3190 = vcombine.low %v3182, %v3189
        %v3192 = vunpack.c.l.s4 1983009808
        %v3193 = vunpack.c.0.s8 %v3192
        %v3194 = vlaneseq
        %v3195 = vshrl.u32 %v3194, 7
        %v3196 = vsub.s32 %v3193, %v3195
        %v3197 = vrot.slane %v2453, %v3196
        %v3198 = vcombine.low %v2461, %v2469
        %v3199 = vcombine.low %v2468, %v2470
        %v3201 = vunpack.c.l.s4 1983009808
        %v3202 = vunpack.c.0.s8 %v3201
        %v3203 = vlaneseq
        %v3204 = vshrl.u32 %v3203, 7
        %v3205 = vsub.s32 %v3202, %v3204
        %v3206 = vrot.slane %v3198, %v3205
        %v3208 = vunpack.c.l.s4 1983009808
        %v3209 = vunpack.c.0.s8 %v3208
        %v3210 = vlaneseq
        %v3211 = vshrl.u32 %v3210, 7
        %v3212 = vsub.s32 %v3209, %v3211
        %v3213 = vrot.slane %v3199, %v3212
        %v3214 = vcombine.low %v3206, %v3213
        %v3215 = vcombine.low %v2478, %v2486
        %v3216 = vcombine.low %v2485, %v2487
        %v3218 = vunpack.c.l.s4 1983009808
        %v3219 = vunpack.c.0.s8 %v3218
        %v3220 = vlaneseq
        %v3221 = vshrl.u32 %v3220, 7
        %v3222 = vsub.s32 %v3219, %v3221
        %v3223 = vrot.slane %v3215, %v3222
        %v3225 = vunpack.c.l.s4 1983009808
        %v3226 = vunpack.c.0.s8 %v3225
        %v3227 = vlaneseq
        %v3228 = vshrl.u32 %v3227, 7
        %v3229 = vsub.s32 %v3226, %v3228
        %v3230 = vrot.slane %v3216, %v3229
        %v3231 = vcombine.low %v3223, %v3230
        %v3233 = vunpack.c.l.s4 1983009808
        %v3234 = vunpack.c.0.s8 %v3233
        %v3235 = vlaneseq
        %v3236 = vshrl.u32 %v3235, 7
        %v3237 = vsub.s32 %v3234, %v3236
        %v3238 = vrot.slane %v2495, %v3237
        %v3239 = vcombine.low %v2503, %v2502
        %v3240 = vcombine.low %v2504, %v2512
        %v3242 = vunpack.c.l.s4 1983009808
        %v3243 = vunpack.c.0.s8 %v3242
        %v3244 = vlaneseq
        %v3245 = vshrl.u32 %v3244, 7
        %v3246 = vsub.s32 %v3243, %v3245
        %v3247 = vrot.slane %v3239, %v3246
        %v3249 = vunpack.c.l.s4 1983009808
        %v3250 = vunpack.c.0.s8 %v3249
        %v3251 = vlaneseq
        %v3252 = vshrl.u32 %v3251, 7
        %v3253 = vsub.s32 %v3250, %v3252
        %v3254 = vrot.slane %v3240, %v3253
        %v3255 = vcombine.low %v3247, %v3254
        %v3256 = vcombine.low %v2520, %v2519
        %v3257 = vcombine.low %v2521, %v2529
        %v3259 = vunpack.c.l.s4 1983009808
        %v3260 = vunpack.c.0.s8 %v3259
        %v3261 = vlaneseq
        %v3262 = vshrl.u32 %v3261, 7
        %v3263 = vsub.s32 %v3260, %v3262
        %v3264 = vrot.slane %v3256, %v3263
        %v3266 = vunpack.c.l.s4 1983009808
        %v3267 = vunpack.c.0.s8 %v3266
        %v3268 = vlaneseq
        %v3269 = vshrl.u32 %v3268, 7
        %v3270 = vsub.s32 %v3267, %v3269
        %v3271 = vrot.slane %v3257, %v3270
        %v3272 = vcombine.low %v3264, %v3271
        %v3274 = vunpack.c.l.s4 1983009808
        %v3275 = vunpack.c.0.s8 %v3274
        %v3276 = vlaneseq
        %v3277 = vshrl.u32 %v3276, 7
        %v3278 = vsub.s32 %v3275, %v3277
        %v3279 = vrot.slane %v2537, %v3278
        %v3280 = vcombine.low %v2536, %v2538
        %v3281 = vcombine.low %v2546, %v2554
        %v3283 = vunpack.c.l.s4 1983009808
        %v3284 = vunpack.c.0.s8 %v3283
        %v3285 = vlaneseq
        %v3286 = vshrl.u32 %v3285, 7
        %v3287 = vsub.s32 %v3284, %v3286
        %v3288 = vrot.slane %v3280, %v3287
        %v3290 = vunpack.c.l.s4 1983009808
        %v3291 = vunpack.c.0.s8 %v3290
        %v3292 = vlaneseq
        %v3293 = vshrl.u32 %v3292, 7
        %v3294 = vsub.s32 %v3291, %v3293
        %v3295 = vrot.slane %v3281, %v3294
        %v3296 = vcombine.low %v3288, %v3295
        %v3297 = vcombine.low %v2553, %v2555
        %v3298 = vcombine.low %v2563, %v2571
        %v3300 = vunpack.c.l.s4 1983009808
        %v3301 = vunpack.c.0.s8 %v3300
        %v3302 = vlaneseq
        %v3303 = vshrl.u32 %v3302, 7
        %v3304 = vsub.s32 %v3301, %v3303
        %v3305 = vrot.slane %v3297, %v3304
        %v3307 = vunpack.c.l.s4 1983009808
        %v3308 = vunpack.c.0.s8 %v3307
        %v3309 = vlaneseq
        %v3310 = vshrl.u32 %v3309, 7
        %v3311 = vsub.s32 %v3308, %v3310
        %v3312 = vrot.slane %v3298, %v3311
        %v3313 = vcombine.low %v3305, %v3312
        %v3315 = vunpack.c.l.s4 1983009808
        %v3316 = vunpack.c.0.s8 %v3315
        %v3317 = vlaneseq
        %v3318 = vshrl.u32 %v3317, 7
        %v3319 = vsub.s32 %v3316, %v3318
        %v3320 = vrot.slane %v2570, %v3319
        %v3321 = vcombine.low %v2572, %v2580
        %v3322 = vcombine.low %v2588, %v2587
        %v3324 = vunpack.c.l.s4 1983009808
        %v3325 = vunpack.c.0.s8 %v3324
        %v3326 = vlaneseq
        %v3327 = vshrl.u32 %v3326, 7
        %v3328 = vsub.s32 %v3325, %v3327
        %v3329 = vrot.slane %v3321, %v3328
        %v3331 = vunpack.c.l.s4 1983009808
        %v3332 = vunpack.c.0.s8 %v3331
        %v3333 = vlaneseq
        %v3334 = vshrl.u32 %v3333, 7
        %v3335 = vsub.s32 %v3332, %v3334
        %v3336 = vrot.slane %v3322, %v3335
        %v3337 = vcombine.low %v3329, %v3336
        %v3338 = vcombine.low %v2589, %v2597
        %v3339 = vcombine.low %v2605, %v2604
        %v3341 = vunpack.c.l.s4 1983009808
        %v3342 = vunpack.c.0.s8 %v3341
        %v3343 = vlaneseq
        %v3344 = vshrl.u32 %v3343, 7
        %v3345 = vsub.s32 %v3342, %v3344
        %v3346 = vrot.slane %v3338, %v3345
        %v3348 = vunpack.c.l.s4 1983009808
        %v3349 = vunpack.c.0.s8 %v3348
        %v3350 = vlaneseq
        %v3351 = vshrl.u32 %v3350, 7
        %v3352 = vsub.s32 %v3349, %v3351
        %v3353 = vrot.slane %v3339, %v3352
        %v3354 = vcombine.low %v3346, %v3353
        %v3356 = vunpack.c.l.s4 1983009808
        %v3357 = vunpack.c.0.s8 %v3356
        %v3358 = vlaneseq
        %v3359 = vshrl.u32 %v3358, 7
        %v3360 = vsub.s32 %v3357, %v3359
        %v3361 = vrot.slane %v2606, %v3360
        %v3362 = vcombine.low %v2614, %v2622
        %v3363 = vcombine.low %v2621, %v2623
        %v3365 = vunpack.c.l.s4 1983009808
        %v3366 = vunpack.c.0.s8 %v3365
        %v3367 = vlaneseq
        %v3368 = vshrl.u32 %v3367, 7
        %v3369 = vsub.s32 %v3366, %v3368
        %v3370 = vrot.slane %v3362, %v3369
        %v3372 = vunpack.c.l.s4 1983009808
        %v3373 = vunpack.c.0.s8 %v3372
        %v3374 = vlaneseq
        %v3375 = vshrl.u32 %v3374, 7
        %v3376 = vsub.s32 %v3373, %v3375
        %v3377 = vrot.slane %v3363, %v3376
        %v3378 = vcombine.low %v3370, %v3377
        %v3379 = vcombine.low %v2631, %v2639
        %v3380 = vcombine.low %v2638, %v2640
        %v3382 = vunpack.c.l.s4 1983009808
        %v3383 = vunpack.c.0.s8 %v3382
        %v3384 = vlaneseq
        %v3385 = vshrl.u32 %v3384, 7
        %v3386 = vsub.s32 %v3383, %v3385
        %v3387 = vrot.slane %v3379, %v3386
        %v3389 = vunpack.c.l.s4 1983009808
        %v3390 = vunpack.c.0.s8 %v3389
        %v3391 = vlaneseq
        %v3392 = vshrl.u32 %v3391, 7
        %v3393 = vsub.s32 %v3390, %v3392
        %v3394 = vrot.slane %v3380, %v3393
        %v3395 = vcombine.low %v3387, %v3394
        %v3397 = vunpack.c.l.s4 1983009808
        %v3398 = vunpack.c.0.s8 %v3397
        %v3399 = vlaneseq
        %v3400 = vshrl.u32 %v3399, 7
        %v3401 = vsub.s32 %v3398, %v3400
        %v3402 = vrot.slane %v2648, %v3401
        %v3403 = vcombine.low %v2656, %v2655
        %v3404 = vcombine.low %v2657, %v2665
        %v3406 = vunpack.c.l.s4 1983009808
        %v3407 = vunpack.c.0.s8 %v3406
        %v3408 = vlaneseq
        %v3409 = vshrl.u32 %v3408, 7
        %v3410 = vsub.s32 %v3407, %v3409
        %v3411 = vrot.slane %v3403, %v3410
        %v3413 = vunpack.c.l.s4 1983009808
        %v3414 = vunpack.c.0.s8 %v3413
        %v3415 = vlaneseq
        %v3416 = vshrl.u32 %v3415, 7
        %v3417 = vsub.s32 %v3414, %v3416
        %v3418 = vrot.slane %v3404, %v3417
        %v3419 = vcombine.low %v3411, %v3418
        %v3420 = vcombine.low %v2673, %v2672
        %v3421 = vcombine.low %v2674, %v2682
        %v3423 = vunpack.c.l.s4 1983009808
        %v3424 = vunpack.c.0.s8 %v3423
        %v3425 = vlaneseq
        %v3426 = vshrl.u32 %v3425, 7
        %v3427 = vsub.s32 %v3424, %v3426
        %v3428 = vrot.slane %v3420, %v3427
        %v3430 = vunpack.c.l.s4 1983009808
        %v3431 = vunpack.c.0.s8 %v3430
        %v3432 = vlaneseq
        %v3433 = vshrl.u32 %v3432, 7
        %v3434 = vsub.s32 %v3431, %v3433
        %v3435 = vrot.slane %v3421, %v3434
        %v3436 = vcombine.low %v3428, %v3435
        %v3438 = vunpack.c.l.s4 1983009808
        %v3439 = vunpack.c.0.s8 %v3438
        %v3440 = vlaneseq
        %v3441 = vshrl.u32 %v3440, 7
        %v3442 = vsub.s32 %v3439, %v3441
        %v3443 = vrot.slane %v2690, %v3442
        %v3444 = vcombine.low %v2689, %v2691
        %v3445 = vcombine.low %v2699, %v2707
        %v3447 = vunpack.c.l.s4 1983009808
        %v3448 = vunpack.c.0.s8 %v3447
        %v3449 = vlaneseq
        %v3450 = vshrl.u32 %v3449, 7
        %v3451 = vsub.s32 %v3448, %v3450
        %v3452 = vrot.slane %v3444, %v3451
        %v3454 = vunpack.c.l.s4 1983009808
        %v3455 = vunpack.c.0.s8 %v3454
        %v3456 = vlaneseq
        %v3457 = vshrl.u32 %v3456, 7
        %v3458 = vsub.s32 %v3455, %v3457
        %v3459 = vrot.slane %v3445, %v3458
        %v3460 = vcombine.low %v3452, %v3459
        %v3461 = vcombine.low %v2706, %v2708
        %v3462 = vcombine.low %v2716, %v2724
        %v3464 = vunpack.c.l.s4 1983009808
        %v3465 = vunpack.c.0.s8 %v3464
        %v3466 = vlaneseq
        %v3467 = vshrl.u32 %v3466, 7
        %v3468 = vsub.s32 %v3465, %v3467
        %v3469 = vrot.slane %v3461, %v3468
        %v3471 = vunpack.c.l.s4 1983009808
        %v3472 = vunpack.c.0.s8 %v3471
        %v3473 = vlaneseq
        %v3474 = vshrl.u32 %v3473, 7
        %v3475 = vsub.s32 %v3472, %v3474
        %v3476 = vrot.slane %v3462, %v3475
        %v3477 = vcombine.low %v3469, %v3476
        %v3479 = vunpack.c.l.s4 1983009808
        %v3480 = vunpack.c.0.s8 %v3479
        %v3481 = vlaneseq
        %v3482 = vshrl.u32 %v3481, 7
        %v3483 = vsub.s32 %v3480, %v3482
        %v3484 = vrot.slane %v2723, %v3483
        %v3485 = vcombine.low %v2725, %v2733
        %v3486 = vcombine.low %v2741, %v2740
        %v3488 = vunpack.c.l.s4 1983009808
        %v3489 = vunpack.c.0.s8 %v3488
        %v3490 = vlaneseq
        %v3491 = vshrl.u32 %v3490, 7
        %v3492 = vsub.s32 %v3489, %v3491
        %v3493 = vrot.slane %v3485, %v3492
        %v3495 = vunpack.c.l.s4 1983009808
        %v3496 = vunpack.c.0.s8 %v3495
        %v3497 = vlaneseq
        %v3498 = vshrl.u32 %v3497, 7
        %v3499 = vsub.s32 %v3496, %v3498
        %v3500 = vrot.slane %v3486, %v3499
        %v3501 = vcombine.low %v3493, %v3500
        %v3502 = vcombine.low %v2742, %v2750
        %v3503 = vcombine.low %v2758, %v2757
        %v3505 = vunpack.c.l.s4 1983009808
        %v3506 = vunpack.c.0.s8 %v3505
        %v3507 = vlaneseq
        %v3508 = vshrl.u32 %v3507, 7
        %v3509 = vsub.s32 %v3506, %v3508
        %v3510 = vrot.slane %v3502, %v3509
        %v3512 = vunpack.c.l.s4 1983009808
        %v3513 = vunpack.c.0.s8 %v3512
        %v3514 = vlaneseq
        %v3515 = vshrl.u32 %v3514, 7
        %v3516 = vsub.s32 %v3513, %v3515
        %v3517 = vrot.slane %v3503, %v3516
        %v3518 = vcombine.low %v3510, %v3517
        %v3520 = vunpack.c.l.s4 1983009808
        %v3521 = vunpack.c.0.s8 %v3520
        %v3522 = vlaneseq
        %v3523 = vshrl.u32 %v3522, 7
        %v3524 = vsub.s32 %v3521, %v3523
        %v3525 = vrot.slane %v2759, %v3524
        %v3526 = vcombine.low %v2767, %v2775
        %v3527 = vcombine.low %v2774, %v2776
        %v3529 = vunpack.c.l.s4 1983009808
        %v3530 = vunpack.c.0.s8 %v3529
        %v3531 = vlaneseq
        %v3532 = vshrl.u32 %v3531, 7
        %v3533 = vsub.s32 %v3530, %v3532
        %v3534 = vrot.slane %v3526, %v3533
        %v3536 = vunpack.c.l.s4 1983009808
        %v3537 = vunpack.c.0.s8 %v3536
        %v3538 = vlaneseq
        %v3539 = vshrl.u32 %v3538, 7
        %v3540 = vsub.s32 %v3537, %v3539
        %v3541 = vrot.slane %v3527, %v3540
        %v3542 = vcombine.low %v3534, %v3541
        %v3543 = vcombine.low %v2784, %v2792
        %v3544 = vcombine.low %v2791, %v2793
        %v3546 = vunpack.c.l.s4 1983009808
        %v3547 = vunpack.c.0.s8 %v3546
        %v3548 = vlaneseq
        %v3549 = vshrl.u32 %v3548, 7
        %v3550 = vsub.s32 %v3547, %v3549
        %v3551 = vrot.slane %v3543, %v3550
        %v3553 = vunpack.c.l.s4 1983009808
        %v3554 = vunpack.c.0.s8 %v3553
        %v3555 = vlaneseq
        %v3556 = vshrl.u32 %v3555, 7
        %v3557 = vsub.s32 %v3554, %v3556
        %v3558 = vrot.slane %v3544, %v3557
        %v3559 = vcombine.low %v3551, %v3558
        %v3561 = vunpack.c.l.s4 1983009808
        %v3562 = vunpack.c.0.s8 %v3561
        %v3563 = vlaneseq
        %v3564 = vshrl.u32 %v3563, 7
        %v3565 = vsub.s32 %v3562, %v3564
        %v3566 = vrot.slane %v2801, %v3565
        %v3567 = vcombine.low %v2809, %v2808
        %v3568 = vcombine.low %v2810, %v2818
        %v3570 = vunpack.c.l.s4 1983009808
        %v3571 = vunpack.c.0.s8 %v3570
        %v3572 = vlaneseq
        %v3573 = vshrl.u32 %v3572, 7
        %v3574 = vsub.s32 %v3571, %v3573
        %v3575 = vrot.slane %v3567, %v3574
        %v3577 = vunpack.c.l.s4 1983009808
        %v3578 = vunpack.c.0.s8 %v3577
        %v3579 = vlaneseq
        %v3580 = vshrl.u32 %v3579, 7
        %v3581 = vsub.s32 %v3578, %v3580
        %v3582 = vrot.slane %v3568, %v3581
        %v3583 = vcombine.low %v3575, %v3582
        %v3584 = vcombine.low %v2826, %v2825
        %v3585 = vcombine.low %v2827, %v2834
        %v3587 = vunpack.c.l.s4 1983009808
        %v3588 = vunpack.c.0.s8 %v3587
        %v3589 = vlaneseq
        %v3590 = vshrl.u32 %v3589, 7
        %v3591 = vsub.s32 %v3588, %v3590
        %v3592 = vrot.slane %v3584, %v3591
        %v3594 = vunpack.c.l.s4 1983009808
        %v3595 = vunpack.c.0.s8 %v3594
        %v3596 = vlaneseq
        %v3597 = vshrl.u32 %v3596, 7
        %v3598 = vsub.s32 %v3595, %v3597
        %v3599 = vrot.slane %v3585, %v3598
        %v3600 = vcombine.low %v3592, %v3599
        %v3602 = vunpack.c.l.s4 1983009808
        %v3603 = vunpack.c.0.s8 %v3602
        %v3604 = vlaneseq
        %v3605 = vshrl.u32 %v3604, 7
        %v3606 = vsub.s32 %v3603, %v3605
        %v3607 = vrot.slane %v2835, %v3606
        %v3662 = vsel %vm2864, %v2886, 0.0
        %v3663 = vsel %vm2865, %v2903, 0.0
        %v3664 = vsel %vm2866, %v2910, 0.0
        %v3665 = vsel %vm2867, %v2927, 0.0
        %v3666 = vsel %vm2868, %v2944, 0.0
        %v3667 = vsel %vm2869, %v2951, 0.0
        %v3668 = vsel %vm2867, %v2968, 0.0
        %v3669 = vsel %vm2868, %v2985, 0.0
        %v3670 = vsel %vm2869, %v2992, 0.0
        %v3671 = vsel %vm2867, %v3009, 0.0
        %v3672 = vsel %vm2868, %v3026, 0.0
        %v3673 = vsel %vm2869, %v3033, 0.0
        %v3674 = vsel %vm2867, %v3050, 0.0
        %v3675 = vsel %vm2868, %v3067, 0.0
        %v3676 = vsel %vm2869, %v3074, 0.0
        %v3677 = vsel %vm2867, %v3091, 0.0
        %v3678 = vsel %vm2868, %v3108, 0.0
        %v3679 = vsel %vm2869, %v3115, 0.0
        %v3680 = vsel %vm2867, %v3132, 0.0
        %v3681 = vsel %vm2868, %v3149, 0.0
        %v3682 = vsel %vm2869, %v3156, 0.0
        %v3683 = vsel %vm2867, %v3173, 0.0
        %v3684 = vsel %vm2868, %v3190, 0.0
        %v3685 = vsel %vm2869, %v3197, 0.0
        %v3686 = vsel %vm2867, %v3214, 0.0
        %v3687 = vsel %vm2868, %v3231, 0.0
        %v3688 = vsel %vm2869, %v3238, 0.0
        %v3689 = vsel %vm2867, %v3255, 0.0
        %v3690 = vsel %vm2868, %v3272, 0.0
        %v3691 = vsel %vm2869, %v3279, 0.0
        %v3692 = vsel %vm2867, %v3296, 0.0
        %v3693 = vsel %vm2868, %v3313, 0.0
        %v3694 = vsel %vm2869, %v3320, 0.0
        %v3695 = vsel %vm2867, %v3337, 0.0
        %v3696 = vsel %vm2868, %v3354, 0.0
        %v3697 = vsel %vm2869, %v3361, 0.0
        %v3698 = vsel %vm2867, %v3378, 0.0
        %v3699 = vsel %vm2868, %v3395, 0.0
        %v3700 = vsel %vm2869, %v3402, 0.0
        %v3701 = vsel %vm2867, %v3419, 0.0
        %v3702 = vsel %vm2868, %v3436, 0.0
        %v3703 = vsel %vm2869, %v3443, 0.0
        %v3704 = vsel %vm2867, %v3460, 0.0
        %v3705 = vsel %vm2868, %v3477, 0.0
        %v3706 = vsel %vm2869, %v3484, 0.0
        %v3707 = vsel %vm2867, %v3501, 0.0
        %v3708 = vsel %vm2868, %v3518, 0.0
        %v3709 = vsel %vm2869, %v3525, 0.0
        %v3710 = vsel %vm2867, %v3542, 0.0
        %v3711 = vsel %vm2868, %v3559, 0.0
        %v3712 = vsel %vm2869, %v3566, 0.0
        %v3713 = vsel %vm2864, %v3583, 0.0
        %v3714 = vsel %vm2865, %v3600, 0.0
        %v3715 = vsel %vm2866, %v3607, 0.0
        %v3716 = vpack.c.bf16 %v3663, %v3662
        %v3717 = vpack.c.bf16 %v3664, %v3664
        %v3718 = vpack.c.bf16 %v3666, %v3665
        %v3719 = vpack.c.bf16 %v3667, %v3667
        %v3720 = vpack.c.bf16 %v3669, %v3668
        %v3721 = vpack.c.bf16 %v3670, %v3670
        %v3722 = vpack.c.bf16 %v3672, %v3671
        %v3723 = vpack.c.bf16 %v3673, %v3673
        %v3724 = vpack.c.bf16 %v3675, %v3674
        %v3725 = vpack.c.bf16 %v3676, %v3676
        %v3726 = vpack.c.bf16 %v3678, %v3677
        %v3727 = vpack.c.bf16 %v3679, %v3679
        %v3728 = vpack.c.bf16 %v3681, %v3680
        %v3729 = vpack.c.bf16 %v3682, %v3682
        %v3730 = vpack.c.bf16 %v3684, %v3683
        %v3731 = vpack.c.bf16 %v3685, %v3685
        %v3732 = vpack.c.bf16 %v3687, %v3686
        %v3733 = vpack.c.bf16 %v3688, %v3688
        %v3734 = vpack.c.bf16 %v3690, %v3689
        %v3735 = vpack.c.bf16 %v3691, %v3691
        %v3736 = vpack.c.bf16 %v3693, %v3692
        %v3737 = vpack.c.bf16 %v3694, %v3694
        %v3738 = vpack.c.bf16 %v3696, %v3695
        %v3739 = vpack.c.bf16 %v3697, %v3697
        %v3740 = vpack.c.bf16 %v3699, %v3698
        %v3741 = vpack.c.bf16 %v3700, %v3700
        %v3742 = vpack.c.bf16 %v3702, %v3701
        %v3743 = vpack.c.bf16 %v3703, %v3703
        %v3744 = vpack.c.bf16 %v3705, %v3704
        %v3745 = vpack.c.bf16 %v3706, %v3706
        %v3746 = vpack.c.bf16 %v3708, %v3707
        %v3747 = vpack.c.bf16 %v3709, %v3709
        %v3748 = vpack.c.bf16 %v3711, %v3710
        %v3749 = vpack.c.bf16 %v3712, %v3712
        %v3750 = vpack.c.bf16 %v3714, %v3713
        %v3751 = vpack.c.bf16 %v3715, %v3715
        %v3752 = vld [vmem:[%s3] sm:$0xf]
        %v3753 = vld [vmem:[%s3 + $0x4] sm:$0xf]
        %v3754 = vld [vmem:[%s3 + $0x8] sm:$0xf]
        %v3755 = vld [vmem:[%s3 + $0xc] sm:$0xf]
        %v3756 = vld [vmem:[%s3 + $0x10] sm:$0xf]
        %v3757 = vld [vmem:[%s3 + $0x14] sm:$0xf]
        %v3758 = vld [vmem:[%s3 + $0x18] sm:$0xf]
        %v3759 = vld [vmem:[%s3 + $0x1c] sm:$0xf]
        %v3760 = vld [vmem:[%s3 + $0x20] sm:$0xf]
        %v3761 = vld [vmem:[%s3 + $0x24] sm:$0xf]
        %v3762 = vld [vmem:[%s3 + $0x28] sm:$0xf]
        %v3763 = vld [vmem:[%s3 + $0x2c] sm:$0xf]
        %v3764 = vld [vmem:[%s3 + $0x30] sm:$0xf]
        %v3765 = vld [vmem:[%s3 + $0x34] sm:$0xf]
        %v3766 = vld [vmem:[%s3 + $0x38] sm:$0xf]
        %v3767 = vld [vmem:[%s3 + $0x3c] sm:$0xf]
        %vm3768 = vsmask.f32 7424
        %v3770 = vshrl.u32 %v3716, 16
        %v3772 = vshll.u32 %v3716, 16
        %v3774 = vrot.slane %v3772, 1
        %v3775 = vor.u32 %v3770, %v3774
        %v3777 = vshll.u32 %v3717, 16
        %v3779 = vrot.slane %v3777, 1
        %v3780 = vsel %vm3768, %v3775, %v3779
        %v3782 = vshrl.u32 %v3718, 16
        %v3784 = vshll.u32 %v3718, 16
        %v3786 = vrot.slane %v3784, 1
        %v3787 = vor.u32 %v3782, %v3786
        %v3789 = vshll.u32 %v3719, 16
        %v3791 = vrot.slane %v3789, 1
        %v3792 = vsel %vm3768, %v3787, %v3791
        %v3794 = vshrl.u32 %v3720, 16
        %v3796 = vshll.u32 %v3720, 16
        %v3798 = vrot.slane %v3796, 1
        %v3799 = vor.u32 %v3794, %v3798
        %v3801 = vshll.u32 %v3721, 16
        %v3803 = vrot.slane %v3801, 1
        %v3804 = vsel %vm3768, %v3799, %v3803
        %v3806 = vshrl.u32 %v3722, 16
        %v3808 = vshll.u32 %v3722, 16
        %v3810 = vrot.slane %v3808, 1
        %v3811 = vor.u32 %v3806, %v3810
        %v3813 = vshll.u32 %v3723, 16
        %v3815 = vrot.slane %v3813, 1
        %v3816 = vsel %vm3768, %v3811, %v3815
        %v3818 = vshrl.u32 %v3724, 16
        %v3820 = vshll.u32 %v3724, 16
        %v3822 = vrot.slane %v3820, 1
        %v3823 = vor.u32 %v3818, %v3822
        %v3825 = vshll.u32 %v3725, 16
        %v3827 = vrot.slane %v3825, 1
        %v3828 = vsel %vm3768, %v3823, %v3827
        %v3830 = vshrl.u32 %v3726, 16
        %v3832 = vshll.u32 %v3726, 16
        %v3834 = vrot.slane %v3832, 1
        %v3835 = vor.u32 %v3830, %v3834
        %v3837 = vshll.u32 %v3727, 16
        %v3839 = vrot.slane %v3837, 1
        %v3840 = vsel %vm3768, %v3835, %v3839
        %v3842 = vshrl.u32 %v3728, 16
        %v3844 = vshll.u32 %v3728, 16
        %v3846 = vrot.slane %v3844, 1
        %v3847 = vor.u32 %v3842, %v3846
        %v3849 = vshll.u32 %v3729, 16
        %v3851 = vrot.slane %v3849, 1
        %v3852 = vsel %vm3768, %v3847, %v3851
        %v3854 = vshrl.u32 %v3730, 16
        %v3856 = vshll.u32 %v3730, 16
        %v3858 = vrot.slane %v3856, 1
        %v3859 = vor.u32 %v3854, %v3858
        %v3861 = vshll.u32 %v3731, 16
        %v3863 = vrot.slane %v3861, 1
        %v3864 = vsel %vm3768, %v3859, %v3863
        %v3866 = vshrl.u32 %v3732, 16
        %v3868 = vshll.u32 %v3732, 16
        %v3870 = vrot.slane %v3868, 1
        %v3871 = vor.u32 %v3866, %v3870
        %v3873 = vshll.u32 %v3733, 16
        %v3875 = vrot.slane %v3873, 1
        %v3876 = vsel %vm3768, %v3871, %v3875
        %v3878 = vshrl.u32 %v3734, 16
        %v3880 = vshll.u32 %v3734, 16
        %v3882 = vrot.slane %v3880, 1
        %v3883 = vor.u32 %v3878, %v3882
        %v3885 = vshll.u32 %v3735, 16
        %v3887 = vrot.slane %v3885, 1
        %v3888 = vsel %vm3768, %v3883, %v3887
        %v3890 = vshrl.u32 %v3736, 16
        %v3892 = vshll.u32 %v3736, 16
        %v3894 = vrot.slane %v3892, 1
        %v3895 = vor.u32 %v3890, %v3894
        %v3897 = vshll.u32 %v3737, 16
        %v3899 = vrot.slane %v3897, 1
        %v3900 = vsel %vm3768, %v3895, %v3899
        %v3902 = vshrl.u32 %v3738, 16
        %v3904 = vshll.u32 %v3738, 16
        %v3906 = vrot.slane %v3904, 1
        %v3907 = vor.u32 %v3902, %v3906
        %v3909 = vshll.u32 %v3739, 16
        %v3911 = vrot.slane %v3909, 1
        %v3912 = vsel %vm3768, %v3907, %v3911
        %v3914 = vshrl.u32 %v3740, 16
        %v3916 = vshll.u32 %v3740, 16
        %v3918 = vrot.slane %v3916, 1
        %v3919 = vor.u32 %v3914, %v3918
        %v3921 = vshll.u32 %v3741, 16
        %v3923 = vrot.slane %v3921, 1
        %v3924 = vsel %vm3768, %v3919, %v3923
        %v3926 = vshrl.u32 %v3742, 16
        %v3928 = vshll.u32 %v3742, 16
        %v3930 = vrot.slane %v3928, 1
        %v3931 = vor.u32 %v3926, %v3930
        %v3933 = vshll.u32 %v3743, 16
        %v3935 = vrot.slane %v3933, 1
        %v3936 = vsel %vm3768, %v3931, %v3935
        %v3938 = vshrl.u32 %v3744, 16
        %v3940 = vshll.u32 %v3744, 16
        %v3942 = vrot.slane %v3940, 1
        %v3943 = vor.u32 %v3938, %v3942
        %v3945 = vshll.u32 %v3745, 16
        %v3947 = vrot.slane %v3945, 1
        %v3948 = vsel %vm3768, %v3943, %v3947
        %v3950 = vshrl.u32 %v3746, 16
        %v3952 = vshll.u32 %v3746, 16
        %v3954 = vrot.slane %v3952, 1
        %v3955 = vor.u32 %v3950, %v3954
        %v3957 = vshll.u32 %v3747, 16
        %v3959 = vrot.slane %v3957, 1
        %v3960 = vsel %vm3768, %v3955, %v3959
        %s3977 = scalar_lea.vmem %s3, 64
        %v3978 = vld [vmem:[%s3977] sm:$0xf]
        %v3979 = vld [vmem:[%s3977 + $0x4] sm:$0xf]
        %v3980 = vld [vmem:[%s3977 + $0x8] sm:$0xf]
        %v3981 = vld [vmem:[%s3977 + $0xc] sm:$0xf]
        %v3982 = vld [vmem:[%s3977 + $0x10] sm:$0xf]
        %v3983 = vld [vmem:[%s3977 + $0x14] sm:$0xf]
        %v3984 = vld [vmem:[%s3977 + $0x18] sm:$0xf]
        %v3985 = vld [vmem:[%s3977 + $0x1c] sm:$0xf]
        %v3986 = vld [vmem:[%s3977 + $0x20] sm:$0xf]
        %v3987 = vld [vmem:[%s3977 + $0x24] sm:$0xf]
        %v3988 = vld [vmem:[%s3977 + $0x28] sm:$0xf]
        %v3989 = vld [vmem:[%s3977 + $0x2c] sm:$0xf]
        %v3990 = vld [vmem:[%s3977 + $0x30] sm:$0xf]
        %v3991 = vld [vmem:[%s3977 + $0x34] sm:$0xf]
        %v3992 = vld [vmem:[%s3977 + $0x38] sm:$0xf]
        %v3993 = vld [vmem:[%s3977 + $0x3c] sm:$0xf]
        %v4010 = vunpack.c.l.b16 %v3978
        %v4011 = vunpack.c.l.b16 %v3979
        %v4012 = vunpack.c.l.b16 %v3980
        %v4013 = vunpack.c.l.b16 %v3981
        %v4014 = vunpack.c.l.b16 %v3982
        %v4015 = vunpack.c.l.b16 %v3983
        %v4016 = vunpack.c.l.b16 %v3984
        %v4017 = vunpack.c.l.b16 %v3985
        %v4018 = vunpack.c.l.b16 %v3986
        %v4019 = vunpack.c.l.b16 %v3987
        %v4020 = vunpack.c.l.b16 %v3988
        %v4021 = vunpack.c.l.b16 %v3989
        %v4022 = vunpack.c.l.b16 %v3990
        %v4023 = vunpack.c.l.b16 %v3991
        %v4024 = vunpack.c.l.b16 %v3992
        %v4025 = vunpack.c.l.b16 %v3993
        %v4026 = vpack.c.b16 %v4011, %v4010
        %v4027 = vpack.c.b16 %v4013, %v4012
        %v4028 = vpack.c.b16 %v4015, %v4014
        %v4029 = vpack.c.b16 %v4017, %v4016
        %v4030 = vpack.c.b16 %v4019, %v4018
        %v4031 = vpack.c.b16 %v4021, %v4020
        %v4032 = vpack.c.b16 %v4023, %v4022
        %v4033 = vpack.c.b16 %v4025, %v4024
        %4042 = vmatprep.subr.bf16.mxu0 0
        %4043 = vmatpush1.bf16.msra.mxu0 %v4026
        %4044 = vmatprep.subr.bf16.mxu0 0
        %4045 = vmatpush1.bf16.msra.mxu0 %v4027
        %4046 = vmatprep.subr.bf16.mxu0 0
        %4047 = vmatpush1.bf16.msra.mxu0 %v4028
        %4048 = vmatprep.subr.bf16.mxu0 0
        %4049 = vmatpush1.bf16.msra.mxu0 %v4029
        %4050 = vmatprep.subr.bf16.mxu0 0
        %4051 = vmatpush1.bf16.msra.mxu0 %v4030
        %4052 = vmatprep.subr.bf16.mxu0 0
        %4053 = vmatpush1.bf16.msra.mxu0 %v4031
        %4054 = vmatprep.subr.bf16.mxu0 0
        %4055 = vmatpush1.bf16.msra.mxu0 %v4032
        %4056 = vmatprep.subr.bf16.mxu0 0
        %4057 = vmatpush1.bf16.msra.mxu0 %v4033
        %4058 = vmatprep.subr.bf16.mxu0 0
        %4059 = vmatpush1.bf16.msra.mxu0 0
        %4060 = vmatprep.subr.bf16.mxu0 0
        %4061 = vmatpush1.bf16.msra.mxu0 0
        %4062 = vmatprep.subr.bf16.mxu0 0
        %4063 = vmatpush1.bf16.msra.mxu0 0
        %4064 = vmatprep.subr.bf16.mxu0 0
        %4065 = vmatpush1.bf16.msra.mxu0 0
        %4066 = vmatprep.subr.bf16.mxu0 0
        %4067 = vmatpush1.bf16.msra.mxu0 0
        %4068 = vmatprep.subr.bf16.mxu0 0
        %4069 = vmatpush1.bf16.msra.mxu0 0
        %4070 = vmatprep.subr.bf16.mxu0 0
        %4071 = vmatpush1.bf16.msra.mxu0 0
        %4072 = vmatprep.subr.bf16.mxu0 0
        %4073 = vmatpush1.bf16.msra.mxu0 0
        %4074 = vmatprep.mubr.bf16.mxu0 0
        %4075 = vmatmul.mubr.bf16.gmra.mrb[0].mxu0 %v3780
        %v4076 = vpop.f32.mrb[0].mxu0
        %v4077 = vadd.f32 0.0, %v4076
        %v4078 = vpop.f32.mrb[0].mxu0
        %v4079 = vpop.f32.mrb[0].mxu0
        %v4080 = vadd.f32 0.0, %v4079
        %v4081 = vpop.f32.mrb[0].mxu0
        %4082 = vmatprep.mubr.bf16.mxu0 0
        %4083 = vmatmul.mubr.bf16.gmra.mrb[0].mxu0 %v3792
        %v4084 = vpop.f32.mrb[0].mxu0
        %v4085 = vadd.f32 0.0, %v4084
        %v4086 = vpop.f32.mrb[0].mxu0
        %v4087 = vpop.f32.mrb[0].mxu0
        %v4088 = vadd.f32 0.0, %v4087
        %v4089 = vpop.f32.mrb[0].mxu0
        %4090 = vmatprep.mubr.bf16.mxu0 0
        %4091 = vmatmul.mubr.bf16.gmra.mrb[0].mxu0 %v3804
        %v4092 = vpop.f32.mrb[0].mxu0
        %v4093 = vadd.f32 0.0, %v4092
        %v4094 = vpop.f32.mrb[0].mxu0
        %v4095 = vpop.f32.mrb[0].mxu0
        %v4096 = vadd.f32 0.0, %v4095
        %v4097 = vpop.f32.mrb[0].mxu0
        %4098 = vmatprep.mubr.bf16.mxu0 0
        %4099 = vmatmul.mubr.bf16.gmra.mrb[0].mxu0 %v3816
        %v4100 = vpop.f32.mrb[0].mxu0
        %v4101 = vadd.f32 0.0, %v4100
        %v4102 = vpop.f32.mrb[0].mxu0
        %v4103 = vpop.f32.mrb[0].mxu0
        %v4104 = vadd.f32 0.0, %v4103
        %v4105 = vpop.f32.mrb[0].mxu0
        %4106 = vmatprep.mubr.bf16.mxu0 0
        %4107 = vmatmul.mubr.bf16.gmra.mrb[0].mxu0 %v3828
        %v4108 = vpop.f32.mrb[0].mxu0
        %v4109 = vadd.f32 0.0, %v4108
        %v4110 = vpop.f32.mrb[0].mxu0
        %v4111 = vpop.f32.mrb[0].mxu0
        %v4112 = vadd.f32 0.0, %v4111
        %v4113 = vpop.f32.mrb[0].mxu0
        %4114 = vmatprep.mubr.bf16.mxu0 0
        %4115 = vmatmul.mubr.bf16.gmra.mrb[0].mxu0 %v3840
        %v4116 = vpop.f32.mrb[0].mxu0
        %v4117 = vadd.f32 0.0, %v4116
        %v4118 = vpop.f32.mrb[0].mxu0
        %v4119 = vpop.f32.mrb[0].mxu0
        %v4120 = vadd.f32 0.0, %v4119
        %v4121 = vpop.f32.mrb[0].mxu0
        %4122 = vmatprep.mubr.bf16.mxu0 0
        %4123 = vmatmul.mubr.bf16.gmra.mrb[0].mxu0 %v3852
        %v4124 = vpop.f32.mrb[0].mxu0
        %v4125 = vadd.f32 0.0, %v4124
        %v4126 = vpop.f32.mrb[0].mxu0
        %v4127 = vpop.f32.mrb[0].mxu0
        %v4128 = vadd.f32 0.0, %v4127
        %v4129 = vpop.f32.mrb[0].mxu0
        %4130 = vmatprep.mubr.bf16.mxu0 0
        %4131 = vmatmul.mubr.bf16.gmra.mrb[0].mxu0 %v3864
        %v4132 = vpop.f32.mrb[0].mxu0
        %v4133 = vadd.f32 0.0, %v4132
        %v4134 = vpop.f32.mrb[0].mxu0
        %v4135 = vpop.f32.mrb[0].mxu0
        %v4136 = vadd.f32 0.0, %v4135
        %v4137 = vpop.f32.mrb[0].mxu0
        %4138 = vmatprep.mubr.bf16.mxu0 0
        %4139 = vmatmul.mubr.bf16.gmra.mrb[0].mxu0 %v3876
        %v4140 = vpop.f32.mrb[0].mxu0
        %v4141 = vadd.f32 0.0, %v4140
        %v4142 = vpop.f32.mrb[0].mxu0
        %v4143 = vpop.f32.mrb[0].mxu0
        %v4144 = vadd.f32 0.0, %v4143
        %v4145 = vpop.f32.mrb[0].mxu0
        %4146 = vmatprep.mubr.bf16.mxu0 0
        %4147 = vmatmul.mubr.bf16.gmra.mrb[0].mxu0 %v3888
        %v4148 = vpop.f32.mrb[0].mxu0
        %v4149 = vadd.f32 0.0, %v4148
        %v4150 = vpop.f32.mrb[0].mxu0
        %v4151 = vpop.f32.mrb[0].mxu0
        %v4152 = vadd.f32 0.0, %v4151
        %v4153 = vpop.f32.mrb[0].mxu0
        %4154 = vmatprep.mubr.bf16.mxu0 0
        %4155 = vmatmul.mubr.bf16.gmra.mrb[0].mxu0 %v3900
        %v4156 = vpop.f32.mrb[0].mxu0
        %v4157 = vadd.f32 0.0, %v4156
        %v4158 = vpop.f32.mrb[0].mxu0
        %v4159 = vpop.f32.mrb[0].mxu0
        %v4160 = vadd.f32 0.0, %v4159
        %v4161 = vpop.f32.mrb[0].mxu0
        %4162 = vmatprep.mubr.bf16.mxu0 0
        %4163 = vmatmul.mubr.bf16.gmra.mrb[0].mxu0 %v3912
        %v4164 = vpop.f32.mrb[0].mxu0
        %v4165 = vadd.f32 0.0, %v4164
        %v4166 = vpop.f32.mrb[0].mxu0
        %v4167 = vpop.f32.mrb[0].mxu0
        %v4168 = vadd.f32 0.0, %v4167
        %v4169 = vpop.f32.mrb[0].mxu0
        %4170 = vmatprep.mubr.bf16.mxu0 0
        %4171 = vmatmul.mubr.bf16.gmra.mrb[0].mxu0 %v3924
        %v4172 = vpop.f32.mrb[0].mxu0
        %v4173 = vadd.f32 0.0, %v4172
        %v4174 = vpop.f32.mrb[0].mxu0
        %v4175 = vpop.f32.mrb[0].mxu0
        %v4176 = vadd.f32 0.0, %v4175
        %v4177 = vpop.f32.mrb[0].mxu0
        %4178 = vmatprep.mubr.bf16.mxu0 0
        %4179 = vmatmul.mubr.bf16.gmra.mrb[0].mxu0 %v3936
        %v4180 = vpop.f32.mrb[0].mxu0
        %v4181 = vadd.f32 0.0, %v4180
        %v4182 = vpop.f32.mrb[0].mxu0
        %v4183 = vpop.f32.mrb[0].mxu0
        %v4184 = vadd.f32 0.0, %v4183
        %v4185 = vpop.f32.mrb[0].mxu0
        %4186 = vmatprep.mubr.bf16.mxu0 0
        %4187 = vmatmul.mubr.bf16.gmra.mrb[0].mxu0 %v3948
        %v4188 = vpop.f32.mrb[0].mxu0
        %v4189 = vadd.f32 0.0, %v4188
        %v4190 = vpop.f32.mrb[0].mxu0
        %v4191 = vpop.f32.mrb[0].mxu0
        %v4192 = vadd.f32 0.0, %v4191
        %v4193 = vpop.f32.mrb[0].mxu0
        %4194 = vmatprep.mubr.bf16.mxu0 0
        %4195 = vmatmul.mubr.bf16.gmra.mrb[0].mxu0 %v3960
        %v4196 = vpop.f32.mrb[0].mxu0
        %v4197 = vadd.f32 0.0, %v4196
        %v4198 = vpop.f32.mrb[0].mxu0
        %v4199 = vpop.f32.mrb[0].mxu0
        %v4200 = vadd.f32 0.0, %v4199
        %v4201 = vpop.f32.mrb[0].mxu0
        %4202 = vdwg.mxu0
        %v4219 = vunpack.c.l.b16 %v3752
        %v4220 = vunpack.c.l.b16 %v3753
        %v4221 = vunpack.c.l.b16 %v3754
        %v4222 = vunpack.c.l.b16 %v3755
        %v4223 = vunpack.c.l.b16 %v3756
        %v4224 = vunpack.c.l.b16 %v3757
        %v4225 = vunpack.c.l.b16 %v3758
        %v4226 = vunpack.c.l.b16 %v3759
        %v4227 = vunpack.c.l.b16 %v3760
        %v4228 = vunpack.c.l.b16 %v3761
        %v4229 = vunpack.c.l.b16 %v3762
        %v4230 = vunpack.c.l.b16 %v3763
        %v4231 = vunpack.c.l.b16 %v3764
        %v4232 = vunpack.c.l.b16 %v3765
        %v4233 = vunpack.c.l.b16 %v3766
        %v4234 = vunpack.c.l.b16 %v3767
        %v4235 = vpack.c.b16 %v4220, %v4219
        %v4236 = vpack.c.b16 %v4222, %v4221
        %v4237 = vpack.c.b16 %v4224, %v4223
        %v4238 = vpack.c.b16 %v4226, %v4225
        %v4239 = vpack.c.b16 %v4228, %v4227
        %v4240 = vpack.c.b16 %v4230, %v4229
        %v4241 = vpack.c.b16 %v4232, %v4231
        %v4242 = vpack.c.b16 %v4234, %v4233
        %4251 = vmatprep.subr.bf16.mxu0 0
        %4252 = vmatpush1.bf16.msra.mxu0 %v4235
        %4253 = vmatprep.subr.bf16.mxu0 0
        %4254 = vmatpush1.bf16.msra.mxu0 %v4236
        %4255 = vmatprep.subr.bf16.mxu0 0
        %4256 = vmatpush1.bf16.msra.mxu0 %v4237
        %4257 = vmatprep.subr.bf16.mxu0 0
        %4258 = vmatpush1.bf16.msra.mxu0 %v4238
        %4259 = vmatprep.subr.bf16.mxu0 0
        %4260 = vmatpush1.bf16.msra.mxu0 %v4239
        %4261 = vmatprep.subr.bf16.mxu0 0
        %4262 = vmatpush1.bf16.msra.mxu0 %v4240
        %4263 = vmatprep.subr.bf16.mxu0 0
        %4264 = vmatpush1.bf16.msra.mxu0 %v4241
        %4265 = vmatprep.subr.bf16.mxu0 0
        %4266 = vmatpush1.bf16.msra.mxu0 %v4242
        %4267 = vmatprep.subr.bf16.mxu0 0
        %4268 = vmatpush1.bf16.msra.mxu0 0
        %4269 = vmatprep.subr.bf16.mxu0 0
        %4270 = vmatpush1.bf16.msra.mxu0 0
        %4271 = vmatprep.subr.bf16.mxu0 0
        %4272 = vmatpush1.bf16.msra.mxu0 0
        %4273 = vmatprep.subr.bf16.mxu0 0
        %4274 = vmatpush1.bf16.msra.mxu0 0
        %4275 = vmatprep.subr.bf16.mxu0 0
        %4276 = vmatpush1.bf16.msra.mxu0 0
        %4277 = vmatprep.subr.bf16.mxu0 0
        %4278 = vmatpush1.bf16.msra.mxu0 0
        %4279 = vmatprep.subr.bf16.mxu0 0
        %4280 = vmatpush1.bf16.msra.mxu0 0
        %4281 = vmatprep.subr.bf16.mxu0 0
        %4282 = vmatpush1.bf16.msra.mxu0 0
        %4283 = vmatprep.mubr.bf16.mxu0 0
        %4284 = vmatmul.mubr.bf16.gmra.mrb[0].mxu0 %v3716
        %v4285 = vpop.f32.mrb[0].mxu0
        %v4286 = vadd.f32 %v4077, %v4285
        %v4287 = vpop.f32.mrb[0].mxu0
        %v4288 = vpop.f32.mrb[0].mxu0
        %v4289 = vadd.f32 %v4080, %v4288
        %v4290 = vpop.f32.mrb[0].mxu0
        %4291 = vmatprep.mubr.bf16.mxu0 0
        %4292 = vmatmul.mubr.bf16.gmra.mrb[0].mxu0 %v3718
        %v4293 = vpop.f32.mrb[0].mxu0
        %v4294 = vadd.f32 %v4085, %v4293
        %v4295 = vpop.f32.mrb[0].mxu0
        %v4296 = vpop.f32.mrb[0].mxu0
        %v4297 = vadd.f32 %v4088, %v4296
        %v4298 = vpop.f32.mrb[0].mxu0
        %4299 = vmatprep.mubr.bf16.mxu0 0
        %4300 = vmatmul.mubr.bf16.gmra.mrb[0].mxu0 %v3720
        %v4301 = vpop.f32.mrb[0].mxu0
        %v4302 = vadd.f32 %v4093, %v4301
        %v4303 = vpop.f32.mrb[0].mxu0
        %v4304 = vpop.f32.mrb[0].mxu0
        %v4305 = vadd.f32 %v4096, %v4304
        %v4306 = vpop.f32.mrb[0].mxu0
        %4307 = vmatprep.mubr.bf16.mxu0 0
        %4308 = vmatmul.mubr.bf16.gmra.mrb[0].mxu0 %v3722
        %v4309 = vpop.f32.mrb[0].mxu0
        %v4310 = vadd.f32 %v4101, %v4309
        %v4311 = vpop.f32.mrb[0].mxu0
        %v4312 = vpop.f32.mrb[0].mxu0
        %v4313 = vadd.f32 %v4104, %v4312
        %v4314 = vpop.f32.mrb[0].mxu0
        %4315 = vmatprep.mubr.bf16.mxu0 0
        %4316 = vmatmul.mubr.bf16.gmra.mrb[0].mxu0 %v3724
        %v4317 = vpop.f32.mrb[0].mxu0
        %v4318 = vadd.f32 %v4109, %v4317
        %v4319 = vpop.f32.mrb[0].mxu0
        %v4320 = vpop.f32.mrb[0].mxu0
        %v4321 = vadd.f32 %v4112, %v4320
        %v4322 = vpop.f32.mrb[0].mxu0
        %4323 = vmatprep.mubr.bf16.mxu0 0
        %4324 = vmatmul.mubr.bf16.gmra.mrb[0].mxu0 %v3726
        %v4325 = vpop.f32.mrb[0].mxu0
        %v4326 = vadd.f32 %v4117, %v4325
        %v4327 = vpop.f32.mrb[0].mxu0
        %v4328 = vpop.f32.mrb[0].mxu0
        %v4329 = vadd.f32 %v4120, %v4328
        %v4330 = vpop.f32.mrb[0].mxu0
        %4331 = vmatprep.mubr.bf16.mxu0 0
        %4332 = vmatmul.mubr.bf16.gmra.mrb[0].mxu0 %v3728
        %v4333 = vpop.f32.mrb[0].mxu0
        %v4334 = vadd.f32 %v4125, %v4333
        %v4335 = vpop.f32.mrb[0].mxu0
        %v4336 = vpop.f32.mrb[0].mxu0
        %v4337 = vadd.f32 %v4128, %v4336
        %v4338 = vpop.f32.mrb[0].mxu0
        %4339 = vmatprep.mubr.bf16.mxu0 0
        %4340 = vmatmul.mubr.bf16.gmra.mrb[0].mxu0 %v3730
        %v4341 = vpop.f32.mrb[0].mxu0
        %v4342 = vadd.f32 %v4133, %v4341
        %v4343 = vpop.f32.mrb[0].mxu0
        %v4344 = vpop.f32.mrb[0].mxu0
        %v4345 = vadd.f32 %v4136, %v4344
        %v4346 = vpop.f32.mrb[0].mxu0
        %4347 = vmatprep.mubr.bf16.mxu0 0
        %4348 = vmatmul.mubr.bf16.gmra.mrb[0].mxu0 %v3732
        %v4349 = vpop.f32.mrb[0].mxu0
        %v4350 = vadd.f32 %v4141, %v4349
        %v4351 = vpop.f32.mrb[0].mxu0
        %v4352 = vpop.f32.mrb[0].mxu0
        %v4353 = vadd.f32 %v4144, %v4352
        %v4354 = vpop.f32.mrb[0].mxu0
        %4355 = vmatprep.mubr.bf16.mxu0 0
        %4356 = vmatmul.mubr.bf16.gmra.mrb[0].mxu0 %v3734
        %v4357 = vpop.f32.mrb[0].mxu0
        %v4358 = vadd.f32 %v4149, %v4357
        %v4359 = vpop.f32.mrb[0].mxu0
        %v4360 = vpop.f32.mrb[0].mxu0
        %v4361 = vadd.f32 %v4152, %v4360
        %v4362 = vpop.f32.mrb[0].mxu0
        %4363 = vmatprep.mubr.bf16.mxu0 0
        %4364 = vmatmul.mubr.bf16.gmra.mrb[0].mxu0 %v3736
        %v4365 = vpop.f32.mrb[0].mxu0
        %v4366 = vadd.f32 %v4157, %v4365
        %v4367 = vpop.f32.mrb[0].mxu0
        %v4368 = vpop.f32.mrb[0].mxu0
        %v4369 = vadd.f32 %v4160, %v4368
        %v4370 = vpop.f32.mrb[0].mxu0
        %4371 = vmatprep.mubr.bf16.mxu0 0
        %4372 = vmatmul.mubr.bf16.gmra.mrb[0].mxu0 %v3738
        %v4373 = vpop.f32.mrb[0].mxu0
        %v4374 = vadd.f32 %v4165, %v4373
        %v4375 = vpop.f32.mrb[0].mxu0
        %v4376 = vpop.f32.mrb[0].mxu0
        %v4377 = vadd.f32 %v4168, %v4376
        %v4378 = vpop.f32.mrb[0].mxu0
        %4379 = vmatprep.mubr.bf16.mxu0 0
        %4380 = vmatmul.mubr.bf16.gmra.mrb[0].mxu0 %v3740
        %v4381 = vpop.f32.mrb[0].mxu0
        %v4382 = vadd.f32 %v4173, %v4381
        %v4383 = vpop.f32.mrb[0].mxu0
        %v4384 = vpop.f32.mrb[0].mxu0
        %v4385 = vadd.f32 %v4176, %v4384
        %v4386 = vpop.f32.mrb[0].mxu0
        %4387 = vmatprep.mubr.bf16.mxu0 0
        %4388 = vmatmul.mubr.bf16.gmra.mrb[0].mxu0 %v3742
        %v4389 = vpop.f32.mrb[0].mxu0
        %v4390 = vadd.f32 %v4181, %v4389
        %v4391 = vpop.f32.mrb[0].mxu0
        %v4392 = vpop.f32.mrb[0].mxu0
        %v4393 = vadd.f32 %v4184, %v4392
        %v4394 = vpop.f32.mrb[0].mxu0
        %4395 = vmatprep.mubr.bf16.mxu0 0
        %4396 = vmatmul.mubr.bf16.gmra.mrb[0].mxu0 %v3744
        %v4397 = vpop.f32.mrb[0].mxu0
        %v4398 = vadd.f32 %v4189, %v4397
        %v4399 = vpop.f32.mrb[0].mxu0
        %v4400 = vpop.f32.mrb[0].mxu0
        %v4401 = vadd.f32 %v4192, %v4400
        %v4402 = vpop.f32.mrb[0].mxu0
        %4403 = vmatprep.mubr.bf16.mxu0 0
        %4404 = vmatmul.mubr.bf16.gmra.mrb[0].mxu0 %v3746
        %v4405 = vpop.f32.mrb[0].mxu0
        %v4406 = vadd.f32 %v4197, %v4405
        %v4407 = vpop.f32.mrb[0].mxu0
        %v4408 = vpop.f32.mrb[0].mxu0
        %v4409 = vadd.f32 %v4200, %v4408
        %v4410 = vpop.f32.mrb[0].mxu0
        %4411 = vdwg.mxu0
        %vm4444 = vcmask 1046528
        %v4445 = vrot.slane %v3716, 1
        %v4446 = vrot.slane %v3717, 1
        %v4447 = vsel %vm4444, %v4445, %v4446
        %v4448 = vrot.slane %v3718, 1
        %v4449 = vrot.slane %v3719, 1
        %v4450 = vsel %vm4444, %v4448, %v4449
        %v4451 = vrot.slane %v3720, 1
        %v4452 = vrot.slane %v3721, 1
        %v4453 = vsel %vm4444, %v4451, %v4452
        %v4454 = vrot.slane %v3722, 1
        %v4455 = vrot.slane %v3723, 1
        %v4456 = vsel %vm4444, %v4454, %v4455
        %v4457 = vrot.slane %v3724, 1
        %v4458 = vrot.slane %v3725, 1
        %v4459 = vsel %vm4444, %v4457, %v4458
        %v4460 = vrot.slane %v3726, 1
        %v4461 = vrot.slane %v3727, 1
        %v4462 = vsel %vm4444, %v4460, %v4461
        %v4463 = vrot.slane %v3728, 1
        %v4464 = vrot.slane %v3729, 1
        %v4465 = vsel %vm4444, %v4463, %v4464
        %v4466 = vrot.slane %v3730, 1
        %v4467 = vrot.slane %v3731, 1
        %v4468 = vsel %vm4444, %v4466, %v4467
        %v4469 = vrot.slane %v3732, 1
        %v4470 = vrot.slane %v3733, 1
        %v4471 = vsel %vm4444, %v4469, %v4470
        %v4472 = vrot.slane %v3734, 1
        %v4473 = vrot.slane %v3735, 1
        %v4474 = vsel %vm4444, %v4472, %v4473
        %v4475 = vrot.slane %v3736, 1
        %v4476 = vrot.slane %v3737, 1
        %v4477 = vsel %vm4444, %v4475, %v4476
        %v4478 = vrot.slane %v3738, 1
        %v4479 = vrot.slane %v3739, 1
        %v4480 = vsel %vm4444, %v4478, %v4479
        %v4481 = vrot.slane %v3740, 1
        %v4482 = vrot.slane %v3741, 1
        %v4483 = vsel %vm4444, %v4481, %v4482
        %v4484 = vrot.slane %v3742, 1
        %v4485 = vrot.slane %v3743, 1
        %v4486 = vsel %vm4444, %v4484, %v4485
        %v4487 = vrot.slane %v3744, 1
        %v4488 = vrot.slane %v3745, 1
        %v4489 = vsel %vm4444, %v4487, %v4488
        %v4490 = vrot.slane %v3746, 1
        %v4491 = vrot.slane %v3747, 1
        %v4492 = vsel %vm4444, %v4490, %v4491
        %s4509 = scalar_lea.vmem %s3, 128
        %v4510 = vld [vmem:[%s4509] sm:$0xf]
        %v4511 = vld [vmem:[%s4509 + $0x4] sm:$0xf]
        %v4512 = vld [vmem:[%s4509 + $0x8] sm:$0xf]
        %v4513 = vld [vmem:[%s4509 + $0xc] sm:$0xf]
        %v4514 = vld [vmem:[%s4509 + $0x10] sm:$0xf]
        %v4515 = vld [vmem:[%s4509 + $0x14] sm:$0xf]
        %v4516 = vld [vmem:[%s4509 + $0x18] sm:$0xf]
        %v4517 = vld [vmem:[%s4509 + $0x1c] sm:$0xf]
        %v4518 = vld [vmem:[%s4509 + $0x20] sm:$0xf]
        %v4519 = vld [vmem:[%s4509 + $0x24] sm:$0xf]
        %v4520 = vld [vmem:[%s4509 + $0x28] sm:$0xf]
        %v4521 = vld [vmem:[%s4509 + $0x2c] sm:$0xf]
        %v4522 = vld [vmem:[%s4509 + $0x30] sm:$0xf]
        %v4523 = vld [vmem:[%s4509 + $0x34] sm:$0xf]
        %v4524 = vld [vmem:[%s4509 + $0x38] sm:$0xf]
        %v4525 = vld [vmem:[%s4509 + $0x3c] sm:$0xf]
        %v4542 = vunpack.c.l.b16 %v4510
        %v4543 = vunpack.c.l.b16 %v4511
        %v4544 = vunpack.c.l.b16 %v4512
        %v4545 = vunpack.c.l.b16 %v4513
        %v4546 = vunpack.c.l.b16 %v4514
        %v4547 = vunpack.c.l.b16 %v4515
        %v4548 = vunpack.c.l.b16 %v4516
        %v4549 = vunpack.c.l.b16 %v4517
        %v4550 = vunpack.c.l.b16 %v4518
        %v4551 = vunpack.c.l.b16 %v4519
        %v4552 = vunpack.c.l.b16 %v4520
        %v4553 = vunpack.c.l.b16 %v4521
        %v4554 = vunpack.c.l.b16 %v4522
        %v4555 = vunpack.c.l.b16 %v4523
        %v4556 = vunpack.c.l.b16 %v4524
        %v4557 = vunpack.c.l.b16 %v4525
        %v4558 = vpack.c.b16 %v4543, %v4542
        %v4559 = vpack.c.b16 %v4545, %v4544
        %v4560 = vpack.c.b16 %v4547, %v4546
        %v4561 = vpack.c.b16 %v4549, %v4548
        %v4562 = vpack.c.b16 %v4551, %v4550
        %v4563 = vpack.c.b16 %v4553, %v4552
        %v4564 = vpack.c.b16 %v4555, %v4554
        %v4565 = vpack.c.b16 %v4557, %v4556
        %4574 = vmatprep.subr.bf16.mxu0 0
        %4575 = vmatpush1.bf16.msra.mxu0 %v4558
        %4576 = vmatprep.subr.bf16.mxu0 0
        %4577 = vmatpush1.bf16.msra.mxu0 %v4559
        %4578 = vmatprep.subr.bf16.mxu0 0
        %4579 = vmatpush1.bf16.msra.mxu0 %v4560
        %4580 = vmatprep.subr.bf16.mxu0 0
        %4581 = vmatpush1.bf16.msra.mxu0 %v4561
        %4582 = vmatprep.subr.bf16.mxu0 0
        %4583 = vmatpush1.bf16.msra.mxu0 %v4562
        %4584 = vmatprep.subr.bf16.mxu0 0
        %4585 = vmatpush1.bf16.msra.mxu0 %v4563
        %4586 = vmatprep.subr.bf16.mxu0 0
        %4587 = vmatpush1.bf16.msra.mxu0 %v4564
        %4588 = vmatprep.subr.bf16.mxu0 0
        %4589 = vmatpush1.bf16.msra.mxu0 %v4565
        %4590 = vmatprep.subr.bf16.mxu0 0
        %4591 = vmatpush1.bf16.msra.mxu0 0
        %4592 = vmatprep.subr.bf16.mxu0 0
        %4593 = vmatpush1.bf16.msra.mxu0 0
        %4594 = vmatprep.subr.bf16.mxu0 0
        %4595 = vmatpush1.bf16.msra.mxu0 0
        %4596 = vmatprep.subr.bf16.mxu0 0
        %4597 = vmatpush1.bf16.msra.mxu0 0
        %4598 = vmatprep.subr.bf16.mxu0 0
        %4599 = vmatpush1.bf16.msra.mxu0 0
        %4600 = vmatprep.subr.bf16.mxu0 0
        %4601 = vmatpush1.bf16.msra.mxu0 0
        %4602 = vmatprep.subr.bf16.mxu0 0
        %4603 = vmatpush1.bf16.msra.mxu0 0
        %4604 = vmatprep.subr.bf16.mxu0 0
        %4605 = vmatpush1.bf16.msra.mxu0 0
        %4606 = vmatprep.mubr.bf16.mxu0 0
        %4607 = vmatmul.mubr.bf16.gmra.mrb[0].mxu0 %v4447
        %v4608 = vpop.f32.mrb[0].mxu0
        %v4609 = vadd.f32 0.0, %v4608
        %v4610 = vpop.f32.mrb[0].mxu0
        %v4611 = vpop.f32.mrb[0].mxu0
        %v4612 = vadd.f32 0.0, %v4611
        %v4613 = vpop.f32.mrb[0].mxu0
        %4614 = vmatprep.mubr.bf16.mxu0 0
        %4615 = vmatmul.mubr.bf16.gmra.mrb[0].mxu0 %v4450
        %v4616 = vpop.f32.mrb[0].mxu0
        %v4617 = vadd.f32 0.0, %v4616
        %v4618 = vpop.f32.mrb[0].mxu0
        %v4619 = vpop.f32.mrb[0].mxu0
        %v4620 = vadd.f32 0.0, %v4619
        %v4621 = vpop.f32.mrb[0].mxu0
        %4622 = vmatprep.mubr.bf16.mxu0 0
        %4623 = vmatmul.mubr.bf16.gmra.mrb[0].mxu0 %v4453
        %v4624 = vpop.f32.mrb[0].mxu0
        %v4625 = vadd.f32 0.0, %v4624
        %v4626 = vpop.f32.mrb[0].mxu0
        %v4627 = vpop.f32.mrb[0].mxu0
        %v4628 = vadd.f32 0.0, %v4627
        %v4629 = vpop.f32.mrb[0].mxu0
        %4630 = vmatprep.mubr.bf16.mxu0 0
        %4631 = vmatmul.mubr.bf16.gmra.mrb[0].mxu0 %v4456
        %v4632 = vpop.f32.mrb[0].mxu0
        %v4633 = vadd.f32 0.0, %v4632
        %v4634 = vpop.f32.mrb[0].mxu0
        %v4635 = vpop.f32.mrb[0].mxu0
        %v4636 = vadd.f32 0.0, %v4635
        %v4637 = vpop.f32.mrb[0].mxu0
        %4638 = vmatprep.mubr.bf16.mxu0 0
        %4639 = vmatmul.mubr.bf16.gmra.mrb[0].mxu0 %v4459
        %v4640 = vpop.f32.mrb[0].mxu0
        %v4641 = vadd.f32 0.0, %v4640
        %v4642 = vpop.f32.mrb[0].mxu0
        %v4643 = vpop.f32.mrb[0].mxu0
        %v4644 = vadd.f32 0.0, %v4643
        %v4645 = vpop.f32.mrb[0].mxu0
        %4646 = vmatprep.mubr.bf16.mxu0 0
        %4647 = vmatmul.mubr.bf16.gmra.mrb[0].mxu0 %v4462
        %v4648 = vpop.f32.mrb[0].mxu0
        %v4649 = vadd.f32 0.0, %v4648
        %v4650 = vpop.f32.mrb[0].mxu0
        %v4651 = vpop.f32.mrb[0].mxu0
        %v4652 = vadd.f32 0.0, %v4651
        %v4653 = vpop.f32.mrb[0].mxu0
        %4654 = vmatprep.mubr.bf16.mxu0 0
        %4655 = vmatmul.mubr.bf16.gmra.mrb[0].mxu0 %v4465
        %v4656 = vpop.f32.mrb[0].mxu0
        %v4657 = vadd.f32 0.0, %v4656
        %v4658 = vpop.f32.mrb[0].mxu0
        %v4659 = vpop.f32.mrb[0].mxu0
        %v4660 = vadd.f32 0.0, %v4659
        %v4661 = vpop.f32.mrb[0].mxu0
        %4662 = vmatprep.mubr.bf16.mxu0 0
        %4663 = vmatmul.mubr.bf16.gmra.mrb[0].mxu0 %v4468
        %v4664 = vpop.f32.mrb[0].mxu0
        %v4665 = vadd.f32 0.0, %v4664
        %v4666 = vpop.f32.mrb[0].mxu0
        %v4667 = vpop.f32.mrb[0].mxu0
        %v4668 = vadd.f32 0.0, %v4667
        %v4669 = vpop.f32.mrb[0].mxu0
        %4670 = vmatprep.mubr.bf16.mxu0 0
        %4671 = vmatmul.mubr.bf16.gmra.mrb[0].mxu0 %v4471
        %v4672 = vpop.f32.mrb[0].mxu0
        %v4673 = vadd.f32 0.0, %v4672
        %v4674 = vpop.f32.mrb[0].mxu0
        %v4675 = vpop.f32.mrb[0].mxu0
        %v4676 = vadd.f32 0.0, %v4675
        %v4677 = vpop.f32.mrb[0].mxu0
        %4678 = vmatprep.mubr.bf16.mxu0 0
        %4679 = vmatmul.mubr.bf16.gmra.mrb[0].mxu0 %v4474
        %v4680 = vpop.f32.mrb[0].mxu0
        %v4681 = vadd.f32 0.0, %v4680
        %v4682 = vpop.f32.mrb[0].mxu0
        %v4683 = vpop.f32.mrb[0].mxu0
        %v4684 = vadd.f32 0.0, %v4683
        %v4685 = vpop.f32.mrb[0].mxu0
        %4686 = vmatprep.mubr.bf16.mxu0 0
        %4687 = vmatmul.mubr.bf16.gmra.mrb[0].mxu0 %v4477
        %v4688 = vpop.f32.mrb[0].mxu0
        %v4689 = vadd.f32 0.0, %v4688
        %v4690 = vpop.f32.mrb[0].mxu0
        %v4691 = vpop.f32.mrb[0].mxu0
        %v4692 = vadd.f32 0.0, %v4691
        %v4693 = vpop.f32.mrb[0].mxu0
        %4694 = vmatprep.mubr.bf16.mxu0 0
        %4695 = vmatmul.mubr.bf16.gmra.mrb[0].mxu0 %v4480
        %v4696 = vpop.f32.mrb[0].mxu0
        %v4697 = vadd.f32 0.0, %v4696
        %v4698 = vpop.f32.mrb[0].mxu0
        %v4699 = vpop.f32.mrb[0].mxu0
        %v4700 = vadd.f32 0.0, %v4699
        %v4701 = vpop.f32.mrb[0].mxu0
        %4702 = vmatprep.mubr.bf16.mxu0 0
        %4703 = vmatmul.mubr.bf16.gmra.mrb[0].mxu0 %v4483
        %v4704 = vpop.f32.mrb[0].mxu0
        %v4705 = vadd.f32 0.0, %v4704
        %v4706 = vpop.f32.mrb[0].mxu0
        %v4707 = vpop.f32.mrb[0].mxu0
        %v4708 = vadd.f32 0.0, %v4707
        %v4709 = vpop.f32.mrb[0].mxu0
        %4710 = vmatprep.mubr.bf16.mxu0 0
        %4711 = vmatmul.mubr.bf16.gmra.mrb[0].mxu0 %v4486
        %v4712 = vpop.f32.mrb[0].mxu0
        %v4713 = vadd.f32 0.0, %v4712
        %v4714 = vpop.f32.mrb[0].mxu0
        %v4715 = vpop.f32.mrb[0].mxu0
        %v4716 = vadd.f32 0.0, %v4715
        %v4717 = vpop.f32.mrb[0].mxu0
        %4718 = vmatprep.mubr.bf16.mxu0 0
        %4719 = vmatmul.mubr.bf16.gmra.mrb[0].mxu0 %v4489
        %v4720 = vpop.f32.mrb[0].mxu0
        %v4721 = vadd.f32 0.0, %v4720
        %v4722 = vpop.f32.mrb[0].mxu0
        %v4723 = vpop.f32.mrb[0].mxu0
        %v4724 = vadd.f32 0.0, %v4723
        %v4725 = vpop.f32.mrb[0].mxu0
        %4726 = vmatprep.mubr.bf16.mxu0 0
        %4727 = vmatmul.mubr.bf16.gmra.mrb[0].mxu0 %v4492
        %v4728 = vpop.f32.mrb[0].mxu0
        %v4729 = vadd.f32 0.0, %v4728
        %v4730 = vpop.f32.mrb[0].mxu0
        %v4731 = vpop.f32.mrb[0].mxu0
        %v4732 = vadd.f32 0.0, %v4731
        %v4733 = vpop.f32.mrb[0].mxu0
        %4734 = vdwg.mxu0
        %v4735 = vadd.f32 %v4286, %v4609
        %v4736 = vadd.f32 %v4289, %v4612
        %v4737 = vadd.f32 %v4294, %v4617
        %v4738 = vadd.f32 %v4297, %v4620
        %v4739 = vadd.f32 %v4302, %v4625
        %v4740 = vadd.f32 %v4305, %v4628
        %v4741 = vadd.f32 %v4310, %v4633
        %v4742 = vadd.f32 %v4313, %v4636
        %v4743 = vadd.f32 %v4318, %v4641
        %v4744 = vadd.f32 %v4321, %v4644
        %v4745 = vadd.f32 %v4326, %v4649
        %v4746 = vadd.f32 %v4329, %v4652
        %v4747 = vadd.f32 %v4334, %v4657
        %v4748 = vadd.f32 %v4337, %v4660
        %v4749 = vadd.f32 %v4342, %v4665
        %v4750 = vadd.f32 %v4345, %v4668
        %v4751 = vadd.f32 %v4350, %v4673
        %v4752 = vadd.f32 %v4353, %v4676
        %v4753 = vadd.f32 %v4358, %v4681
        %v4754 = vadd.f32 %v4361, %v4684
        %v4755 = vadd.f32 %v4366, %v4689
        %v4756 = vadd.f32 %v4369, %v4692
        %v4757 = vadd.f32 %v4374, %v4697
        %v4758 = vadd.f32 %v4377, %v4700
        %v4759 = vadd.f32 %v4382, %v4705
        %v4760 = vadd.f32 %v4385, %v4708
        %v4761 = vadd.f32 %v4390, %v4713
        %v4762 = vadd.f32 %v4393, %v4716
        %v4763 = vadd.f32 %v4398, %v4721
        %v4764 = vadd.f32 %v4401, %v4724
        %v4765 = vadd.f32 %v4406, %v4729
        %v4766 = vadd.f32 %v4409, %v4732
        %s4767 = scalar_lea.vmem %s3, 192
        %v4768 = vld [vmem:[%s4767] sm:$0xf]
        %v4769 = vld [vmem:[%s4767 + $0x4] sm:$0xf]
        %v4770 = vld [vmem:[%s4767 + $0x8] sm:$0xf]
        %v4771 = vld [vmem:[%s4767 + $0xc] sm:$0xf]
        %v4772 = vld [vmem:[%s4767 + $0x10] sm:$0xf]
        %v4773 = vld [vmem:[%s4767 + $0x14] sm:$0xf]
        %v4774 = vld [vmem:[%s4767 + $0x18] sm:$0xf]
        %v4775 = vld [vmem:[%s4767 + $0x1c] sm:$0xf]
        %v4776 = vld [vmem:[%s4767 + $0x20] sm:$0xf]
        %v4777 = vld [vmem:[%s4767 + $0x24] sm:$0xf]
        %v4778 = vld [vmem:[%s4767 + $0x28] sm:$0xf]
        %v4779 = vld [vmem:[%s4767 + $0x2c] sm:$0xf]
        %v4780 = vld [vmem:[%s4767 + $0x30] sm:$0xf]
        %v4781 = vld [vmem:[%s4767 + $0x34] sm:$0xf]
        %v4782 = vld [vmem:[%s4767 + $0x38] sm:$0xf]
        %v4783 = vld [vmem:[%s4767 + $0x3c] sm:$0xf]
        %v4800 = vunpack.c.l.b16 %v4768
        %v4801 = vunpack.c.l.b16 %v4769
        %v4802 = vunpack.c.l.b16 %v4770
        %v4803 = vunpack.c.l.b16 %v4771
        %v4804 = vunpack.c.l.b16 %v4772
        %v4805 = vunpack.c.l.b16 %v4773
        %v4806 = vunpack.c.l.b16 %v4774
        %v4807 = vunpack.c.l.b16 %v4775
        %v4808 = vunpack.c.l.b16 %v4776
        %v4809 = vunpack.c.l.b16 %v4777
        %v4810 = vunpack.c.l.b16 %v4778
        %v4811 = vunpack.c.l.b16 %v4779
        %v4812 = vunpack.c.l.b16 %v4780
        %v4813 = vunpack.c.l.b16 %v4781
        %v4814 = vunpack.c.l.b16 %v4782
        %v4815 = vunpack.c.l.b16 %v4783
        %v4816 = vpack.c.b16 %v4801, %v4800
        %v4817 = vpack.c.b16 %v4803, %v4802
        %v4818 = vpack.c.b16 %v4805, %v4804
        %v4819 = vpack.c.b16 %v4807, %v4806
        %v4820 = vpack.c.b16 %v4809, %v4808
        %v4821 = vpack.c.b16 %v4811, %v4810
        %v4822 = vpack.c.b16 %v4813, %v4812
        %v4823 = vpack.c.b16 %v4815, %v4814
        %4832 = vmatprep.subr.bf16.mxu0 0
        %4833 = vmatpush1.bf16.msra.mxu0 %v4816
        %4834 = vmatprep.subr.bf16.mxu0 0
        %4835 = vmatpush1.bf16.msra.mxu0 %v4817
        %4836 = vmatprep.subr.bf16.mxu0 0
        %4837 = vmatpush1.bf16.msra.mxu0 %v4818
        %4838 = vmatprep.subr.bf16.mxu0 0
        %4839 = vmatpush1.bf16.msra.mxu0 %v4819
        %4840 = vmatprep.subr.bf16.mxu0 0
        %4841 = vmatpush1.bf16.msra.mxu0 %v4820
        %4842 = vmatprep.subr.bf16.mxu0 0
        %4843 = vmatpush1.bf16.msra.mxu0 %v4821
        %4844 = vmatprep.subr.bf16.mxu0 0
        %4845 = vmatpush1.bf16.msra.mxu0 %v4822
        %4846 = vmatprep.subr.bf16.mxu0 0
        %4847 = vmatpush1.bf16.msra.mxu0 %v4823
        %4848 = vmatprep.subr.bf16.mxu0 0
        %4849 = vmatpush1.bf16.msra.mxu0 0
        %4850 = vmatprep.subr.bf16.mxu0 0
        %4851 = vmatpush1.bf16.msra.mxu0 0
        %4852 = vmatprep.subr.bf16.mxu0 0
        %4853 = vmatpush1.bf16.msra.mxu0 0
        %4854 = vmatprep.subr.bf16.mxu0 0
        %4855 = vmatpush1.bf16.msra.mxu0 0
        %4856 = vmatprep.subr.bf16.mxu0 0
        %4857 = vmatpush1.bf16.msra.mxu0 0
        %4858 = vmatprep.subr.bf16.mxu0 0
        %4859 = vmatpush1.bf16.msra.mxu0 0
        %4860 = vmatprep.subr.bf16.mxu0 0
        %4861 = vmatpush1.bf16.msra.mxu0 0
        %4862 = vmatprep.subr.bf16.mxu0 0
        %4863 = vmatpush1.bf16.msra.mxu0 0
        %4864 = vmatprep.mubr.bf16.mxu0 0
        %4865 = vmatmul.mubr.bf16.gmra.mrb[0].mxu0 %v3718
        %v4866 = vpop.f32.mrb[0].mxu0
        %v4867 = vadd.f32 0.0, %v4866
        %v4868 = vpop.f32.mrb[0].mxu0
        %v4869 = vpop.f32.mrb[0].mxu0
        %v4870 = vadd.f32 0.0, %v4869
        %v4871 = vpop.f32.mrb[0].mxu0
        %4872 = vmatprep.mubr.bf16.mxu0 0
        %4873 = vmatmul.mubr.bf16.gmra.mrb[0].mxu0 %v3720
        %v4874 = vpop.f32.mrb[0].mxu0
        %v4875 = vadd.f32 0.0, %v4874
        %v4876 = vpop.f32.mrb[0].mxu0
        %v4877 = vpop.f32.mrb[0].mxu0
        %v4878 = vadd.f32 0.0, %v4877
        %v4879 = vpop.f32.mrb[0].mxu0
        %4880 = vmatprep.mubr.bf16.mxu0 0
        %4881 = vmatmul.mubr.bf16.gmra.mrb[0].mxu0 %v3722
        %v4882 = vpop.f32.mrb[0].mxu0
        %v4883 = vadd.f32 0.0, %v4882
        %v4884 = vpop.f32.mrb[0].mxu0
        %v4885 = vpop.f32.mrb[0].mxu0
        %v4886 = vadd.f32 0.0, %v4885
        %v4887 = vpop.f32.mrb[0].mxu0
        %4888 = vmatprep.mubr.bf16.mxu0 0
        %4889 = vmatmul.mubr.bf16.gmra.mrb[0].mxu0 %v3724
        %v4890 = vpop.f32.mrb[0].mxu0
        %v4891 = vadd.f32 0.0, %v4890
        %v4892 = vpop.f32.mrb[0].mxu0
        %v4893 = vpop.f32.mrb[0].mxu0
        %v4894 = vadd.f32 0.0, %v4893
        %v4895 = vpop.f32.mrb[0].mxu0
        %4896 = vmatprep.mubr.bf16.mxu0 0
        %4897 = vmatmul.mubr.bf16.gmra.mrb[0].mxu0 %v3726
        %v4898 = vpop.f32.mrb[0].mxu0
        %v4899 = vadd.f32 0.0, %v4898
        %v4900 = vpop.f32.mrb[0].mxu0
        %v4901 = vpop.f32.mrb[0].mxu0
        %v4902 = vadd.f32 0.0, %v4901
        %v4903 = vpop.f32.mrb[0].mxu0
        %4904 = vmatprep.mubr.bf16.mxu0 0
        %4905 = vmatmul.mubr.bf16.gmra.mrb[0].mxu0 %v3728
        %v4906 = vpop.f32.mrb[0].mxu0
        %v4907 = vadd.f32 0.0, %v4906
        %v4908 = vpop.f32.mrb[0].mxu0
        %v4909 = vpop.f32.mrb[0].mxu0
        %v4910 = vadd.f32 0.0, %v4909
        %v4911 = vpop.f32.mrb[0].mxu0
        %4912 = vmatprep.mubr.bf16.mxu0 0
        %4913 = vmatmul.mubr.bf16.gmra.mrb[0].mxu0 %v3730
        %v4914 = vpop.f32.mrb[0].mxu0
        %v4915 = vadd.f32 0.0, %v4914
        %v4916 = vpop.f32.mrb[0].mxu0
        %v4917 = vpop.f32.mrb[0].mxu0
        %v4918 = vadd.f32 0.0, %v4917
        %v4919 = vpop.f32.mrb[0].mxu0
        %4920 = vmatprep.mubr.bf16.mxu0 0
        %4921 = vmatmul.mubr.bf16.gmra.mrb[0].mxu0 %v3732
        %v4922 = vpop.f32.mrb[0].mxu0
        %v4923 = vadd.f32 0.0, %v4922
        %v4924 = vpop.f32.mrb[0].mxu0
        %v4925 = vpop.f32.mrb[0].mxu0
        %v4926 = vadd.f32 0.0, %v4925
        %v4927 = vpop.f32.mrb[0].mxu0
        %4928 = vmatprep.mubr.bf16.mxu0 0
        %4929 = vmatmul.mubr.bf16.gmra.mrb[0].mxu0 %v3734
        %v4930 = vpop.f32.mrb[0].mxu0
        %v4931 = vadd.f32 0.0, %v4930
        %v4932 = vpop.f32.mrb[0].mxu0
        %v4933 = vpop.f32.mrb[0].mxu0
        %v4934 = vadd.f32 0.0, %v4933
        %v4935 = vpop.f32.mrb[0].mxu0
        %4936 = vmatprep.mubr.bf16.mxu0 0
        %4937 = vmatmul.mubr.bf16.gmra.mrb[0].mxu0 %v3736
        %v4938 = vpop.f32.mrb[0].mxu0
        %v4939 = vadd.f32 0.0, %v4938
        %v4940 = vpop.f32.mrb[0].mxu0
        %v4941 = vpop.f32.mrb[0].mxu0
        %v4942 = vadd.f32 0.0, %v4941
        %v4943 = vpop.f32.mrb[0].mxu0
        %4944 = vmatprep.mubr.bf16.mxu0 0
        %4945 = vmatmul.mubr.bf16.gmra.mrb[0].mxu0 %v3738
        %v4946 = vpop.f32.mrb[0].mxu0
        %v4947 = vadd.f32 0.0, %v4946
        %v4948 = vpop.f32.mrb[0].mxu0
        %v4949 = vpop.f32.mrb[0].mxu0
        %v4950 = vadd.f32 0.0, %v4949
        %v4951 = vpop.f32.mrb[0].mxu0
        %4952 = vmatprep.mubr.bf16.mxu0 0
        %4953 = vmatmul.mubr.bf16.gmra.mrb[0].mxu0 %v3740
        %v4954 = vpop.f32.mrb[0].mxu0
        %v4955 = vadd.f32 0.0, %v4954
        %v4956 = vpop.f32.mrb[0].mxu0
        %v4957 = vpop.f32.mrb[0].mxu0
        %v4958 = vadd.f32 0.0, %v4957
        %v4959 = vpop.f32.mrb[0].mxu0
        %4960 = vmatprep.mubr.bf16.mxu0 0
        %4961 = vmatmul.mubr.bf16.gmra.mrb[0].mxu0 %v3742
        %v4962 = vpop.f32.mrb[0].mxu0
        %v4963 = vadd.f32 0.0, %v4962
        %v4964 = vpop.f32.mrb[0].mxu0
        %v4965 = vpop.f32.mrb[0].mxu0
        %v4966 = vadd.f32 0.0, %v4965
        %v4967 = vpop.f32.mrb[0].mxu0
        %4968 = vmatprep.mubr.bf16.mxu0 0
        %4969 = vmatmul.mubr.bf16.gmra.mrb[0].mxu0 %v3744
        %v4970 = vpop.f32.mrb[0].mxu0
        %v4971 = vadd.f32 0.0, %v4970
        %v4972 = vpop.f32.mrb[0].mxu0
        %v4973 = vpop.f32.mrb[0].mxu0
        %v4974 = vadd.f32 0.0, %v4973
        %v4975 = vpop.f32.mrb[0].mxu0
        %4976 = vmatprep.mubr.bf16.mxu0 0
        %4977 = vmatmul.mubr.bf16.gmra.mrb[0].mxu0 %v3746
        %v4978 = vpop.f32.mrb[0].mxu0
        %v4979 = vadd.f32 0.0, %v4978
        %v4980 = vpop.f32.mrb[0].mxu0
        %v4981 = vpop.f32.mrb[0].mxu0
        %v4982 = vadd.f32 0.0, %v4981
        %v4983 = vpop.f32.mrb[0].mxu0
        %4984 = vmatprep.mubr.bf16.mxu0 0
        %4985 = vmatmul.mubr.bf16.gmra.mrb[0].mxu0 %v3748
        %v4986 = vpop.f32.mrb[0].mxu0
        %v4987 = vadd.f32 0.0, %v4986
        %v4988 = vpop.f32.mrb[0].mxu0
        %v4989 = vpop.f32.mrb[0].mxu0
        %v4990 = vadd.f32 0.0, %v4989
        %v4991 = vpop.f32.mrb[0].mxu0
        %4992 = vdwg.mxu0
        %v4993 = vadd.f32 %v4735, %v4867
        %v4994 = vadd.f32 %v4736, %v4870
        %v4995 = vadd.f32 %v4737, %v4875
        %v4996 = vadd.f32 %v4738, %v4878
        %v4997 = vadd.f32 %v4739, %v4883
        %v4998 = vadd.f32 %v4740, %v4886
        %v4999 = vadd.f32 %v4741, %v4891
        %v5000 = vadd.f32 %v4742, %v4894
        %v5001 = vadd.f32 %v4743, %v4899
        %v5002 = vadd.f32 %v4744, %v4902
        %v5003 = vadd.f32 %v4745, %v4907
        %v5004 = vadd.f32 %v4746, %v4910
        %v5005 = vadd.f32 %v4747, %v4915
        %v5006 = vadd.f32 %v4748, %v4918
        %v5007 = vadd.f32 %v4749, %v4923
        %v5008 = vadd.f32 %v4750, %v4926
        %v5009 = vadd.f32 %v4751, %v4931
        %v5010 = vadd.f32 %v4752, %v4934
        %v5011 = vadd.f32 %v4753, %v4939
        %v5012 = vadd.f32 %v4754, %v4942
        %v5013 = vadd.f32 %v4755, %v4947
        %v5014 = vadd.f32 %v4756, %v4950
        %v5015 = vadd.f32 %v4757, %v4955
        %v5016 = vadd.f32 %v4758, %v4958
        %v5017 = vadd.f32 %v4759, %v4963
        %v5018 = vadd.f32 %v4760, %v4966
        %v5019 = vadd.f32 %v4761, %v4971
        %v5020 = vadd.f32 %v4762, %v4974
        %v5021 = vadd.f32 %v4763, %v4979
        %v5022 = vadd.f32 %v4764, %v4982
        %v5023 = vadd.f32 %v4765, %v4987
        %v5024 = vadd.f32 %v4766, %v4990
        %v5026 = vshrl.u32 %v3748, 16
        %v5028 = vshll.u32 %v3748, 16
        %v5030 = vrot.slane %v5028, 1
        %v5031 = vor.u32 %v5026, %v5030
        %v5033 = vshll.u32 %v3749, 16
        %v5035 = vrot.slane %v5033, 1
        %v5036 = vsel %vm3768, %v5031, %v5035
        %s5038 = scalar_lea.vmem %s3, 256
        %v5039 = vld [vmem:[%s5038] sm:$0xf]
        %v5040 = vld [vmem:[%s5038 + $0x4] sm:$0xf]
        %v5041 = vld [vmem:[%s5038 + $0x8] sm:$0xf]
        %v5042 = vld [vmem:[%s5038 + $0xc] sm:$0xf]
        %v5043 = vld [vmem:[%s5038 + $0x10] sm:$0xf]
        %v5044 = vld [vmem:[%s5038 + $0x14] sm:$0xf]
        %v5045 = vld [vmem:[%s5038 + $0x18] sm:$0xf]
        %v5046 = vld [vmem:[%s5038 + $0x1c] sm:$0xf]
        %v5047 = vld [vmem:[%s5038 + $0x20] sm:$0xf]
        %v5048 = vld [vmem:[%s5038 + $0x24] sm:$0xf]
        %v5049 = vld [vmem:[%s5038 + $0x28] sm:$0xf]
        %v5050 = vld [vmem:[%s5038 + $0x2c] sm:$0xf]
        %v5051 = vld [vmem:[%s5038 + $0x30] sm:$0xf]
        %v5052 = vld [vmem:[%s5038 + $0x34] sm:$0xf]
        %v5053 = vld [vmem:[%s5038 + $0x38] sm:$0xf]
        %v5054 = vld [vmem:[%s5038 + $0x3c] sm:$0xf]
        %v5071 = vunpack.c.l.b16 %v5039
        %v5072 = vunpack.c.l.b16 %v5040
        %v5073 = vunpack.c.l.b16 %v5041
        %v5074 = vunpack.c.l.b16 %v5042
        %v5075 = vunpack.c.l.b16 %v5043
        %v5076 = vunpack.c.l.b16 %v5044
        %v5077 = vunpack.c.l.b16 %v5045
        %v5078 = vunpack.c.l.b16 %v5046
        %v5079 = vunpack.c.l.b16 %v5047
        %v5080 = vunpack.c.l.b16 %v5048
        %v5081 = vunpack.c.l.b16 %v5049
        %v5082 = vunpack.c.l.b16 %v5050
        %v5083 = vunpack.c.l.b16 %v5051
        %v5084 = vunpack.c.l.b16 %v5052
        %v5085 = vunpack.c.l.b16 %v5053
        %v5086 = vunpack.c.l.b16 %v5054
        %v5087 = vpack.c.b16 %v5072, %v5071
        %v5088 = vpack.c.b16 %v5074, %v5073
        %v5089 = vpack.c.b16 %v5076, %v5075
        %v5090 = vpack.c.b16 %v5078, %v5077
        %v5091 = vpack.c.b16 %v5080, %v5079
        %v5092 = vpack.c.b16 %v5082, %v5081
        %v5093 = vpack.c.b16 %v5084, %v5083
        %v5094 = vpack.c.b16 %v5086, %v5085
        %5103 = vmatprep.subr.bf16.mxu0 0
        %5104 = vmatpush1.bf16.msra.mxu0 %v5087
        %5105 = vmatprep.subr.bf16.mxu0 0
        %5106 = vmatpush1.bf16.msra.mxu0 %v5088
        %5107 = vmatprep.subr.bf16.mxu0 0
        %5108 = vmatpush1.bf16.msra.mxu0 %v5089
        %5109 = vmatprep.subr.bf16.mxu0 0
        %5110 = vmatpush1.bf16.msra.mxu0 %v5090
        %5111 = vmatprep.subr.bf16.mxu0 0
        %5112 = vmatpush1.bf16.msra.mxu0 %v5091
        %5113 = vmatprep.subr.bf16.mxu0 0
        %5114 = vmatpush1.bf16.msra.mxu0 %v5092
        %5115 = vmatprep.subr.bf16.mxu0 0
        %5116 = vmatpush1.bf16.msra.mxu0 %v5093
        %5117 = vmatprep.subr.bf16.mxu0 0
        %5118 = vmatpush1.bf16.msra.mxu0 %v5094
        %5119 = vmatprep.subr.bf16.mxu0 0
        %5120 = vmatpush1.bf16.msra.mxu0 0
        %5121 = vmatprep.subr.bf16.mxu0 0
        %5122 = vmatpush1.bf16.msra.mxu0 0
        %5123 = vmatprep.subr.bf16.mxu0 0
        %5124 = vmatpush1.bf16.msra.mxu0 0
        %5125 = vmatprep.subr.bf16.mxu0 0
        %5126 = vmatpush1.bf16.msra.mxu0 0
        %5127 = vmatprep.subr.bf16.mxu0 0
        %5128 = vmatpush1.bf16.msra.mxu0 0
        %5129 = vmatprep.subr.bf16.mxu0 0
        %5130 = vmatpush1.bf16.msra.mxu0 0
        %5131 = vmatprep.subr.bf16.mxu0 0
        %5132 = vmatpush1.bf16.msra.mxu0 0
        %5133 = vmatprep.subr.bf16.mxu0 0
        %5134 = vmatpush1.bf16.msra.mxu0 0
        %5135 = vmatprep.mubr.bf16.mxu0 0
        %5136 = vmatmul.mubr.bf16.gmra.mrb[0].mxu0 %v3792
        %v5137 = vpop.f32.mrb[0].mxu0
        %v5138 = vadd.f32 0.0, %v5137
        %v5139 = vpop.f32.mrb[0].mxu0
        %v5140 = vpop.f32.mrb[0].mxu0
        %v5141 = vadd.f32 0.0, %v5140
        %v5142 = vpop.f32.mrb[0].mxu0
        %5143 = vmatprep.mubr.bf16.mxu0 0
        %5144 = vmatmul.mubr.bf16.gmra.mrb[0].mxu0 %v3804
        %v5145 = vpop.f32.mrb[0].mxu0
        %v5146 = vadd.f32 0.0, %v5145
        %v5147 = vpop.f32.mrb[0].mxu0
        %v5148 = vpop.f32.mrb[0].mxu0
        %v5149 = vadd.f32 0.0, %v5148
        %v5150 = vpop.f32.mrb[0].mxu0
        %5151 = vmatprep.mubr.bf16.mxu0 0
        %5152 = vmatmul.mubr.bf16.gmra.mrb[0].mxu0 %v3816
        %v5153 = vpop.f32.mrb[0].mxu0
        %v5154 = vadd.f32 0.0, %v5153
        %v5155 = vpop.f32.mrb[0].mxu0
        %v5156 = vpop.f32.mrb[0].mxu0
        %v5157 = vadd.f32 0.0, %v5156
        %v5158 = vpop.f32.mrb[0].mxu0
        %5159 = vmatprep.mubr.bf16.mxu0 0
        %5160 = vmatmul.mubr.bf16.gmra.mrb[0].mxu0 %v3828
        %v5161 = vpop.f32.mrb[0].mxu0
        %v5162 = vadd.f32 0.0, %v5161
        %v5163 = vpop.f32.mrb[0].mxu0
        %v5164 = vpop.f32.mrb[0].mxu0
        %v5165 = vadd.f32 0.0, %v5164
        %v5166 = vpop.f32.mrb[0].mxu0
        %5167 = vmatprep.mubr.bf16.mxu0 0
        %5168 = vmatmul.mubr.bf16.gmra.mrb[0].mxu0 %v3840
        %v5169 = vpop.f32.mrb[0].mxu0
        %v5170 = vadd.f32 0.0, %v5169
        %v5171 = vpop.f32.mrb[0].mxu0
        %v5172 = vpop.f32.mrb[0].mxu0
        %v5173 = vadd.f32 0.0, %v5172
        %v5174 = vpop.f32.mrb[0].mxu0
        %5175 = vmatprep.mubr.bf16.mxu0 0
        %5176 = vmatmul.mubr.bf16.gmra.mrb[0].mxu0 %v3852
        %v5177 = vpop.f32.mrb[0].mxu0
        %v5178 = vadd.f32 0.0, %v5177
        %v5179 = vpop.f32.mrb[0].mxu0
        %v5180 = vpop.f32.mrb[0].mxu0
        %v5181 = vadd.f32 0.0, %v5180
        %v5182 = vpop.f32.mrb[0].mxu0
        %5183 = vmatprep.mubr.bf16.mxu0 0
        %5184 = vmatmul.mubr.bf16.gmra.mrb[0].mxu0 %v3864
        %v5185 = vpop.f32.mrb[0].mxu0
        %v5186 = vadd.f32 0.0, %v5185
        %v5187 = vpop.f32.mrb[0].mxu0
        %v5188 = vpop.f32.mrb[0].mxu0
        %v5189 = vadd.f32 0.0, %v5188
        %v5190 = vpop.f32.mrb[0].mxu0
        %5191 = vmatprep.mubr.bf16.mxu0 0
        %5192 = vmatmul.mubr.bf16.gmra.mrb[0].mxu0 %v3876
        %v5193 = vpop.f32.mrb[0].mxu0
        %v5194 = vadd.f32 0.0, %v5193
        %v5195 = vpop.f32.mrb[0].mxu0
        %v5196 = vpop.f32.mrb[0].mxu0
        %v5197 = vadd.f32 0.0, %v5196
        %v5198 = vpop.f32.mrb[0].mxu0
        %5199 = vmatprep.mubr.bf16.mxu0 0
        %5200 = vmatmul.mubr.bf16.gmra.mrb[0].mxu0 %v3888
        %v5201 = vpop.f32.mrb[0].mxu0
        %v5202 = vadd.f32 0.0, %v5201
        %v5203 = vpop.f32.mrb[0].mxu0
        %v5204 = vpop.f32.mrb[0].mxu0
        %v5205 = vadd.f32 0.0, %v5204
        %v5206 = vpop.f32.mrb[0].mxu0
        %5207 = vmatprep.mubr.bf16.mxu0 0
        %5208 = vmatmul.mubr.bf16.gmra.mrb[0].mxu0 %v3900
        %v5209 = vpop.f32.mrb[0].mxu0
        %v5210 = vadd.f32 0.0, %v5209
        %v5211 = vpop.f32.mrb[0].mxu0
        %v5212 = vpop.f32.mrb[0].mxu0
        %v5213 = vadd.f32 0.0, %v5212
        %v5214 = vpop.f32.mrb[0].mxu0
        %5215 = vmatprep.mubr.bf16.mxu0 0
        %5216 = vmatmul.mubr.bf16.gmra.mrb[0].mxu0 %v3912
        %v5217 = vpop.f32.mrb[0].mxu0
        %v5218 = vadd.f32 0.0, %v5217
        %v5219 = vpop.f32.mrb[0].mxu0
        %v5220 = vpop.f32.mrb[0].mxu0
        %v5221 = vadd.f32 0.0, %v5220
        %v5222 = vpop.f32.mrb[0].mxu0
        %5223 = vmatprep.mubr.bf16.mxu0 0
        %5224 = vmatmul.mubr.bf16.gmra.mrb[0].mxu0 %v3924
        %v5225 = vpop.f32.mrb[0].mxu0
        %v5226 = vadd.f32 0.0, %v5225
        %v5227 = vpop.f32.mrb[0].mxu0
        %v5228 = vpop.f32.mrb[0].mxu0
        %v5229 = vadd.f32 0.0, %v5228
        %v5230 = vpop.f32.mrb[0].mxu0
        %5231 = vmatprep.mubr.bf16.mxu0 0
        %5232 = vmatmul.mubr.bf16.gmra.mrb[0].mxu0 %v3936
        %v5233 = vpop.f32.mrb[0].mxu0
        %v5234 = vadd.f32 0.0, %v5233
        %v5235 = vpop.f32.mrb[0].mxu0
        %v5236 = vpop.f32.mrb[0].mxu0
        %v5237 = vadd.f32 0.0, %v5236
        %v5238 = vpop.f32.mrb[0].mxu0
        %5239 = vmatprep.mubr.bf16.mxu0 0
        %5240 = vmatmul.mubr.bf16.gmra.mrb[0].mxu0 %v3948
        %v5241 = vpop.f32.mrb[0].mxu0
        %v5242 = vadd.f32 0.0, %v5241
        %v5243 = vpop.f32.mrb[0].mxu0
        %v5244 = vpop.f32.mrb[0].mxu0
        %v5245 = vadd.f32 0.0, %v5244
        %v5246 = vpop.f32.mrb[0].mxu0
        %5247 = vmatprep.mubr.bf16.mxu0 0
        %5248 = vmatmul.mubr.bf16.gmra.mrb[0].mxu0 %v3960
        %v5249 = vpop.f32.mrb[0].mxu0
        %v5250 = vadd.f32 0.0, %v5249
        %v5251 = vpop.f32.mrb[0].mxu0
        %v5252 = vpop.f32.mrb[0].mxu0
        %v5253 = vadd.f32 0.0, %v5252
        %v5254 = vpop.f32.mrb[0].mxu0
        %5255 = vmatprep.mubr.bf16.mxu0 0
        %5256 = vmatmul.mubr.bf16.gmra.mrb[0].mxu0 %v5036
        %v5257 = vpop.f32.mrb[0].mxu0
        %v5258 = vadd.f32 0.0, %v5257
        %v5259 = vpop.f32.mrb[0].mxu0
        %v5260 = vpop.f32.mrb[0].mxu0
        %v5261 = vadd.f32 0.0, %v5260
        %v5262 = vpop.f32.mrb[0].mxu0
        %5263 = vdwg.mxu0
        %v5264 = vadd.f32 %v4993, %v5138
        %v5265 = vadd.f32 %v4994, %v5141
        %v5266 = vadd.f32 %v4995, %v5146
        %v5267 = vadd.f32 %v4996, %v5149
        %v5268 = vadd.f32 %v4997, %v5154
        %v5269 = vadd.f32 %v4998, %v5157
        %v5270 = vadd.f32 %v4999, %v5162
        %v5271 = vadd.f32 %v5000, %v5165
        %v5272 = vadd.f32 %v5001, %v5170
        %v5273 = vadd.f32 %v5002, %v5173
        %v5274 = vadd.f32 %v5003, %v5178
        %v5275 = vadd.f32 %v5004, %v5181
        %v5276 = vadd.f32 %v5005, %v5186
        %v5277 = vadd.f32 %v5006, %v5189
        %v5278 = vadd.f32 %v5007, %v5194
        %v5279 = vadd.f32 %v5008, %v5197
        %v5280 = vadd.f32 %v5009, %v5202
        %v5281 = vadd.f32 %v5010, %v5205
        %v5282 = vadd.f32 %v5011, %v5210
        %v5283 = vadd.f32 %v5012, %v5213
        %v5284 = vadd.f32 %v5013, %v5218
        %v5285 = vadd.f32 %v5014, %v5221
        %v5286 = vadd.f32 %v5015, %v5226
        %v5287 = vadd.f32 %v5016, %v5229
        %v5288 = vadd.f32 %v5017, %v5234
        %v5289 = vadd.f32 %v5018, %v5237
        %v5290 = vadd.f32 %v5019, %v5242
        %v5291 = vadd.f32 %v5020, %v5245
        %v5292 = vadd.f32 %v5021, %v5250
        %v5293 = vadd.f32 %v5022, %v5253
        %v5294 = vadd.f32 %v5023, %v5258
        %v5295 = vadd.f32 %v5024, %v5261
        %v5298 = vrot.slane %v3748, 1
        %v5299 = vrot.slane %v3749, 1
        %v5300 = vsel %vm4444, %v5298, %v5299
        %s5302 = scalar_lea.vmem %s3, 320
        %v5303 = vld [vmem:[%s5302] sm:$0xf]
        %v5304 = vld [vmem:[%s5302 + $0x4] sm:$0xf]
        %v5305 = vld [vmem:[%s5302 + $0x8] sm:$0xf]
        %v5306 = vld [vmem:[%s5302 + $0xc] sm:$0xf]
        %v5307 = vld [vmem:[%s5302 + $0x10] sm:$0xf]
        %v5308 = vld [vmem:[%s5302 + $0x14] sm:$0xf]
        %v5309 = vld [vmem:[%s5302 + $0x18] sm:$0xf]
        %v5310 = vld [vmem:[%s5302 + $0x1c] sm:$0xf]
        %v5311 = vld [vmem:[%s5302 + $0x20] sm:$0xf]
        %v5312 = vld [vmem:[%s5302 + $0x24] sm:$0xf]
        %v5313 = vld [vmem:[%s5302 + $0x28] sm:$0xf]
        %v5314 = vld [vmem:[%s5302 + $0x2c] sm:$0xf]
        %v5315 = vld [vmem:[%s5302 + $0x30] sm:$0xf]
        %v5316 = vld [vmem:[%s5302 + $0x34] sm:$0xf]
        %v5317 = vld [vmem:[%s5302 + $0x38] sm:$0xf]
        %v5318 = vld [vmem:[%s5302 + $0x3c] sm:$0xf]
        %v5335 = vunpack.c.l.b16 %v5303
        %v5336 = vunpack.c.l.b16 %v5304
        %v5337 = vunpack.c.l.b16 %v5305
        %v5338 = vunpack.c.l.b16 %v5306
        %v5339 = vunpack.c.l.b16 %v5307
        %v5340 = vunpack.c.l.b16 %v5308
        %v5341 = vunpack.c.l.b16 %v5309
        %v5342 = vunpack.c.l.b16 %v5310
        %v5343 = vunpack.c.l.b16 %v5311
        %v5344 = vunpack.c.l.b16 %v5312
        %v5345 = vunpack.c.l.b16 %v5313
        %v5346 = vunpack.c.l.b16 %v5314
        %v5347 = vunpack.c.l.b16 %v5315
        %v5348 = vunpack.c.l.b16 %v5316
        %v5349 = vunpack.c.l.b16 %v5317
        %v5350 = vunpack.c.l.b16 %v5318
        %v5351 = vpack.c.b16 %v5336, %v5335
        %v5352 = vpack.c.b16 %v5338, %v5337
        %v5353 = vpack.c.b16 %v5340, %v5339
        %v5354 = vpack.c.b16 %v5342, %v5341
        %v5355 = vpack.c.b16 %v5344, %v5343
        %v5356 = vpack.c.b16 %v5346, %v5345
        %v5357 = vpack.c.b16 %v5348, %v5347
        %v5358 = vpack.c.b16 %v5350, %v5349
        %5367 = vmatprep.subr.bf16.mxu0 0
        %5368 = vmatpush1.bf16.msra.mxu0 %v5351
        %5369 = vmatprep.subr.bf16.mxu0 0
        %5370 = vmatpush1.bf16.msra.mxu0 %v5352
        %5371 = vmatprep.subr.bf16.mxu0 0
        %5372 = vmatpush1.bf16.msra.mxu0 %v5353
        %5373 = vmatprep.subr.bf16.mxu0 0
        %5374 = vmatpush1.bf16.msra.mxu0 %v5354
        %5375 = vmatprep.subr.bf16.mxu0 0
        %5376 = vmatpush1.bf16.msra.mxu0 %v5355
        %5377 = vmatprep.subr.bf16.mxu0 0
        %5378 = vmatpush1.bf16.msra.mxu0 %v5356
        %5379 = vmatprep.subr.bf16.mxu0 0
        %5380 = vmatpush1.bf16.msra.mxu0 %v5357
        %5381 = vmatprep.subr.bf16.mxu0 0
        %5382 = vmatpush1.bf16.msra.mxu0 %v5358
        %5383 = vmatprep.subr.bf16.mxu0 0
        %5384 = vmatpush1.bf16.msra.mxu0 0
        %5385 = vmatprep.subr.bf16.mxu0 0
        %5386 = vmatpush1.bf16.msra.mxu0 0
        %5387 = vmatprep.subr.bf16.mxu0 0
        %5388 = vmatpush1.bf16.msra.mxu0 0
        %5389 = vmatprep.subr.bf16.mxu0 0
        %5390 = vmatpush1.bf16.msra.mxu0 0
        %5391 = vmatprep.subr.bf16.mxu0 0
        %5392 = vmatpush1.bf16.msra.mxu0 0
        %5393 = vmatprep.subr.bf16.mxu0 0
        %5394 = vmatpush1.bf16.msra.mxu0 0
        %5395 = vmatprep.subr.bf16.mxu0 0
        %5396 = vmatpush1.bf16.msra.mxu0 0
        %5397 = vmatprep.subr.bf16.mxu0 0
        %5398 = vmatpush1.bf16.msra.mxu0 0
        %5399 = vmatprep.mubr.bf16.mxu0 0
        %5400 = vmatmul.mubr.bf16.gmra.mrb[0].mxu0 %v4450
        %v5401 = vpop.f32.mrb[0].mxu0
        %v5402 = vadd.f32 0.0, %v5401
        %v5403 = vpop.f32.mrb[0].mxu0
        %v5404 = vpop.f32.mrb[0].mxu0
        %v5405 = vadd.f32 0.0, %v5404
        %v5406 = vpop.f32.mrb[0].mxu0
        %5407 = vmatprep.mubr.bf16.mxu0 0
        %5408 = vmatmul.mubr.bf16.gmra.mrb[0].mxu0 %v4453
        %v5409 = vpop.f32.mrb[0].mxu0
        %v5410 = vadd.f32 0.0, %v5409
        %v5411 = vpop.f32.mrb[0].mxu0
        %v5412 = vpop.f32.mrb[0].mxu0
        %v5413 = vadd.f32 0.0, %v5412
        %v5414 = vpop.f32.mrb[0].mxu0
        %5415 = vmatprep.mubr.bf16.mxu0 0
        %5416 = vmatmul.mubr.bf16.gmra.mrb[0].mxu0 %v4456
        %v5417 = vpop.f32.mrb[0].mxu0
        %v5418 = vadd.f32 0.0, %v5417
        %v5419 = vpop.f32.mrb[0].mxu0
        %v5420 = vpop.f32.mrb[0].mxu0
        %v5421 = vadd.f32 0.0, %v5420
        %v5422 = vpop.f32.mrb[0].mxu0
        %5423 = vmatprep.mubr.bf16.mxu0 0
        %5424 = vmatmul.mubr.bf16.gmra.mrb[0].mxu0 %v4459
        %v5425 = vpop.f32.mrb[0].mxu0
        %v5426 = vadd.f32 0.0, %v5425
        %v5427 = vpop.f32.mrb[0].mxu0
        %v5428 = vpop.f32.mrb[0].mxu0
        %v5429 = vadd.f32 0.0, %v5428
        %v5430 = vpop.f32.mrb[0].mxu0
        %5431 = vmatprep.mubr.bf16.mxu0 0
        %5432 = vmatmul.mubr.bf16.gmra.mrb[0].mxu0 %v4462
        %v5433 = vpop.f32.mrb[0].mxu0
        %v5434 = vadd.f32 0.0, %v5433
        %v5435 = vpop.f32.mrb[0].mxu0
        %v5436 = vpop.f32.mrb[0].mxu0
        %v5437 = vadd.f32 0.0, %v5436
        %v5438 = vpop.f32.mrb[0].mxu0
        %5439 = vmatprep.mubr.bf16.mxu0 0
        %5440 = vmatmul.mubr.bf16.gmra.mrb[0].mxu0 %v4465
        %v5441 = vpop.f32.mrb[0].mxu0
        %v5442 = vadd.f32 0.0, %v5441
        %v5443 = vpop.f32.mrb[0].mxu0
        %v5444 = vpop.f32.mrb[0].mxu0
        %v5445 = vadd.f32 0.0, %v5444
        %v5446 = vpop.f32.mrb[0].mxu0
        %5447 = vmatprep.mubr.bf16.mxu0 0
        %5448 = vmatmul.mubr.bf16.gmra.mrb[0].mxu0 %v4468
        %v5449 = vpop.f32.mrb[0].mxu0
        %v5450 = vadd.f32 0.0, %v5449
        %v5451 = vpop.f32.mrb[0].mxu0
        %v5452 = vpop.f32.mrb[0].mxu0
        %v5453 = vadd.f32 0.0, %v5452
        %v5454 = vpop.f32.mrb[0].mxu0
        %5455 = vmatprep.mubr.bf16.mxu0 0
        %5456 = vmatmul.mubr.bf16.gmra.mrb[0].mxu0 %v4471
        %v5457 = vpop.f32.mrb[0].mxu0
        %v5458 = vadd.f32 0.0, %v5457
        %v5459 = vpop.f32.mrb[0].mxu0
        %v5460 = vpop.f32.mrb[0].mxu0
        %v5461 = vadd.f32 0.0, %v5460
        %v5462 = vpop.f32.mrb[0].mxu0
        %5463 = vmatprep.mubr.bf16.mxu0 0
        %5464 = vmatmul.mubr.bf16.gmra.mrb[0].mxu0 %v4474
        %v5465 = vpop.f32.mrb[0].mxu0
        %v5466 = vadd.f32 0.0, %v5465
        %v5467 = vpop.f32.mrb[0].mxu0
        %v5468 = vpop.f32.mrb[0].mxu0
        %v5469 = vadd.f32 0.0, %v5468
        %v5470 = vpop.f32.mrb[0].mxu0
        %5471 = vmatprep.mubr.bf16.mxu0 0
        %5472 = vmatmul.mubr.bf16.gmra.mrb[0].mxu0 %v4477
        %v5473 = vpop.f32.mrb[0].mxu0
        %v5474 = vadd.f32 0.0, %v5473
        %v5475 = vpop.f32.mrb[0].mxu0
        %v5476 = vpop.f32.mrb[0].mxu0
        %v5477 = vadd.f32 0.0, %v5476
        %v5478 = vpop.f32.mrb[0].mxu0
        %5479 = vmatprep.mubr.bf16.mxu0 0
        %5480 = vmatmul.mubr.bf16.gmra.mrb[0].mxu0 %v4480
        %v5481 = vpop.f32.mrb[0].mxu0
        %v5482 = vadd.f32 0.0, %v5481
        %v5483 = vpop.f32.mrb[0].mxu0
        %v5484 = vpop.f32.mrb[0].mxu0
        %v5485 = vadd.f32 0.0, %v5484
        %v5486 = vpop.f32.mrb[0].mxu0
        %5487 = vmatprep.mubr.bf16.mxu0 0
        %5488 = vmatmul.mubr.bf16.gmra.mrb[0].mxu0 %v4483
        %v5489 = vpop.f32.mrb[0].mxu0
        %v5490 = vadd.f32 0.0, %v5489
        %v5491 = vpop.f32.mrb[0].mxu0
        %v5492 = vpop.f32.mrb[0].mxu0
        %v5493 = vadd.f32 0.0, %v5492
        %v5494 = vpop.f32.mrb[0].mxu0
        %5495 = vmatprep.mubr.bf16.mxu0 0
        %5496 = vmatmul.mubr.bf16.gmra.mrb[0].mxu0 %v4486
        %v5497 = vpop.f32.mrb[0].mxu0
        %v5498 = vadd.f32 0.0, %v5497
        %v5499 = vpop.f32.mrb[0].mxu0
        %v5500 = vpop.f32.mrb[0].mxu0
        %v5501 = vadd.f32 0.0, %v5500
        %v5502 = vpop.f32.mrb[0].mxu0
        %5503 = vmatprep.mubr.bf16.mxu0 0
        %5504 = vmatmul.mubr.bf16.gmra.mrb[0].mxu0 %v4489
        %v5505 = vpop.f32.mrb[0].mxu0
        %v5506 = vadd.f32 0.0, %v5505
        %v5507 = vpop.f32.mrb[0].mxu0
        %v5508 = vpop.f32.mrb[0].mxu0
        %v5509 = vadd.f32 0.0, %v5508
        %v5510 = vpop.f32.mrb[0].mxu0
        %5511 = vmatprep.mubr.bf16.mxu0 0
        %5512 = vmatmul.mubr.bf16.gmra.mrb[0].mxu0 %v4492
        %v5513 = vpop.f32.mrb[0].mxu0
        %v5514 = vadd.f32 0.0, %v5513
        %v5515 = vpop.f32.mrb[0].mxu0
        %v5516 = vpop.f32.mrb[0].mxu0
        %v5517 = vadd.f32 0.0, %v5516
        %v5518 = vpop.f32.mrb[0].mxu0
        %5519 = vmatprep.mubr.bf16.mxu0 0
        %5520 = vmatmul.mubr.bf16.gmra.mrb[0].mxu0 %v5300
        %v5521 = vpop.f32.mrb[0].mxu0
        %v5522 = vadd.f32 0.0, %v5521
        %v5523 = vpop.f32.mrb[0].mxu0
        %v5524 = vpop.f32.mrb[0].mxu0
        %v5525 = vadd.f32 0.0, %v5524
        %v5526 = vpop.f32.mrb[0].mxu0
        %5527 = vdwg.mxu0
        %v5528 = vadd.f32 %v5264, %v5402
        %v5529 = vadd.f32 %v5265, %v5405
        %v5530 = vadd.f32 %v5266, %v5410
        %v5531 = vadd.f32 %v5267, %v5413
        %v5532 = vadd.f32 %v5268, %v5418
        %v5533 = vadd.f32 %v5269, %v5421
        %v5534 = vadd.f32 %v5270, %v5426
        %v5535 = vadd.f32 %v5271, %v5429
        %v5536 = vadd.f32 %v5272, %v5434
        %v5537 = vadd.f32 %v5273, %v5437
        %v5538 = vadd.f32 %v5274, %v5442
        %v5539 = vadd.f32 %v5275, %v5445
        %v5540 = vadd.f32 %v5276, %v5450
        %v5541 = vadd.f32 %v5277, %v5453
        %v5542 = vadd.f32 %v5278, %v5458
        %v5543 = vadd.f32 %v5279, %v5461
        %v5544 = vadd.f32 %v5280, %v5466
        %v5545 = vadd.f32 %v5281, %v5469
        %v5546 = vadd.f32 %v5282, %v5474
        %v5547 = vadd.f32 %v5283, %v5477
        %v5548 = vadd.f32 %v5284, %v5482
        %v5549 = vadd.f32 %v5285, %v5485
        %v5550 = vadd.f32 %v5286, %v5490
        %v5551 = vadd.f32 %v5287, %v5493
        %v5552 = vadd.f32 %v5288, %v5498
        %v5553 = vadd.f32 %v5289, %v5501
        %v5554 = vadd.f32 %v5290, %v5506
        %v5555 = vadd.f32 %v5291, %v5509
        %v5556 = vadd.f32 %v5292, %v5514
        %v5557 = vadd.f32 %v5293, %v5517
        %v5558 = vadd.f32 %v5294, %v5522
        %v5559 = vadd.f32 %v5295, %v5525
        %s5560 = scalar_lea.vmem %s3, 384
        %v5561 = vld [vmem:[%s5560] sm:$0xf]
        %v5562 = vld [vmem:[%s5560 + $0x4] sm:$0xf]
        %v5563 = vld [vmem:[%s5560 + $0x8] sm:$0xf]
        %v5564 = vld [vmem:[%s5560 + $0xc] sm:$0xf]
        %v5565 = vld [vmem:[%s5560 + $0x10] sm:$0xf]
        %v5566 = vld [vmem:[%s5560 + $0x14] sm:$0xf]
        %v5567 = vld [vmem:[%s5560 + $0x18] sm:$0xf]
        %v5568 = vld [vmem:[%s5560 + $0x1c] sm:$0xf]
        %v5569 = vld [vmem:[%s5560 + $0x20] sm:$0xf]
        %v5570 = vld [vmem:[%s5560 + $0x24] sm:$0xf]
        %v5571 = vld [vmem:[%s5560 + $0x28] sm:$0xf]
        %v5572 = vld [vmem:[%s5560 + $0x2c] sm:$0xf]
        %v5573 = vld [vmem:[%s5560 + $0x30] sm:$0xf]
        %v5574 = vld [vmem:[%s5560 + $0x34] sm:$0xf]
        %v5575 = vld [vmem:[%s5560 + $0x38] sm:$0xf]
        %v5576 = vld [vmem:[%s5560 + $0x3c] sm:$0xf]
        %v5593 = vunpack.c.l.b16 %v5561
        %v5594 = vunpack.c.l.b16 %v5562
        %v5595 = vunpack.c.l.b16 %v5563
        %v5596 = vunpack.c.l.b16 %v5564
        %v5597 = vunpack.c.l.b16 %v5565
        %v5598 = vunpack.c.l.b16 %v5566
        %v5599 = vunpack.c.l.b16 %v5567
        %v5600 = vunpack.c.l.b16 %v5568
        %v5601 = vunpack.c.l.b16 %v5569
        %v5602 = vunpack.c.l.b16 %v5570
        %v5603 = vunpack.c.l.b16 %v5571
        %v5604 = vunpack.c.l.b16 %v5572
        %v5605 = vunpack.c.l.b16 %v5573
        %v5606 = vunpack.c.l.b16 %v5574
        %v5607 = vunpack.c.l.b16 %v5575
        %v5608 = vunpack.c.l.b16 %v5576
        %v5609 = vpack.c.b16 %v5594, %v5593
        %v5610 = vpack.c.b16 %v5596, %v5595
        %v5611 = vpack.c.b16 %v5598, %v5597
        %v5612 = vpack.c.b16 %v5600, %v5599
        %v5613 = vpack.c.b16 %v5602, %v5601
        %v5614 = vpack.c.b16 %v5604, %v5603
        %v5615 = vpack.c.b16 %v5606, %v5605
        %v5616 = vpack.c.b16 %v5608, %v5607
        %5625 = vmatprep.subr.bf16.mxu0 0
        %5626 = vmatpush1.bf16.msra.mxu0 %v5609
        %5627 = vmatprep.subr.bf16.mxu0 0
        %5628 = vmatpush1.bf16.msra.mxu0 %v5610
        %5629 = vmatprep.subr.bf16.mxu0 0
        %5630 = vmatpush1.bf16.msra.mxu0 %v5611
        %5631 = vmatprep.subr.bf16.mxu0 0
        %5632 = vmatpush1.bf16.msra.mxu0 %v5612
        %5633 = vmatprep.subr.bf16.mxu0 0
        %5634 = vmatpush1.bf16.msra.mxu0 %v5613
        %5635 = vmatprep.subr.bf16.mxu0 0
        %5636 = vmatpush1.bf16.msra.mxu0 %v5614
        %5637 = vmatprep.subr.bf16.mxu0 0
        %5638 = vmatpush1.bf16.msra.mxu0 %v5615
        %5639 = vmatprep.subr.bf16.mxu0 0
        %5640 = vmatpush1.bf16.msra.mxu0 %v5616
        %5641 = vmatprep.subr.bf16.mxu0 0
        %5642 = vmatpush1.bf16.msra.mxu0 0
        %5643 = vmatprep.subr.bf16.mxu0 0
        %5644 = vmatpush1.bf16.msra.mxu0 0
        %5645 = vmatprep.subr.bf16.mxu0 0
        %5646 = vmatpush1.bf16.msra.mxu0 0
        %5647 = vmatprep.subr.bf16.mxu0 0
        %5648 = vmatpush1.bf16.msra.mxu0 0
        %5649 = vmatprep.subr.bf16.mxu0 0
        %5650 = vmatpush1.bf16.msra.mxu0 0
        %5651 = vmatprep.subr.bf16.mxu0 0
        %5652 = vmatpush1.bf16.msra.mxu0 0
        %5653 = vmatprep.subr.bf16.mxu0 0
        %5654 = vmatpush1.bf16.msra.mxu0 0
        %5655 = vmatprep.subr.bf16.mxu0 0
        %5656 = vmatpush1.bf16.msra.mxu0 0
        %5657 = vmatprep.mubr.bf16.mxu0 0
        %5658 = vmatmul.mubr.bf16.gmra.mrb[0].mxu0 %v3720
        %v5659 = vpop.f32.mrb[0].mxu0
        %v5660 = vadd.f32 0.0, %v5659
        %v5661 = vpop.f32.mrb[0].mxu0
        %v5662 = vpop.f32.mrb[0].mxu0
        %v5663 = vadd.f32 0.0, %v5662
        %v5664 = vpop.f32.mrb[0].mxu0
        %5665 = vmatprep.mubr.bf16.mxu0 0
        %5666 = vmatmul.mubr.bf16.gmra.mrb[0].mxu0 %v3722
        %v5667 = vpop.f32.mrb[0].mxu0
        %v5668 = vadd.f32 0.0, %v5667
        %v5669 = vpop.f32.mrb[0].mxu0
        %v5670 = vpop.f32.mrb[0].mxu0
        %v5671 = vadd.f32 0.0, %v5670
        %v5672 = vpop.f32.mrb[0].mxu0
        %5673 = vmatprep.mubr.bf16.mxu0 0
        %5674 = vmatmul.mubr.bf16.gmra.mrb[0].mxu0 %v3724
        %v5675 = vpop.f32.mrb[0].mxu0
        %v5676 = vadd.f32 0.0, %v5675
        %v5677 = vpop.f32.mrb[0].mxu0
        %v5678 = vpop.f32.mrb[0].mxu0
        %v5679 = vadd.f32 0.0, %v5678
        %v5680 = vpop.f32.mrb[0].mxu0
        %5681 = vmatprep.mubr.bf16.mxu0 0
        %5682 = vmatmul.mubr.bf16.gmra.mrb[0].mxu0 %v3726
        %v5683 = vpop.f32.mrb[0].mxu0
        %v5684 = vadd.f32 0.0, %v5683
        %v5685 = vpop.f32.mrb[0].mxu0
        %v5686 = vpop.f32.mrb[0].mxu0
        %v5687 = vadd.f32 0.0, %v5686
        %v5688 = vpop.f32.mrb[0].mxu0
        %5689 = vmatprep.mubr.bf16.mxu0 0
        %5690 = vmatmul.mubr.bf16.gmra.mrb[0].mxu0 %v3728
        %v5691 = vpop.f32.mrb[0].mxu0
        %v5692 = vadd.f32 0.0, %v5691
        %v5693 = vpop.f32.mrb[0].mxu0
        %v5694 = vpop.f32.mrb[0].mxu0
        %v5695 = vadd.f32 0.0, %v5694
        %v5696 = vpop.f32.mrb[0].mxu0
        %5697 = vmatprep.mubr.bf16.mxu0 0
        %5698 = vmatmul.mubr.bf16.gmra.mrb[0].mxu0 %v3730
        %v5699 = vpop.f32.mrb[0].mxu0
        %v5700 = vadd.f32 0.0, %v5699
        %v5701 = vpop.f32.mrb[0].mxu0
        %v5702 = vpop.f32.mrb[0].mxu0
        %v5703 = vadd.f32 0.0, %v5702
        %v5704 = vpop.f32.mrb[0].mxu0
        %5705 = vmatprep.mubr.bf16.mxu0 0
        %5706 = vmatmul.mubr.bf16.gmra.mrb[0].mxu0 %v3732
        %v5707 = vpop.f32.mrb[0].mxu0
        %v5708 = vadd.f32 0.0, %v5707
        %v5709 = vpop.f32.mrb[0].mxu0
        %v5710 = vpop.f32.mrb[0].mxu0
        %v5711 = vadd.f32 0.0, %v5710
        %v5712 = vpop.f32.mrb[0].mxu0
        %5713 = vmatprep.mubr.bf16.mxu0 0
        %5714 = vmatmul.mubr.bf16.gmra.mrb[0].mxu0 %v3734
        %v5715 = vpop.f32.mrb[0].mxu0
        %v5716 = vadd.f32 0.0, %v5715
        %v5717 = vpop.f32.mrb[0].mxu0
        %v5718 = vpop.f32.mrb[0].mxu0
        %v5719 = vadd.f32 0.0, %v5718
        %v5720 = vpop.f32.mrb[0].mxu0
        %5721 = vmatprep.mubr.bf16.mxu0 0
        %5722 = vmatmul.mubr.bf16.gmra.mrb[0].mxu0 %v3736
        %v5723 = vpop.f32.mrb[0].mxu0
        %v5724 = vadd.f32 0.0, %v5723
        %v5725 = vpop.f32.mrb[0].mxu0
        %v5726 = vpop.f32.mrb[0].mxu0
        %v5727 = vadd.f32 0.0, %v5726
        %v5728 = vpop.f32.mrb[0].mxu0
        %5729 = vmatprep.mubr.bf16.mxu0 0
        %5730 = vmatmul.mubr.bf16.gmra.mrb[0].mxu0 %v3738
        %v5731 = vpop.f32.mrb[0].mxu0
        %v5732 = vadd.f32 0.0, %v5731
        %v5733 = vpop.f32.mrb[0].mxu0
        %v5734 = vpop.f32.mrb[0].mxu0
        %v5735 = vadd.f32 0.0, %v5734
        %v5736 = vpop.f32.mrb[0].mxu0
        %5737 = vmatprep.mubr.bf16.mxu0 0
        %5738 = vmatmul.mubr.bf16.gmra.mrb[0].mxu0 %v3740
        %v5739 = vpop.f32.mrb[0].mxu0
        %v5740 = vadd.f32 0.0, %v5739
        %v5741 = vpop.f32.mrb[0].mxu0
        %v5742 = vpop.f32.mrb[0].mxu0
        %v5743 = vadd.f32 0.0, %v5742
        %v5744 = vpop.f32.mrb[0].mxu0
        %5745 = vmatprep.mubr.bf16.mxu0 0
        %5746 = vmatmul.mubr.bf16.gmra.mrb[0].mxu0 %v3742
        %v5747 = vpop.f32.mrb[0].mxu0
        %v5748 = vadd.f32 0.0, %v5747
        %v5749 = vpop.f32.mrb[0].mxu0
        %v5750 = vpop.f32.mrb[0].mxu0
        %v5751 = vadd.f32 0.0, %v5750
        %v5752 = vpop.f32.mrb[0].mxu0
        %5753 = vmatprep.mubr.bf16.mxu0 0
        %5754 = vmatmul.mubr.bf16.gmra.mrb[0].mxu0 %v3744
        %v5755 = vpop.f32.mrb[0].mxu0
        %v5756 = vadd.f32 0.0, %v5755
        %v5757 = vpop.f32.mrb[0].mxu0
        %v5758 = vpop.f32.mrb[0].mxu0
        %v5759 = vadd.f32 0.0, %v5758
        %v5760 = vpop.f32.mrb[0].mxu0
        %5761 = vmatprep.mubr.bf16.mxu0 0
        %5762 = vmatmul.mubr.bf16.gmra.mrb[0].mxu0 %v3746
        %v5763 = vpop.f32.mrb[0].mxu0
        %v5764 = vadd.f32 0.0, %v5763
        %v5765 = vpop.f32.mrb[0].mxu0
        %v5766 = vpop.f32.mrb[0].mxu0
        %v5767 = vadd.f32 0.0, %v5766
        %v5768 = vpop.f32.mrb[0].mxu0
        %5769 = vmatprep.mubr.bf16.mxu0 0
        %5770 = vmatmul.mubr.bf16.gmra.mrb[0].mxu0 %v3748
        %v5771 = vpop.f32.mrb[0].mxu0
        %v5772 = vadd.f32 0.0, %v5771
        %v5773 = vpop.f32.mrb[0].mxu0
        %v5774 = vpop.f32.mrb[0].mxu0
        %v5775 = vadd.f32 0.0, %v5774
        %v5776 = vpop.f32.mrb[0].mxu0
        %5777 = vmatprep.mubr.bf16.mxu0 0
        %5778 = vmatmul.mubr.bf16.gmra.mrb[0].mxu0 %v3750
        %v5779 = vpop.f32.mrb[0].mxu0
        %v5780 = vadd.f32 0.0, %v5779
        %v5781 = vpop.f32.mrb[0].mxu0
        %v5782 = vpop.f32.mrb[0].mxu0
        %v5783 = vadd.f32 0.0, %v5782
        %v5784 = vpop.f32.mrb[0].mxu0
        %5785 = vdwg.mxu0
        %v5786 = vadd.f32 %v5528, %v5660
        %v5787 = vadd.f32 %v5529, %v5663
        %v5788 = vadd.f32 %v5530, %v5668
        %v5789 = vadd.f32 %v5531, %v5671
        %v5790 = vadd.f32 %v5532, %v5676
        %v5791 = vadd.f32 %v5533, %v5679
        %v5792 = vadd.f32 %v5534, %v5684
        %v5793 = vadd.f32 %v5535, %v5687
        %v5794 = vadd.f32 %v5536, %v5692
        %v5795 = vadd.f32 %v5537, %v5695
        %v5796 = vadd.f32 %v5538, %v5700
        %v5797 = vadd.f32 %v5539, %v5703
        %v5798 = vadd.f32 %v5540, %v5708
        %v5799 = vadd.f32 %v5541, %v5711
        %v5800 = vadd.f32 %v5542, %v5716
        %v5801 = vadd.f32 %v5543, %v5719
        %v5802 = vadd.f32 %v5544, %v5724
        %v5803 = vadd.f32 %v5545, %v5727
        %v5804 = vadd.f32 %v5546, %v5732
        %v5805 = vadd.f32 %v5547, %v5735
        %v5806 = vadd.f32 %v5548, %v5740
        %v5807 = vadd.f32 %v5549, %v5743
        %v5808 = vadd.f32 %v5550, %v5748
        %v5809 = vadd.f32 %v5551, %v5751
        %v5810 = vadd.f32 %v5552, %v5756
        %v5811 = vadd.f32 %v5553, %v5759
        %v5812 = vadd.f32 %v5554, %v5764
        %v5813 = vadd.f32 %v5555, %v5767
        %v5814 = vadd.f32 %v5556, %v5772
        %v5815 = vadd.f32 %v5557, %v5775
        %v5816 = vadd.f32 %v5558, %v5780
        %v5817 = vadd.f32 %v5559, %v5783
        %v5819 = vshrl.u32 %v3750, 16
        %v5821 = vshll.u32 %v3750, 16
        %v5823 = vrot.slane %v5821, 1
        %v5824 = vor.u32 %v5819, %v5823
        %v5826 = vshll.u32 %v3751, 16
        %v5828 = vrot.slane %v5826, 1
        %v5829 = vsel %vm3768, %v5824, %v5828
        %s5831 = scalar_lea.vmem %s3, 448
        %v5832 = vld [vmem:[%s5831] sm:$0xf]
        %v5833 = vld [vmem:[%s5831 + $0x4] sm:$0xf]
        %v5834 = vld [vmem:[%s5831 + $0x8] sm:$0xf]
        %v5835 = vld [vmem:[%s5831 + $0xc] sm:$0xf]
        %v5836 = vld [vmem:[%s5831 + $0x10] sm:$0xf]
        %v5837 = vld [vmem:[%s5831 + $0x14] sm:$0xf]
        %v5838 = vld [vmem:[%s5831 + $0x18] sm:$0xf]
        %v5839 = vld [vmem:[%s5831 + $0x1c] sm:$0xf]
        %v5840 = vld [vmem:[%s5831 + $0x20] sm:$0xf]
        %v5841 = vld [vmem:[%s5831 + $0x24] sm:$0xf]
        %v5842 = vld [vmem:[%s5831 + $0x28] sm:$0xf]
        %v5843 = vld [vmem:[%s5831 + $0x2c] sm:$0xf]
        %v5844 = vld [vmem:[%s5831 + $0x30] sm:$0xf]
        %v5845 = vld [vmem:[%s5831 + $0x34] sm:$0xf]
        %v5846 = vld [vmem:[%s5831 + $0x38] sm:$0xf]
        %v5847 = vld [vmem:[%s5831 + $0x3c] sm:$0xf]
        %v5864 = vunpack.c.l.b16 %v5832
        %v5865 = vunpack.c.l.b16 %v5833
        %v5866 = vunpack.c.l.b16 %v5834
        %v5867 = vunpack.c.l.b16 %v5835
        %v5868 = vunpack.c.l.b16 %v5836
        %v5869 = vunpack.c.l.b16 %v5837
        %v5870 = vunpack.c.l.b16 %v5838
        %v5871 = vunpack.c.l.b16 %v5839
        %v5872 = vunpack.c.l.b16 %v5840
        %v5873 = vunpack.c.l.b16 %v5841
        %v5874 = vunpack.c.l.b16 %v5842
        %v5875 = vunpack.c.l.b16 %v5843
        %v5876 = vunpack.c.l.b16 %v5844
        %v5877 = vunpack.c.l.b16 %v5845
        %v5878 = vunpack.c.l.b16 %v5846
        %v5879 = vunpack.c.l.b16 %v5847
        %v5880 = vpack.c.b16 %v5865, %v5864
        %v5881 = vpack.c.b16 %v5867, %v5866
        %v5882 = vpack.c.b16 %v5869, %v5868
        %v5883 = vpack.c.b16 %v5871, %v5870
        %v5884 = vpack.c.b16 %v5873, %v5872
        %v5885 = vpack.c.b16 %v5875, %v5874
        %v5886 = vpack.c.b16 %v5877, %v5876
        %v5887 = vpack.c.b16 %v5879, %v5878
        %5896 = vmatprep.subr.bf16.mxu0 0
        %5897 = vmatpush1.bf16.msra.mxu0 %v5880
        %5898 = vmatprep.subr.bf16.mxu0 0
        %5899 = vmatpush1.bf16.msra.mxu0 %v5881
        %5900 = vmatprep.subr.bf16.mxu0 0
        %5901 = vmatpush1.bf16.msra.mxu0 %v5882
        %5902 = vmatprep.subr.bf16.mxu0 0
        %5903 = vmatpush1.bf16.msra.mxu0 %v5883
        %5904 = vmatprep.subr.bf16.mxu0 0
        %5905 = vmatpush1.bf16.msra.mxu0 %v5884
        %5906 = vmatprep.subr.bf16.mxu0 0
        %5907 = vmatpush1.bf16.msra.mxu0 %v5885
        %5908 = vmatprep.subr.bf16.mxu0 0
        %5909 = vmatpush1.bf16.msra.mxu0 %v5886
        %5910 = vmatprep.subr.bf16.mxu0 0
        %5911 = vmatpush1.bf16.msra.mxu0 %v5887
        %5912 = vmatprep.subr.bf16.mxu0 0
        %5913 = vmatpush1.bf16.msra.mxu0 0
        %5914 = vmatprep.subr.bf16.mxu0 0
        %5915 = vmatpush1.bf16.msra.mxu0 0
        %5916 = vmatprep.subr.bf16.mxu0 0
        %5917 = vmatpush1.bf16.msra.mxu0 0
        %5918 = vmatprep.subr.bf16.mxu0 0
        %5919 = vmatpush1.bf16.msra.mxu0 0
        %5920 = vmatprep.subr.bf16.mxu0 0
        %5921 = vmatpush1.bf16.msra.mxu0 0
        %5922 = vmatprep.subr.bf16.mxu0 0
        %5923 = vmatpush1.bf16.msra.mxu0 0
        %5924 = vmatprep.subr.bf16.mxu0 0
        %5925 = vmatpush1.bf16.msra.mxu0 0
        %5926 = vmatprep.subr.bf16.mxu0 0
        %5927 = vmatpush1.bf16.msra.mxu0 0
        %5928 = vmatprep.mubr.bf16.mxu0 0
        %5929 = vmatmul.mubr.bf16.gmra.mrb[0].mxu0 %v3804
        %v5930 = vpop.f32.mrb[0].mxu0
        %v5931 = vadd.f32 0.0, %v5930
        %v5932 = vpop.f32.mrb[0].mxu0
        %v5933 = vpop.f32.mrb[0].mxu0
        %v5934 = vadd.f32 0.0, %v5933
        %v5935 = vpop.f32.mrb[0].mxu0
        %5936 = vmatprep.mubr.bf16.mxu0 0
        %5937 = vmatmul.mubr.bf16.gmra.mrb[0].mxu0 %v3816
        %v5938 = vpop.f32.mrb[0].mxu0
        %v5939 = vadd.f32 0.0, %v5938
        %v5940 = vpop.f32.mrb[0].mxu0
        %v5941 = vpop.f32.mrb[0].mxu0
        %v5942 = vadd.f32 0.0, %v5941
        %v5943 = vpop.f32.mrb[0].mxu0
        %5944 = vmatprep.mubr.bf16.mxu0 0
        %5945 = vmatmul.mubr.bf16.gmra.mrb[0].mxu0 %v3828
        %v5946 = vpop.f32.mrb[0].mxu0
        %v5947 = vadd.f32 0.0, %v5946
        %v5948 = vpop.f32.mrb[0].mxu0
        %v5949 = vpop.f32.mrb[0].mxu0
        %v5950 = vadd.f32 0.0, %v5949
        %v5951 = vpop.f32.mrb[0].mxu0
        %5952 = vmatprep.mubr.bf16.mxu0 0
        %5953 = vmatmul.mubr.bf16.gmra.mrb[0].mxu0 %v3840
        %v5954 = vpop.f32.mrb[0].mxu0
        %v5955 = vadd.f32 0.0, %v5954
        %v5956 = vpop.f32.mrb[0].mxu0
        %v5957 = vpop.f32.mrb[0].mxu0
        %v5958 = vadd.f32 0.0, %v5957
        %v5959 = vpop.f32.mrb[0].mxu0
        %5960 = vmatprep.mubr.bf16.mxu0 0
        %5961 = vmatmul.mubr.bf16.gmra.mrb[0].mxu0 %v3852
        %v5962 = vpop.f32.mrb[0].mxu0
        %v5963 = vadd.f32 0.0, %v5962
        %v5964 = vpop.f32.mrb[0].mxu0
        %v5965 = vpop.f32.mrb[0].mxu0
        %v5966 = vadd.f32 0.0, %v5965
        %v5967 = vpop.f32.mrb[0].mxu0
        %5968 = vmatprep.mubr.bf16.mxu0 0
        %5969 = vmatmul.mubr.bf16.gmra.mrb[0].mxu0 %v3864
        %v5970 = vpop.f32.mrb[0].mxu0
        %v5971 = vadd.f32 0.0, %v5970
        %v5972 = vpop.f32.mrb[0].mxu0
        %v5973 = vpop.f32.mrb[0].mxu0
        %v5974 = vadd.f32 0.0, %v5973
        %v5975 = vpop.f32.mrb[0].mxu0
        %5976 = vmatprep.mubr.bf16.mxu0 0
        %5977 = vmatmul.mubr.bf16.gmra.mrb[0].mxu0 %v3876
        %v5978 = vpop.f32.mrb[0].mxu0
        %v5979 = vadd.f32 0.0, %v5978
        %v5980 = vpop.f32.mrb[0].mxu0
        %v5981 = vpop.f32.mrb[0].mxu0
        %v5982 = vadd.f32 0.0, %v5981
        %v5983 = vpop.f32.mrb[0].mxu0
        %5984 = vmatprep.mubr.bf16.mxu0 0
        %5985 = vmatmul.mubr.bf16.gmra.mrb[0].mxu0 %v3888
        %v5986 = vpop.f32.mrb[0].mxu0
        %v5987 = vadd.f32 0.0, %v5986
        %v5988 = vpop.f32.mrb[0].mxu0
        %v5989 = vpop.f32.mrb[0].mxu0
        %v5990 = vadd.f32 0.0, %v5989
        %v5991 = vpop.f32.mrb[0].mxu0
        %5992 = vmatprep.mubr.bf16.mxu0 0
        %5993 = vmatmul.mubr.bf16.gmra.mrb[0].mxu0 %v3900
        %v5994 = vpop.f32.mrb[0].mxu0
        %v5995 = vadd.f32 0.0, %v5994
        %v5996 = vpop.f32.mrb[0].mxu0
        %v5997 = vpop.f32.mrb[0].mxu0
        %v5998 = vadd.f32 0.0, %v5997
        %v5999 = vpop.f32.mrb[0].mxu0
        %6000 = vmatprep.mubr.bf16.mxu0 0
        %6001 = vmatmul.mubr.bf16.gmra.mrb[0].mxu0 %v3912
        %v6002 = vpop.f32.mrb[0].mxu0
        %v6003 = vadd.f32 0.0, %v6002
        %v6004 = vpop.f32.mrb[0].mxu0
        %v6005 = vpop.f32.mrb[0].mxu0
        %v6006 = vadd.f32 0.0, %v6005
        %v6007 = vpop.f32.mrb[0].mxu0
        %6008 = vmatprep.mubr.bf16.mxu0 0
        %6009 = vmatmul.mubr.bf16.gmra.mrb[0].mxu0 %v3924
        %v6010 = vpop.f32.mrb[0].mxu0
        %v6011 = vadd.f32 0.0, %v6010
        %v6012 = vpop.f32.mrb[0].mxu0
        %v6013 = vpop.f32.mrb[0].mxu0
        %v6014 = vadd.f32 0.0, %v6013
        %v6015 = vpop.f32.mrb[0].mxu0
        %6016 = vmatprep.mubr.bf16.mxu0 0
        %6017 = vmatmul.mubr.bf16.gmra.mrb[0].mxu0 %v3936
        %v6018 = vpop.f32.mrb[0].mxu0
        %v6019 = vadd.f32 0.0, %v6018
        %v6020 = vpop.f32.mrb[0].mxu0
        %v6021 = vpop.f32.mrb[0].mxu0
        %v6022 = vadd.f32 0.0, %v6021
        %v6023 = vpop.f32.mrb[0].mxu0
        %6024 = vmatprep.mubr.bf16.mxu0 0
        %6025 = vmatmul.mubr.bf16.gmra.mrb[0].mxu0 %v3948
        %v6026 = vpop.f32.mrb[0].mxu0
        %v6027 = vadd.f32 0.0, %v6026
        %v6028 = vpop.f32.mrb[0].mxu0
        %v6029 = vpop.f32.mrb[0].mxu0
        %v6030 = vadd.f32 0.0, %v6029
        %v6031 = vpop.f32.mrb[0].mxu0
        %6032 = vmatprep.mubr.bf16.mxu0 0
        %6033 = vmatmul.mubr.bf16.gmra.mrb[0].mxu0 %v3960
        %v6034 = vpop.f32.mrb[0].mxu0
        %v6035 = vadd.f32 0.0, %v6034
        %v6036 = vpop.f32.mrb[0].mxu0
        %v6037 = vpop.f32.mrb[0].mxu0
        %v6038 = vadd.f32 0.0, %v6037
        %v6039 = vpop.f32.mrb[0].mxu0
        %6040 = vmatprep.mubr.bf16.mxu0 0
        %6041 = vmatmul.mubr.bf16.gmra.mrb[0].mxu0 %v5036
        %v6042 = vpop.f32.mrb[0].mxu0
        %v6043 = vadd.f32 0.0, %v6042
        %v6044 = vpop.f32.mrb[0].mxu0
        %v6045 = vpop.f32.mrb[0].mxu0
        %v6046 = vadd.f32 0.0, %v6045
        %v6047 = vpop.f32.mrb[0].mxu0
        %6048 = vmatprep.mubr.bf16.mxu0 0
        %6049 = vmatmul.mubr.bf16.gmra.mrb[0].mxu0 %v5829
        %v6050 = vpop.f32.mrb[0].mxu0
        %v6051 = vadd.f32 0.0, %v6050
        %v6052 = vpop.f32.mrb[0].mxu0
        %v6053 = vpop.f32.mrb[0].mxu0
        %v6054 = vadd.f32 0.0, %v6053
        %v6055 = vpop.f32.mrb[0].mxu0
        %6056 = vdwg.mxu0
        %v6057 = vadd.f32 %v5786, %v5931
        %v6058 = vadd.f32 %v5787, %v5934
        %v6059 = vadd.f32 %v5788, %v5939
        %v6060 = vadd.f32 %v5789, %v5942
        %v6061 = vadd.f32 %v5790, %v5947
        %v6062 = vadd.f32 %v5791, %v5950
        %v6063 = vadd.f32 %v5792, %v5955
        %v6064 = vadd.f32 %v5793, %v5958
        %v6065 = vadd.f32 %v5794, %v5963
        %v6066 = vadd.f32 %v5795, %v5966
        %v6067 = vadd.f32 %v5796, %v5971
        %v6068 = vadd.f32 %v5797, %v5974
        %v6069 = vadd.f32 %v5798, %v5979
        %v6070 = vadd.f32 %v5799, %v5982
        %v6071 = vadd.f32 %v5800, %v5987
        %v6072 = vadd.f32 %v5801, %v5990
        %v6073 = vadd.f32 %v5802, %v5995
        %v6074 = vadd.f32 %v5803, %v5998
        %v6075 = vadd.f32 %v5804, %v6003
        %v6076 = vadd.f32 %v5805, %v6006
        %v6077 = vadd.f32 %v5806, %v6011
        %v6078 = vadd.f32 %v5807, %v6014
        %v6079 = vadd.f32 %v5808, %v6019
        %v6080 = vadd.f32 %v5809, %v6022
        %v6081 = vadd.f32 %v5810, %v6027
        %v6082 = vadd.f32 %v5811, %v6030
        %v6083 = vadd.f32 %v5812, %v6035
        %v6084 = vadd.f32 %v5813, %v6038
        %v6085 = vadd.f32 %v5814, %v6043
        %v6086 = vadd.f32 %v5815, %v6046
        %v6087 = vadd.f32 %v5816, %v6051
        %v6088 = vadd.f32 %v5817, %v6054
        %v6091 = vrot.slane %v3750, 1
        %v6092 = vrot.slane %v3751, 1
        %v6093 = vsel %vm4444, %v6091, %v6092
        %s6095 = scalar_lea.vmem %s3, 512
        %v6096 = vld [vmem:[%s6095] sm:$0xf]
        %v6097 = vld [vmem:[%s6095 + $0x4] sm:$0xf]
        %v6098 = vld [vmem:[%s6095 + $0x8] sm:$0xf]
        %v6099 = vld [vmem:[%s6095 + $0xc] sm:$0xf]
        %v6100 = vld [vmem:[%s6095 + $0x10] sm:$0xf]
        %v6101 = vld [vmem:[%s6095 + $0x14] sm:$0xf]
        %v6102 = vld [vmem:[%s6095 + $0x18] sm:$0xf]
        %v6103 = vld [vmem:[%s6095 + $0x1c] sm:$0xf]
        %v6104 = vld [vmem:[%s6095 + $0x20] sm:$0xf]
        %v6105 = vld [vmem:[%s6095 + $0x24] sm:$0xf]
        %v6106 = vld [vmem:[%s6095 + $0x28] sm:$0xf]
        %v6107 = vld [vmem:[%s6095 + $0x2c] sm:$0xf]
        %v6108 = vld [vmem:[%s6095 + $0x30] sm:$0xf]
        %v6109 = vld [vmem:[%s6095 + $0x34] sm:$0xf]
        %v6110 = vld [vmem:[%s6095 + $0x38] sm:$0xf]
        %v6111 = vld [vmem:[%s6095 + $0x3c] sm:$0xf]
        %v6128 = vunpack.c.l.b16 %v6096
        %v6129 = vunpack.c.l.b16 %v6097
        %v6130 = vunpack.c.l.b16 %v6098
        %v6131 = vunpack.c.l.b16 %v6099
        %v6132 = vunpack.c.l.b16 %v6100
        %v6133 = vunpack.c.l.b16 %v6101
        %v6134 = vunpack.c.l.b16 %v6102
        %v6135 = vunpack.c.l.b16 %v6103
        %v6136 = vunpack.c.l.b16 %v6104
        %v6137 = vunpack.c.l.b16 %v6105
        %v6138 = vunpack.c.l.b16 %v6106
        %v6139 = vunpack.c.l.b16 %v6107
        %v6140 = vunpack.c.l.b16 %v6108
        %v6141 = vunpack.c.l.b16 %v6109
        %v6142 = vunpack.c.l.b16 %v6110
        %v6143 = vunpack.c.l.b16 %v6111
        %v6144 = vpack.c.b16 %v6129, %v6128
        %v6145 = vpack.c.b16 %v6131, %v6130
        %v6146 = vpack.c.b16 %v6133, %v6132
        %v6147 = vpack.c.b16 %v6135, %v6134
        %v6148 = vpack.c.b16 %v6137, %v6136
        %v6149 = vpack.c.b16 %v6139, %v6138
        %v6150 = vpack.c.b16 %v6141, %v6140
        %v6151 = vpack.c.b16 %v6143, %v6142
        %6160 = vmatprep.subr.bf16.mxu0 0
        %6161 = vmatpush1.bf16.msra.mxu0 %v6144
        %6162 = vmatprep.subr.bf16.mxu0 0
        %6163 = vmatpush1.bf16.msra.mxu0 %v6145
        %6164 = vmatprep.subr.bf16.mxu0 0
        %6165 = vmatpush1.bf16.msra.mxu0 %v6146
        %6166 = vmatprep.subr.bf16.mxu0 0
        %6167 = vmatpush1.bf16.msra.mxu0 %v6147
        %6168 = vmatprep.subr.bf16.mxu0 0
        %6169 = vmatpush1.bf16.msra.mxu0 %v6148
        %6170 = vmatprep.subr.bf16.mxu0 0
        %6171 = vmatpush1.bf16.msra.mxu0 %v6149
        %6172 = vmatprep.subr.bf16.mxu0 0
        %6173 = vmatpush1.bf16.msra.mxu0 %v6150
        %6174 = vmatprep.subr.bf16.mxu0 0
        %6175 = vmatpush1.bf16.msra.mxu0 %v6151
        %6176 = vmatprep.subr.bf16.mxu0 0
        %6177 = vmatpush1.bf16.msra.mxu0 0
        %6178 = vmatprep.subr.bf16.mxu0 0
        %6179 = vmatpush1.bf16.msra.mxu0 0
        %6180 = vmatprep.subr.bf16.mxu0 0
        %6181 = vmatpush1.bf16.msra.mxu0 0
        %6182 = vmatprep.subr.bf16.mxu0 0
        %6183 = vmatpush1.bf16.msra.mxu0 0
        %6184 = vmatprep.subr.bf16.mxu0 0
        %6185 = vmatpush1.bf16.msra.mxu0 0
        %6186 = vmatprep.subr.bf16.mxu0 0
        %6187 = vmatpush1.bf16.msra.mxu0 0
        %6188 = vmatprep.subr.bf16.mxu0 0
        %6189 = vmatpush1.bf16.msra.mxu0 0
        %6190 = vmatprep.subr.bf16.mxu0 0
        %6191 = vmatpush1.bf16.msra.mxu0 0
        %6192 = vmatprep.mubr.bf16.mxu0 0
        %6193 = vmatmul.mubr.bf16.gmra.mrb[0].mxu0 %v4453
        %v6194 = vpop.f32.mrb[0].mxu0
        %v6195 = vadd.f32 0.0, %v6194
        %v6196 = vpop.f32.mrb[0].mxu0
        %v6197 = vpop.f32.mrb[0].mxu0
        %v6198 = vadd.f32 0.0, %v6197
        %v6199 = vpop.f32.mrb[0].mxu0
        %6200 = vmatprep.mubr.bf16.mxu0 0
        %6201 = vmatmul.mubr.bf16.gmra.mrb[0].mxu0 %v4456
        %v6202 = vpop.f32.mrb[0].mxu0
        %v6203 = vadd.f32 0.0, %v6202
        %v6204 = vpop.f32.mrb[0].mxu0
        %v6205 = vpop.f32.mrb[0].mxu0
        %v6206 = vadd.f32 0.0, %v6205
        %v6207 = vpop.f32.mrb[0].mxu0
        %6208 = vmatprep.mubr.bf16.mxu0 0
        %6209 = vmatmul.mubr.bf16.gmra.mrb[0].mxu0 %v4459
        %v6210 = vpop.f32.mrb[0].mxu0
        %v6211 = vadd.f32 0.0, %v6210
        %v6212 = vpop.f32.mrb[0].mxu0
        %v6213 = vpop.f32.mrb[0].mxu0
        %v6214 = vadd.f32 0.0, %v6213
        %v6215 = vpop.f32.mrb[0].mxu0
        %6216 = vmatprep.mubr.bf16.mxu0 0
        %6217 = vmatmul.mubr.bf16.gmra.mrb[0].mxu0 %v4462
        %v6218 = vpop.f32.mrb[0].mxu0
        %v6219 = vadd.f32 0.0, %v6218
        %v6220 = vpop.f32.mrb[0].mxu0
        %v6221 = vpop.f32.mrb[0].mxu0
        %v6222 = vadd.f32 0.0, %v6221
        %v6223 = vpop.f32.mrb[0].mxu0
        %6224 = vmatprep.mubr.bf16.mxu0 0
        %6225 = vmatmul.mubr.bf16.gmra.mrb[0].mxu0 %v4465
        %v6226 = vpop.f32.mrb[0].mxu0
        %v6227 = vadd.f32 0.0, %v6226
        %v6228 = vpop.f32.mrb[0].mxu0
        %v6229 = vpop.f32.mrb[0].mxu0
        %v6230 = vadd.f32 0.0, %v6229
        %v6231 = vpop.f32.mrb[0].mxu0
        %6232 = vmatprep.mubr.bf16.mxu0 0
        %6233 = vmatmul.mubr.bf16.gmra.mrb[0].mxu0 %v4468
        %v6234 = vpop.f32.mrb[0].mxu0
        %v6235 = vadd.f32 0.0, %v6234
        %v6236 = vpop.f32.mrb[0].mxu0
        %v6237 = vpop.f32.mrb[0].mxu0
        %v6238 = vadd.f32 0.0, %v6237
        %v6239 = vpop.f32.mrb[0].mxu0
        %6240 = vmatprep.mubr.bf16.mxu0 0
        %6241 = vmatmul.mubr.bf16.gmra.mrb[0].mxu0 %v4471
        %v6242 = vpop.f32.mrb[0].mxu0
        %v6243 = vadd.f32 0.0, %v6242
        %v6244 = vpop.f32.mrb[0].mxu0
        %v6245 = vpop.f32.mrb[0].mxu0
        %v6246 = vadd.f32 0.0, %v6245
        %v6247 = vpop.f32.mrb[0].mxu0
        %6248 = vmatprep.mubr.bf16.mxu0 0
        %6249 = vmatmul.mubr.bf16.gmra.mrb[0].mxu0 %v4474
        %v6250 = vpop.f32.mrb[0].mxu0
        %v6251 = vadd.f32 0.0, %v6250
        %v6252 = vpop.f32.mrb[0].mxu0
        %v6253 = vpop.f32.mrb[0].mxu0
        %v6254 = vadd.f32 0.0, %v6253
        %v6255 = vpop.f32.mrb[0].mxu0
        %6256 = vmatprep.mubr.bf16.mxu0 0
        %6257 = vmatmul.mubr.bf16.gmra.mrb[0].mxu0 %v4477
        %v6258 = vpop.f32.mrb[0].mxu0
        %v6259 = vadd.f32 0.0, %v6258
        %v6260 = vpop.f32.mrb[0].mxu0
        %v6261 = vpop.f32.mrb[0].mxu0
        %v6262 = vadd.f32 0.0, %v6261
        %v6263 = vpop.f32.mrb[0].mxu0
        %6264 = vmatprep.mubr.bf16.mxu0 0
        %6265 = vmatmul.mubr.bf16.gmra.mrb[0].mxu0 %v4480
        %v6266 = vpop.f32.mrb[0].mxu0
        %v6267 = vadd.f32 0.0, %v6266
        %v6268 = vpop.f32.mrb[0].mxu0
        %v6269 = vpop.f32.mrb[0].mxu0
        %v6270 = vadd.f32 0.0, %v6269
        %v6271 = vpop.f32.mrb[0].mxu0
        %6272 = vmatprep.mubr.bf16.mxu0 0
        %6273 = vmatmul.mubr.bf16.gmra.mrb[0].mxu0 %v4483
        %v6274 = vpop.f32.mrb[0].mxu0
        %v6275 = vadd.f32 0.0, %v6274
        %v6276 = vpop.f32.mrb[0].mxu0
        %v6277 = vpop.f32.mrb[0].mxu0
        %v6278 = vadd.f32 0.0, %v6277
        %v6279 = vpop.f32.mrb[0].mxu0
        %6280 = vmatprep.mubr.bf16.mxu0 0
        %6281 = vmatmul.mubr.bf16.gmra.mrb[0].mxu0 %v4486
        %v6282 = vpop.f32.mrb[0].mxu0
        %v6283 = vadd.f32 0.0, %v6282
        %v6284 = vpop.f32.mrb[0].mxu0
        %v6285 = vpop.f32.mrb[0].mxu0
        %v6286 = vadd.f32 0.0, %v6285
        %v6287 = vpop.f32.mrb[0].mxu0
        %6288 = vmatprep.mubr.bf16.mxu0 0
        %6289 = vmatmul.mubr.bf16.gmra.mrb[0].mxu0 %v4489
        %v6290 = vpop.f32.mrb[0].mxu0
        %v6291 = vadd.f32 0.0, %v6290
        %v6292 = vpop.f32.mrb[0].mxu0
        %v6293 = vpop.f32.mrb[0].mxu0
        %v6294 = vadd.f32 0.0, %v6293
        %v6295 = vpop.f32.mrb[0].mxu0
        %6296 = vmatprep.mubr.bf16.mxu0 0
        %6297 = vmatmul.mubr.bf16.gmra.mrb[0].mxu0 %v4492
        %v6298 = vpop.f32.mrb[0].mxu0
        %v6299 = vadd.f32 0.0, %v6298
        %v6300 = vpop.f32.mrb[0].mxu0
        %v6301 = vpop.f32.mrb[0].mxu0
        %v6302 = vadd.f32 0.0, %v6301
        %v6303 = vpop.f32.mrb[0].mxu0
        %6304 = vmatprep.mubr.bf16.mxu0 0
        %6305 = vmatmul.mubr.bf16.gmra.mrb[0].mxu0 %v5300
        %v6306 = vpop.f32.mrb[0].mxu0
        %v6307 = vadd.f32 0.0, %v6306
        %v6308 = vpop.f32.mrb[0].mxu0
        %v6309 = vpop.f32.mrb[0].mxu0
        %v6310 = vadd.f32 0.0, %v6309
        %v6311 = vpop.f32.mrb[0].mxu0
        %6312 = vmatprep.mubr.bf16.mxu0 0
        %6313 = vmatmul.mubr.bf16.gmra.mrb[0].mxu0 %v6093
        %v6314 = vpop.f32.mrb[0].mxu0
        %v6315 = vadd.f32 0.0, %v6314
        %v6316 = vpop.f32.mrb[0].mxu0
        %v6317 = vpop.f32.mrb[0].mxu0
        %v6318 = vadd.f32 0.0, %v6317
        %v6319 = vpop.f32.mrb[0].mxu0
        %6320 = vdwg.mxu0
        %v6321 = vadd.f32 %v6057, %v6195
        %v6322 = vadd.f32 %v6058, %v6198
        %v6323 = vadd.f32 %v6059, %v6203
        %v6324 = vadd.f32 %v6060, %v6206
        %v6325 = vadd.f32 %v6061, %v6211
        %v6326 = vadd.f32 %v6062, %v6214
        %v6327 = vadd.f32 %v6063, %v6219
        %v6328 = vadd.f32 %v6064, %v6222
        %v6329 = vadd.f32 %v6065, %v6227
        %v6330 = vadd.f32 %v6066, %v6230
        %v6331 = vadd.f32 %v6067, %v6235
        %v6332 = vadd.f32 %v6068, %v6238
        %v6333 = vadd.f32 %v6069, %v6243
        %v6334 = vadd.f32 %v6070, %v6246
        %v6335 = vadd.f32 %v6071, %v6251
        %v6336 = vadd.f32 %v6072, %v6254
        %v6337 = vadd.f32 %v6073, %v6259
        %v6338 = vadd.f32 %v6074, %v6262
        %v6339 = vadd.f32 %v6075, %v6267
        %v6340 = vadd.f32 %v6076, %v6270
        %v6341 = vadd.f32 %v6077, %v6275
        %v6342 = vadd.f32 %v6078, %v6278
        %v6343 = vadd.f32 %v6079, %v6283
        %v6344 = vadd.f32 %v6080, %v6286
        %v6345 = vadd.f32 %v6081, %v6291
        %v6346 = vadd.f32 %v6082, %v6294
        %v6347 = vadd.f32 %v6083, %v6299
        %v6348 = vadd.f32 %v6084, %v6302
        %v6349 = vadd.f32 %v6085, %v6307
        %v6350 = vadd.f32 %v6086, %v6310
        %v6351 = vadd.f32 %v6087, %v6315
        %v6352 = vadd.f32 %v6088, %v6318
        %vm6353 = vcmask 1046528
        %v6354 = vrot.slane %v227, 1
        %v6355 = vrot.slane %v228, 1
        %v6356 = vsel %vm6353, %v6354, %v6355
        %v6357 = vrot.slane %v229, 1
        %v6358 = vsel %vm6353, %v6355, %v6357
        %v6359 = vrot.slane %v230, 1
        %v6360 = vrot.slane %v231, 1
        %v6361 = vsel %vm6353, %v6359, %v6360
        %v6362 = vrot.slane %v232, 1
        %v6363 = vsel %vm6353, %v6360, %v6362
        %v6364 = vrot.slane %v233, 1
        %v6365 = vrot.slane %v234, 1
        %v6366 = vsel %vm6353, %v6364, %v6365
        %v6367 = vrot.slane %v235, 1
        %v6368 = vsel %vm6353, %v6365, %v6367
        %v6369 = vrot.slane %v236, 1
        %v6370 = vrot.slane %v237, 1
        %v6371 = vsel %vm6353, %v6369, %v6370
        %v6372 = vrot.slane %v238, 1
        %v6373 = vsel %vm6353, %v6370, %v6372
        %v6374 = vrot.slane %v239, 1
        %v6375 = vrot.slane %v240, 1
        %v6376 = vsel %vm6353, %v6374, %v6375
        %v6377 = vrot.slane %v241, 1
        %v6378 = vsel %vm6353, %v6375, %v6377
        %v6379 = vrot.slane %v242, 1
        %v6380 = vrot.slane %v243, 1
        %v6381 = vsel %vm6353, %v6379, %v6380
        %v6382 = vrot.slane %v244, 1
        %v6383 = vsel %vm6353, %v6380, %v6382
        %v6384 = vrot.slane %v245, 1
        %v6385 = vrot.slane %v246, 1
        %v6386 = vsel %vm6353, %v6384, %v6385
        %v6387 = vrot.slane %v247, 1
        %v6388 = vsel %vm6353, %v6385, %v6387
        %v6389 = vrot.slane %v248, 1
        %v6390 = vrot.slane %v249, 1
        %v6391 = vsel %vm6353, %v6389, %v6390
        %v6392 = vrot.slane %v250, 1
        %v6393 = vsel %vm6353, %v6390, %v6392
        %v6394 = vrot.slane %v251, 1
        %v6395 = vrot.slane %v252, 1
        %v6396 = vsel %vm6353, %v6394, %v6395
        %v6397 = vrot.slane %v253, 1
        %v6398 = vsel %vm6353, %v6395, %v6397
        %v6399 = vrot.slane %v254, 1
        %v6400 = vrot.slane %v255, 1
        %v6401 = vsel %vm6353, %v6399, %v6400
        %v6402 = vrot.slane %v256, 1
        %v6403 = vsel %vm6353, %v6400, %v6402
        %v6404 = vrot.slane %v257, 1
        %v6405 = vrot.slane %v258, 1
        %v6406 = vsel %vm6353, %v6404, %v6405
        %v6407 = vrot.slane %v259, 1
        %v6408 = vsel %vm6353, %v6405, %v6407
        %v6409 = vrot.slane %v260, 1
        %v6410 = vrot.slane %v261, 1
        %v6411 = vsel %vm6353, %v6409, %v6410
        %v6412 = vrot.slane %v262, 1
        %v6413 = vsel %vm6353, %v6410, %v6412
        %v6414 = vrot.slane %v263, 1
        %v6415 = vrot.slane %v264, 1
        %v6416 = vsel %vm6353, %v6414, %v6415
        %v6417 = vrot.slane %v265, 1
        %v6418 = vsel %vm6353, %v6415, %v6417
        %v6419 = vrot.slane %v266, 1
        %v6420 = vrot.slane %v267, 1
        %v6421 = vsel %vm6353, %v6419, %v6420
        %v6422 = vrot.slane %v268, 1
        %v6423 = vsel %vm6353, %v6420, %v6422
        %v6424 = vrot.slane %v269, 1
        %v6425 = vrot.slane %v270, 1
        %v6426 = vsel %vm6353, %v6424, %v6425
        %v6427 = vrot.slane %v271, 1
        %v6428 = vsel %vm6353, %v6425, %v6427
        %v6429 = vrot.slane %v272, 1
        %v6430 = vrot.slane %v273, 1
        %v6431 = vsel %vm6353, %v6429, %v6430
        %v6432 = vrot.slane %v274, 1
        %v6433 = vsel %vm6353, %v6430, %v6432
        %v6466 = vld [vmem:[%s4] sm:$0x1]
        %v6468 = vlaneseq
        %v6469 = vshrl.u32 %v6468, 7
        %v6470 = vsub.s32 0, %v6469
        %v6471 = vrot.slane %v6466, %v6470
        %v6473 = vadd.f32 %v6321, %v6471
        %v6474 = vadd.f32 %v6322, %v6471
        %v6475 = vadd.f32 %v6323, %v6471
        %v6476 = vadd.f32 %v6324, %v6471
        %v6477 = vadd.f32 %v6325, %v6471
        %v6478 = vadd.f32 %v6326, %v6471
        %v6479 = vadd.f32 %v6327, %v6471
        %v6480 = vadd.f32 %v6328, %v6471
        %v6481 = vadd.f32 %v6329, %v6471
        %v6482 = vadd.f32 %v6330, %v6471
        %v6483 = vadd.f32 %v6331, %v6471
        %v6484 = vadd.f32 %v6332, %v6471
        %v6485 = vadd.f32 %v6333, %v6471
        %v6486 = vadd.f32 %v6334, %v6471
        %v6487 = vadd.f32 %v6335, %v6471
        %v6488 = vadd.f32 %v6336, %v6471
        %v6489 = vadd.f32 %v6337, %v6471
        %v6490 = vadd.f32 %v6338, %v6471
        %v6491 = vadd.f32 %v6339, %v6471
        %v6492 = vadd.f32 %v6340, %v6471
        %v6493 = vadd.f32 %v6341, %v6471
        %v6494 = vadd.f32 %v6342, %v6471
        %v6495 = vadd.f32 %v6343, %v6471
        %v6496 = vadd.f32 %v6344, %v6471
        %v6497 = vadd.f32 %v6345, %v6471
        %v6498 = vadd.f32 %v6346, %v6471
        %v6499 = vadd.f32 %v6347, %v6471
        %v6500 = vadd.f32 %v6348, %v6471
        %v6501 = vadd.f32 %v6349, %v6471
        %v6502 = vadd.f32 %v6350, %v6471
        %v6503 = vadd.f32 %v6351, %v6471
        %v6504 = vadd.f32 %v6352, %v6471
        %v6505 = vadd.f32 %v6473, %v6356
        %v6506 = vadd.f32 %v6474, %v6358
        %v6507 = vadd.f32 %v6475, %v6361
        %v6508 = vadd.f32 %v6476, %v6363
        %v6509 = vadd.f32 %v6477, %v6366
        %v6510 = vadd.f32 %v6478, %v6368
        %v6511 = vadd.f32 %v6479, %v6371
        %v6512 = vadd.f32 %v6480, %v6373
        %v6513 = vadd.f32 %v6481, %v6376
        %v6514 = vadd.f32 %v6482, %v6378
        %v6515 = vadd.f32 %v6483, %v6381
        %v6516 = vadd.f32 %v6484, %v6383
        %v6517 = vadd.f32 %v6485, %v6386
        %v6518 = vadd.f32 %v6486, %v6388
        %v6519 = vadd.f32 %v6487, %v6391
        %v6520 = vadd.f32 %v6488, %v6393
        %v6521 = vadd.f32 %v6489, %v6396
        %v6522 = vadd.f32 %v6490, %v6398
        %v6523 = vadd.f32 %v6491, %v6401
        %v6524 = vadd.f32 %v6492, %v6403
        %v6525 = vadd.f32 %v6493, %v6406
        %v6526 = vadd.f32 %v6494, %v6408
        %v6527 = vadd.f32 %v6495, %v6411
        %v6528 = vadd.f32 %v6496, %v6413
        %v6529 = vadd.f32 %v6497, %v6416
        %v6530 = vadd.f32 %v6498, %v6418
        %v6531 = vadd.f32 %v6499, %v6421
        %v6532 = vadd.f32 %v6500, %v6423
        %v6533 = vadd.f32 %v6501, %v6426
        %v6534 = vadd.f32 %v6502, %v6428
        %v6535 = vadd.f32 %v6503, %v6431
        %v6536 = vadd.f32 %v6504, %v6433
        %6537 = vst.msk [vmem:[%s217] sm:$0xff] %vm1843, %v6505
        %6538 = vst.msk [vmem:[%s217 + $0x8] sm:$0xff] %vm1843, %v6506
        %6539 = vst.msk [vmem:[%s217 + $0x10] sm:$0xff] %vm1843, %v6507
        %6540 = vst.msk [vmem:[%s217 + $0x18] sm:$0xff] %vm1843, %v6508
        %6541 = vst.msk [vmem:[%s217 + $0x20] sm:$0xff] %vm1843, %v6509
        %6542 = vst.msk [vmem:[%s217 + $0x28] sm:$0xff] %vm1843, %v6510
        %6543 = vst.msk [vmem:[%s217 + $0x30] sm:$0xff] %vm1843, %v6511
        %6544 = vst.msk [vmem:[%s217 + $0x38] sm:$0xff] %vm1843, %v6512
        %6545 = vst.msk [vmem:[%s217 + $0x40] sm:$0xff] %vm1843, %v6513
        %6546 = vst.msk [vmem:[%s217 + $0x48] sm:$0xff] %vm1843, %v6514
        %6547 = vst.msk [vmem:[%s217 + $0x50] sm:$0xff] %vm1843, %v6515
        %6548 = vst.msk [vmem:[%s217 + $0x58] sm:$0xff] %vm1843, %v6516
        %6549 = vst.msk [vmem:[%s217 + $0x60] sm:$0xff] %vm1843, %v6517
        %6550 = vst.msk [vmem:[%s217 + $0x68] sm:$0xff] %vm1843, %v6518
        %6551 = vst.msk [vmem:[%s217 + $0x70] sm:$0xff] %vm1843, %v6519
        %6552 = vst.msk [vmem:[%s217 + $0x78] sm:$0xff] %vm1843, %v6520
        %6553 = vst.msk [vmem:[%s217 + $0x80] sm:$0xff] %vm1843, %v6521
        %6554 = vst.msk [vmem:[%s217 + $0x88] sm:$0xff] %vm1843, %v6522
        %6555 = vst.msk [vmem:[%s217 + $0x90] sm:$0xff] %vm1843, %v6523
        %6556 = vst.msk [vmem:[%s217 + $0x98] sm:$0xff] %vm1843, %v6524
        %6557 = vst.msk [vmem:[%s217 + $0xa0] sm:$0xff] %vm1843, %v6525
        %6558 = vst.msk [vmem:[%s217 + $0xa8] sm:$0xff] %vm1843, %v6526
        %6559 = vst.msk [vmem:[%s217 + $0xb0] sm:$0xff] %vm1843, %v6527
        %6560 = vst.msk [vmem:[%s217 + $0xb8] sm:$0xff] %vm1843, %v6528
        %6561 = vst.msk [vmem:[%s217 + $0xc0] sm:$0xff] %vm1843, %v6529
        %6562 = vst.msk [vmem:[%s217 + $0xc8] sm:$0xff] %vm1843, %v6530
        %6563 = vst.msk [vmem:[%s217 + $0xd0] sm:$0xff] %vm1843, %v6531
        %6564 = vst.msk [vmem:[%s217 + $0xd8] sm:$0xff] %vm1843, %v6532
        %6565 = vst.msk [vmem:[%s217 + $0xe0] sm:$0xff] %vm1843, %v6533
        %6566 = vst.msk [vmem:[%s217 + $0xe8] sm:$0xff] %vm1843, %v6534
        %6567 = vst.msk [vmem:[%s217 + $0xf0] sm:$0xff] %vm1843, %v6535
        %6568 = vst.msk [vmem:[%s217 + $0xf8] sm:$0xff] %vm1843, %v6536
        %s6569 = sand.u32 %s137, 1
        %s6570 = scalar_lea.sflag [#allocation3], %s6569
        %s6571 = sand.u32 %s137, 1
        %s6572 = smul.addr %s6571, 256
        %s6573 = scalar_lea.vmem [#allocation2], %s6572
        // Predicated region
        $region41: #{block53_forward.1} parent=39 // pred_check
          %p6574 = pneg %p147
        $region42: #{block53_forward.1} parent=39 // pred_check_branch
          %6576 = sbr.rel (%p6574) target = $region44
        $region43: #{block53_forward.1} parent=39 // pred_region
          %s6578 = ssub.s32 4096, 4096
          %6579 = vsyncadd %s6570, %s6578
          %s6580 = smul.addr %s19, 32
          %s6581 = smul.addr %s6580, 128
          %s6582 = scalar_lea.hbm %s5, %s6581
          %s6583 = sshll.u32 %s6573, 4
          %s6584 = int_to_ptr.vmem [resolvable:$true] %s6583
          %6589 = dma.vmem_to_hbm [thread:$0]  %s6584, 4096, %s6582, %s6570, 128, 128, 8
        $region44: #{block53_forward.1} parent=39 // pred_fallthru
          _
      $region40: #{block53_forward.1} parent=5 // pred_fallthru
        _
      %p6590 = scmp.le.s32.totalorder 2, %s14
      // Predicated region
      $region45: #{block53_forward.1} parent=5 // pred_check
        %p6591 = pneg %p6590
      $region46: #{block53_forward.1} parent=5 // pred_check_branch
        %6593 = sbr.rel (%p6591) target = $region48
      $region47: #{block53_forward.1} parent=5 // pred_region
        %s6594 = ssub.s32 %s14, 2
        // Predicated region
        $region49: #{block53_forward.1} parent=47 // pred_check
          %p6595 = pneg %p153
        $region50: #{block53_forward.1} parent=47 // pred_check_branch
          %6597 = sbr.rel (%p6595) target = $region52
        $region51: #{block53_forward.1} parent=47 // pred_region
          %s6598 = sand.u32 %s138, 1
          %s6599 = scalar_lea.sflag [#allocation3], %s6598
          %s6600 = sand.u32 %s138, 1
          %s6601 = smul.addr %s6600, 256
          %s6602 = scalar_lea.vmem [#allocation2], %s6601
          %6603 = dma.done %s6599, 4096
        $region52: #{block53_forward.1} parent=47 // pred_fallthru
          _
      $region48: #{block53_forward.1} parent=5 // pred_fallthru
        _
    $region6: #{block53_forward.1} parent=1 // loop_footer
      %s18 = sadd.s32 1, %s14
    $region7: #{block53_forward.1} parent=1 // loop_footer_branch
      %13 = sbr.rel target = $region3
    $region8: #{block53_forward.1} parent=1 // loop_exit
      _
    %6604 = vsyncpa [#allocation3], 1
    %s6605 = scalar_lea.sflag [#allocation3], 1
    %6606 = vsyncpa %s6605, 1

</llo_original>
